<compile_context>
chip_gen: v7x
topology: tpu7x:2x2x1
jax: 0.10.0
libtpu: 0.0.40
codegen_flags: <defaults>
</compile_context>

<pallas_src>
import jax
import jax.numpy as jnp
from jax.experimental import pallas as pl
from jax.experimental.pallas import tpu as pltpu

_INV_SQRT2 = 0.7071067811865475
_LN_EPS = 1e-5


def _ffn_block_kernel(tmap_ref, x_ref, g_ref, bt_ref, w1_ref, b1_ref,
                      w2_ref, b2_ref, o_ref):
    """One grid step processes TB actual tokens for the whole batch.

    Ref shapes inside the kernel:
      tmap_ref : (T,)        int32 SMEM (scalar prefetch: actual -> virtual token)
      x_ref    : (Nv, B, D)  un-expanded input, VMEM-resident across all steps
      g_ref    : (TB, 1, D)  per-token LayerNorm gamma (f32)
      bt_ref   : (TB, 1, D)  per-token LayerNorm beta  (f32)
      w1_ref   : (TB, D, H)  per-token Linear1 weight  (bf16, streamed)
      b1_ref   : (TB, 1, H)  per-token Linear1 bias    (f32)
      w2_ref   : (TB, H, D)  per-token Linear2 weight  (bf16, streamed)
      b2_ref   : (TB, 1, D)  per-token Linear2 bias    (f32)
      o_ref    : (B, TB*D)   lane-dense output slab
    """
    TB = w1_ref.shape[0]
    D = x_ref.shape[2]
    base = pl.program_id(0) * TB

    # Gather this block's tokens from the un-expanded x (no HBM-materialized
    # repeat); dynamic index on the leading (token-major) axis is cheap.
    rows = [x_ref[tmap_ref[base + j]] for j in range(TB)]        # TB x (B, D)
    x_blk = jnp.stack(rows, axis=0).astype(jnp.float32)          # (TB, B, D)

    # LayerNorm over last dim (biased variance, eps=1e-5, like nn.LayerNorm).
    mu = jnp.mean(x_blk, axis=-1, keepdims=True)
    var = jnp.mean(jnp.square(x_blk - mu), axis=-1, keepdims=True)
    xn = (x_blk - mu) * jax.lax.rsqrt(var + _LN_EPS)
    xn = xn * g_ref[...] + bt_ref[...]                           # (TB,1,D) bcast

    # Linear(dim -> hidden): bf16 operands into the MXU, f32 accumulation.
    h = jnp.einsum("tbd,tdh->tbh", xn.astype(jnp.bfloat16), w1_ref[...],
                   preferred_element_type=jnp.float32)
    h = h + b1_ref[...]

    # Exact (erf) GELU, matching torch.nn.GELU(approximate='none'), in f32.
    h = 0.5 * h * (1.0 + jax.lax.erf(h * _INV_SQRT2))

    # Linear(hidden -> dim): bf16 operands, f32 accumulation; bias + residual.
    y = jnp.einsum("tbh,thd->tbd", h.astype(jnp.bfloat16), w2_ref[...],
                   preferred_element_type=jnp.float32)
    y = (y + b2_ref[...] + x_blk).astype(o_ref.dtype)            # (TB, B, D)

    # Assemble the lane-dense slab: token j occupies lanes [j*D, (j+1)*D) of
    # the (B, TB*D) output block, so the per-step writeback DMA is one
    # contiguous TB*D-lane (multiple of 128) block.  The handful of static
    # sub-lane-width stores here are negligible next to the weight DMAs.
    for j in range(TB):
        o_ref[:, j * D:(j + 1) * D] = y[j]


def _build_token_map(num_actual_tokens, num_virtual_tokens):
    """Actual-token -> virtual-token index map (mirrors the einops repeat:
    'b n d -> b (n r) d' places the r copies of each virtual token
    consecutively)."""
    r = num_actual_tokens // num_virtual_tokens
    denom = num_actual_tokens % num_virtual_tokens
    if r > 1:
        tmap = [v for v in range(denom) for _ in range(r + 1)]
        tmap += [v for v in range(denom, num_virtual_tokens) for _ in range(r)]
    else:
        # TODO(synk): repeat_time == 1 with denom > 0 is ill-defined in the
        # reference PyTorch module (it indexes past the un-expanded x); rejected.
        if num_actual_tokens > num_virtual_tokens:
            raise ValueError(
                "num_virtual < num_actual < 2*num_virtual is not supported "
                "(matches a broken branch in the reference module).")
        tmap = list(range(num_actual_tokens))
    return jnp.asarray(tmap, dtype=jnp.int32)


def _round_up(x, m):
    return -(-x // m) * m


def _pick_token_block(T, D, H, weight_bytes=2, vmem_budget_bytes=8 << 20):
    """Pick TB such that it divides T, the output block stays lane-dense
    (TB*D % 128 == 0 unless TB == T), the double-buffered bf16 w1+w2 blocks fit
    a conservative VMEM budget (accounting for 128-lane padding in VMEM, so it
    is safe on v7x's smaller 64 MiB VMEM), and there are at least 2 grid steps
    when possible (so v7x's two TensorCores both get work)."""
    # Per-token, per-buffer VMEM bytes for w1 (D x H) + w2 (H x D), last dim
    # padded to a multiple of 128 lanes.
    per_token = (D * _round_up(H, 128) + H * _round_up(D, 128)) * weight_bytes
    cap = max(1, vmem_budget_bytes // (2 * per_token))   # 2 = double buffering

    def ok(tb):
        return T % tb == 0 and tb <= cap and (tb == T or (tb * D) % 128 == 0)

    for tb in range(T // 2, 0, -1):        # prefer >= 2 parallel grid steps
        if ok(tb):
            return tb
    return T                               # single full-size step (always legal)


def token_self_attend(x, params, *, num_actual_tokens, num_virtual_tokens,
                      token_block=None):
    """Pallas implementation of TokenSelfAttend.forward (eval / dropout=0).

    x      : (B, num_virtual_tokens, D) float32
    params : dict of stacked per-token FeedForward parameters (see init_params).
    returns: (B, num_actual_tokens, D) float32
    """
    B, Nv, D = x.shape
    assert Nv == num_virtual_tokens
    T = num_actual_tokens
    H = params["w1"].shape[-1]

    tmap = _build_token_map(T, Nv)
    TB = _pick_token_block(T, D, H) if token_block is None else token_block
    if T % TB != 0 or not (TB == T or (TB * D) % 128 == 0):
        raise ValueError(f"invalid token_block={TB} for T={T}, D={D}")
    n_blocks = T // TB

    # Token-major copy of the small, un-expanded input so the in-kernel gather
    # is a dynamic index on the leading axis (documented-safe pattern).
    x_t = jnp.transpose(x, (1, 0, 2))                            # (Nv, B, D)

    grid_spec = pltpu.PrefetchScalarGridSpec(
        num_scalar_prefetch=1,                                   # tmap -> SMEM
        grid=(n_blocks,),
        in_specs=[
            pl.BlockSpec((Nv, B, D), lambda i, tm: (0, 0, 0)),   # x (resident)
            pl.BlockSpec((TB, 1, D), lambda i, tm: (i, 0, 0)),   # gamma
            pl.BlockSpec((TB, 1, D), lambda i, tm: (i, 0, 0)),   # beta
            pl.BlockSpec((TB, D, H), lambda i, tm: (i, 0, 0)),   # w1 (bf16)
            pl.BlockSpec((TB, 1, H), lambda i, tm: (i, 0, 0)),   # b1
            pl.BlockSpec((TB, H, D), lambda i, tm: (i, 0, 0)),   # w2 (bf16)
            pl.BlockSpec((TB, 1, D), lambda i, tm: (i, 0, 0)),   # b2
        ],
        out_specs=pl.BlockSpec((B, TB * D), lambda i, tm: (0, i)),
    )

    out_flat = pl.pallas_call(
        _ffn_block_kernel,
        out_shape=jax.ShapeDtypeStruct((B, T * D), x.dtype),
        grid_spec=grid_spec,
        compiler_params=pltpu.CompilerParams(
            dimension_semantics=("parallel",)),      # token blocks independent
    )(tmap, x_t, params["gamma"], params["beta"], params["w1"],
      params["b1"], params["w2"], params["b2"])

    return out_flat.reshape(B, T, D)


def _reference(x, params, *, num_actual_tokens, num_virtual_tokens):
    """Pure-JAX reference modelling the same numerics (bf16 MXU inputs, f32
    accumulation and f32 elementwise)."""
    tmap = _build_token_map(num_actual_tokens, num_virtual_tokens)
    xr = x[:, tmap, :]                                           # (B, T, D)
    mu = jnp.mean(xr, axis=-1, keepdims=True)
    var = jnp.mean(jnp.square(xr - mu), axis=-1, keepdims=True)
    xn = (xr - mu) * jax.lax.rsqrt(var + _LN_EPS)
    xn = xn * params["gamma"][None, :, 0, :] + params["beta"][None, :, 0, :]
    xn = xn.astype(jnp.bfloat16).astype(jnp.float32)
    w1 = params["w1"].astype(jnp.float32)
    h = jnp.einsum("btd,tdh->bth", xn, w1,
                   precision=jax.lax.Precision.HIGHEST) + params["b1"][None, :, 0, :]
    h = 0.5 * h * (1.0 + jax.lax.erf(h * _INV_SQRT2))
    h = h.astype(jnp.bfloat16).astype(jnp.float32)
    w2 = params["w2"].astype(jnp.float32)
    y = jnp.einsum("bth,thd->btd", h, w2,
                   precision=jax.lax.Precision.HIGHEST) + params["b2"][None, :, 0, :]
    return y + xr


def init_params(key, num_actual_tokens, dim, hidden_dim=768):
    """Deterministic synthetic parameters (module-default shapes, hidden=768).
    Weights stored in bf16 for bandwidth-bound streaming; the rest stay f32."""
    k1, k2, k3, k4 = jax.random.split(key, 4)
    T, D, H = num_actual_tokens, dim, hidden_dim
    return {
        "gamma": jnp.ones((T, 1, D), jnp.float32),
        "beta": jnp.zeros((T, 1, D), jnp.float32),
        "w1": (0.02 * jax.random.normal(k1, (T, D, H), jnp.float32)
               ).astype(jnp.bfloat16),
        "b1": 0.02 * jax.random.normal(k2, (T, 1, H), jnp.float32),
        "w2": (0.02 * jax.random.normal(k3, (T, H, D), jnp.float32)
               ).astype(jnp.bfloat16),
        "b2": 0.02 * jax.random.normal(k4, (T, 1, D), jnp.float32),
    }


if __name__ == "__main__":
    B = 2
    DIM = 32
    NUM_VIRTUAL = 4
    NUM_ACTUAL = 8          # repeat_time = 2, denom = 0
    HIDDEN = 768            # hardcoded in FeedForward(dim, 768)

    key = jax.random.PRNGKey(0)
    kx, kp = jax.random.split(key)
    x = jax.random.normal(kx, (B, NUM_VIRTUAL, DIM), jnp.float32)
    params = init_params(kp, NUM_ACTUAL, DIM, HIDDEN)

    out = token_self_attend(
        x, params,
        num_actual_tokens=NUM_ACTUAL, num_virtual_tokens=NUM_VIRTUAL)
    out = jax.block_until_ready(out)

    ref = _reference(
        x, params,
        num_actual_tokens=NUM_ACTUAL, num_virtual_tokens=NUM_VIRTUAL)
    assert out.shape == (B, NUM_ACTUAL, DIM)
    err = float(jnp.max(jnp.abs(out - ref)))
    assert jnp.allclose(out, ref, rtol=2e-3, atol=2e-3), err
    print("KERNEL_OK")
</pallas_src>

<mosaic_0001>
module attributes {stable_mosaic.version = 11 : i64} {
  func.func @_ffn_block_kernel(%arg0: i32, %arg1: memref<8xi32, #tpu.memory_space<smem>>, %arg2: memref<4x2x32xf32, #tpu.memory_space<vmem>>, %arg3: memref<4x1x32xf32, #tpu.memory_space<vmem>>, %arg4: memref<4x1x32xf32, #tpu.memory_space<vmem>>, %arg5: memref<4x32x768xbf16, #tpu.memory_space<vmem>>, %arg6: memref<4x1x768xf32, #tpu.memory_space<vmem>>, %arg7: memref<4x768x32xbf16, #tpu.memory_space<vmem>>, %arg8: memref<4x1x32xf32, #tpu.memory_space<vmem>>, %arg9: memref<2x128xf32, #tpu.memory_space<vmem>>) attributes {dimension_semantics = [#tpu.dimension_semantics<parallel>], iteration_bounds = array<i64: 2>, scalar_prefetch = 1 : i64, scratch_operands = 0 : i64, tpu.core_type = #tpu.core_type<tc>, window_params = [{pipeline_mode = #tpu.pipeline_mode<synchronous>, transform_indices = @transform_0, window_bounds = array<i64: 4, 2, 32>}, {transform_indices = @transform_1, window_bounds = array<i64: 4, 1, 32>}, {transform_indices = @transform_2, window_bounds = array<i64: 4, 1, 32>}, {transform_indices = @transform_3, window_bounds = array<i64: 4, 32, 768>}, {transform_indices = @transform_4, window_bounds = array<i64: 4, 1, 768>}, {transform_indices = @transform_5, window_bounds = array<i64: 4, 768, 32>}, {transform_indices = @transform_6, window_bounds = array<i64: 4, 1, 32>}, {transform_indices = @transform_7, window_bounds = array<i64: 2, 128>}]} {
    %c4_i32 = arith.constant 4 : i32
    %0 = arith.muli %arg0, %c4_i32 : i32
    %c0_i32 = arith.constant 0 : i32
    %1 = arith.addi %0, %c0_i32 : i32
    %2 = arith.index_cast %1 : i32 to index
    %3 = memref.load %arg1[%2] : memref<8xi32, #tpu.memory_space<smem>>
    %4 = arith.index_cast %3 : i32 to index
    %c0 = arith.constant 0 : index
    %c0_0 = arith.constant 0 : index
    %5 = vector.load %arg2[%4, %c0, %c0_0] : memref<4x2x32xf32, #tpu.memory_space<vmem>>, vector<1x2x32xf32>
    %6 = vector.shape_cast %5 : vector<1x2x32xf32> to vector<2x32xf32>
    %c1_i32 = arith.constant 1 : i32
    %7 = arith.addi %0, %c1_i32 : i32
    %8 = arith.index_cast %7 : i32 to index
    %9 = memref.load %arg1[%8] : memref<8xi32, #tpu.memory_space<smem>>
    %10 = arith.index_cast %9 : i32 to index
    %c0_1 = arith.constant 0 : index
    %c0_2 = arith.constant 0 : index
    %11 = vector.load %arg2[%10, %c0_1, %c0_2] : memref<4x2x32xf32, #tpu.memory_space<vmem>>, vector<1x2x32xf32>
    %12 = vector.shape_cast %11 : vector<1x2x32xf32> to vector<2x32xf32>
    %c2_i32 = arith.constant 2 : i32
    %13 = arith.addi %0, %c2_i32 : i32
    %14 = arith.index_cast %13 : i32 to index
    %15 = memref.load %arg1[%14] : memref<8xi32, #tpu.memory_space<smem>>
    %16 = arith.index_cast %15 : i32 to index
    %c0_3 = arith.constant 0 : index
    %c0_4 = arith.constant 0 : index
    %17 = vector.load %arg2[%16, %c0_3, %c0_4] : memref<4x2x32xf32, #tpu.memory_space<vmem>>, vector<1x2x32xf32>
    %18 = vector.shape_cast %17 : vector<1x2x32xf32> to vector<2x32xf32>
    %c3_i32 = arith.constant 3 : i32
    %19 = arith.addi %0, %c3_i32 : i32
    %20 = arith.index_cast %19 : i32 to index
    %21 = memref.load %arg1[%20] : memref<8xi32, #tpu.memory_space<smem>>
    %22 = arith.index_cast %21 : i32 to index
    %c0_5 = arith.constant 0 : index
    %c0_6 = arith.constant 0 : index
    %23 = vector.load %arg2[%22, %c0_5, %c0_6] : memref<4x2x32xf32, #tpu.memory_space<vmem>>, vector<1x2x32xf32>
    %24 = vector.shape_cast %23 : vector<1x2x32xf32> to vector<2x32xf32>
    %25 = vector.shape_cast %6 : vector<2x32xf32> to vector<1x2x32xf32>
    %26 = vector.shape_cast %12 : vector<2x32xf32> to vector<1x2x32xf32>
    %27 = vector.shape_cast %18 : vector<2x32xf32> to vector<1x2x32xf32>
    %28 = vector.shape_cast %24 : vector<2x32xf32> to vector<1x2x32xf32>
    %29 = tpu.concatenate %25, %26, %27, %28 in 0 : vector<1x2x32xf32>, vector<1x2x32xf32>, vector<1x2x32xf32>, vector<1x2x32xf32> -> vector<4x2x32xf32>
    %cst = arith.constant dense<0.000000e+00> : vector<4x2xf32>
    %30 = vector.multi_reduction <add>, %29, %cst [2] : vector<4x2x32xf32> to vector<4x2xf32>
    %31 = vector.shape_cast %30 : vector<4x2xf32> to vector<4x2x1xf32>
    %cst_7 = arith.constant 3.200000e+01 : f32
    %32 = vector.broadcast %cst_7 : f32 to vector<4x2x1xf32>
    %33 = arith.divf %31, %32 : vector<4x2x1xf32>
    %34 = vector.broadcast %33 : vector<4x2x1xf32> to vector<4x2x32xf32>
    %35 = arith.subf %29, %34 : vector<4x2x32xf32>
    %36 = arith.mulf %35, %35 : vector<4x2x32xf32>
    %cst_8 = arith.constant dense<0.000000e+00> : vector<4x2xf32>
    %37 = vector.multi_reduction <add>, %36, %cst_8 [2] : vector<4x2x32xf32> to vector<4x2xf32>
    %38 = vector.shape_cast %37 : vector<4x2xf32> to vector<4x2x1xf32>
    %cst_9 = arith.constant 3.200000e+01 : f32
    %39 = vector.broadcast %cst_9 : f32 to vector<4x2x1xf32>
    %40 = arith.divf %38, %39 : vector<4x2x1xf32>
    %41 = vector.broadcast %33 : vector<4x2x1xf32> to vector<4x2x32xf32>
    %42 = arith.subf %29, %41 : vector<4x2x32xf32>
    %cst_10 = arith.constant 9.99999974E-6 : f32
    %43 = vector.broadcast %cst_10 : f32 to vector<4x2x1xf32>
    %44 = arith.addf %40, %43 : vector<4x2x1xf32>
    %45 = math.rsqrt %44 : vector<4x2x1xf32>
    %46 = vector.broadcast %45 : vector<4x2x1xf32> to vector<4x2x32xf32>
    %47 = arith.mulf %42, %46 : vector<4x2x32xf32>
    %c0_11 = arith.constant 0 : index
    %c0_12 = arith.constant 0 : index
    %c0_13 = arith.constant 0 : index
    %48 = vector.load %arg3[%c0_11, %c0_12, %c0_13] : memref<4x1x32xf32, #tpu.memory_space<vmem>>, vector<4x1x32xf32>
    %49 = vector.broadcast %48 : vector<4x1x32xf32> to vector<4x2x32xf32>
    %50 = arith.mulf %47, %49 : vector<4x2x32xf32>
    %c0_14 = arith.constant 0 : index
    %c0_15 = arith.constant 0 : index
    %c0_16 = arith.constant 0 : index
    %51 = vector.load %arg4[%c0_14, %c0_15, %c0_16] : memref<4x1x32xf32, #tpu.memory_space<vmem>>, vector<4x1x32xf32>
    %52 = vector.broadcast %51 : vector<4x1x32xf32> to vector<4x2x32xf32>
    %53 = arith.addf %50, %52 : vector<4x2x32xf32>
    %54 = arith.truncf %53 : vector<4x2x32xf32> to vector<4x2x32xbf16>
    %c0_17 = arith.constant 0 : index
    %c0_18 = arith.constant 0 : index
    %c0_19 = arith.constant 0 : index
    %55 = vector.load %arg5[%c0_17, %c0_18, %c0_19] : memref<4x32x768xbf16, #tpu.memory_space<vmem>>, vector<4x32x768xbf16>
    "tpu.trace_start"() <{level = 10 : i32, message = "tbd,tdh->tbh"}> : () -> ()
    %cst_20 = arith.constant dense<0.000000e+00> : vector<4x2x768xf32>
    %56 = tpu.matmul %54, %55, %cst_20 {dimension_numbers = #tpu.dot_dimension_numbers<[2], [1], [1], [2], [0, 0, 0, 1, 1, 2], [0], [0]>} : vector<4x2x32xbf16>, vector<4x32x768xbf16>, vector<4x2x768xf32> -> vector<4x2x768xf32>
    "tpu.trace_stop"() : () -> ()
    %c0_21 = arith.constant 0 : index
    %c0_22 = arith.constant 0 : index
    %c0_23 = arith.constant 0 : index
    %57 = vector.load %arg6[%c0_21, %c0_22, %c0_23] : memref<4x1x768xf32, #tpu.memory_space<vmem>>, vector<4x1x768xf32>
    %58 = vector.broadcast %57 : vector<4x1x768xf32> to vector<4x2x768xf32>
    %59 = arith.addf %56, %58 : vector<4x2x768xf32>
    %cst_24 = arith.constant 5.000000e-01 : f32
    %60 = vector.broadcast %cst_24 : f32 to vector<4x2x768xf32>
    %61 = arith.mulf %60, %59 : vector<4x2x768xf32>
    %cst_25 = arith.constant 0.707106769 : f32
    %62 = vector.broadcast %cst_25 : f32 to vector<4x2x768xf32>
    %63 = arith.mulf %59, %62 : vector<4x2x768xf32>
    %64 = math.erf %63 : vector<4x2x768xf32>
    %cst_26 = arith.constant 1.000000e+00 : f32
    %65 = vector.broadcast %cst_26 : f32 to vector<4x2x768xf32>
    %66 = arith.addf %65, %64 : vector<4x2x768xf32>
    %67 = arith.mulf %61, %66 : vector<4x2x768xf32>
    %68 = arith.truncf %67 : vector<4x2x768xf32> to vector<4x2x768xbf16>
    %c0_27 = arith.constant 0 : index
    %c0_28 = arith.constant 0 : index
    %c0_29 = arith.constant 0 : index
    %69 = vector.load %arg7[%c0_27, %c0_28, %c0_29] : memref<4x768x32xbf16, #tpu.memory_space<vmem>>, vector<4x768x32xbf16>
    "tpu.trace_start"() <{level = 10 : i32, message = "tbh,thd->tbd"}> : () -> ()
    %cst_30 = arith.constant dense<0.000000e+00> : vector<4x2x32xf32>
    %70 = tpu.matmul %68, %69, %cst_30 {dimension_numbers = #tpu.dot_dimension_numbers<[2], [1], [1], [2], [0, 0, 0, 1, 1, 2], [0], [0]>} : vector<4x2x768xbf16>, vector<4x768x32xbf16>, vector<4x2x32xf32> -> vector<4x2x32xf32>
    "tpu.trace_stop"() : () -> ()
    %c0_31 = arith.constant 0 : index
    %c0_32 = arith.constant 0 : index
    %c0_33 = arith.constant 0 : index
    %71 = vector.load %arg8[%c0_31, %c0_32, %c0_33] : memref<4x1x32xf32, #tpu.memory_space<vmem>>, vector<4x1x32xf32>
    %72 = vector.broadcast %71 : vector<4x1x32xf32> to vector<4x2x32xf32>
    %73 = arith.addf %70, %72 : vector<4x2x32xf32>
    %74 = arith.addf %73, %29 : vector<4x2x32xf32>
    %75 = vector.extract_strided_slice %74 {offsets = [0, 0, 0], sizes = [1, 2, 32], strides = [1, 1, 1]} : vector<4x2x32xf32> to vector<1x2x32xf32>
    %76 = vector.shape_cast %75 : vector<1x2x32xf32> to vector<2x32xf32>
    %c0_34 = arith.constant 0 : index
    %c0_35 = arith.constant 0 : index
    %77 = vector.load %arg9[%c0_34, %c0_35] : memref<2x128xf32, #tpu.memory_space<vmem>>, vector<2x32xf32>
    tpu.vector_store %arg9[%c0_34, %c0_35], %76 {strides = array<i32>} : memref<2x128xf32, #tpu.memory_space<vmem>>, vector<2x32xf32>,
    %78 = vector.extract_strided_slice %74 {offsets = [1, 0, 0], sizes = [1, 2, 32], strides = [1, 1, 1]} : vector<4x2x32xf32> to vector<1x2x32xf32>
    %79 = vector.shape_cast %78 : vector<1x2x32xf32> to vector<2x32xf32>
    %c0_36 = arith.constant 0 : index
    %c32 = arith.constant 32 : index
    %80 = vector.load %arg9[%c0_36, %c32] : memref<2x128xf32, #tpu.memory_space<vmem>>, vector<2x32xf32>
    tpu.vector_store %arg9[%c0_36, %c32], %79 {strides = array<i32>} : memref<2x128xf32, #tpu.memory_space<vmem>>, vector<2x32xf32>,
    %81 = vector.extract_strided_slice %74 {offsets = [2, 0, 0], sizes = [1, 2, 32], strides = [1, 1, 1]} : vector<4x2x32xf32> to vector<1x2x32xf32>
    %82 = vector.shape_cast %81 : vector<1x2x32xf32> to vector<2x32xf32>
    %c0_37 = arith.constant 0 : index
    %c64 = arith.constant 64 : index
    %83 = vector.load %arg9[%c0_37, %c64] : memref<2x128xf32, #tpu.memory_space<vmem>>, vector<2x32xf32>
    tpu.vector_store %arg9[%c0_37, %c64], %82 {strides = array<i32>} : memref<2x128xf32, #tpu.memory_space<vmem>>, vector<2x32xf32>,
    %84 = vector.extract_strided_slice %74 {offsets = [3, 0, 0], sizes = [1, 2, 32], strides = [1, 1, 1]} : vector<4x2x32xf32> to vector<1x2x32xf32>
    %85 = vector.shape_cast %84 : vector<1x2x32xf32> to vector<2x32xf32>
    %c0_38 = arith.constant 0 : index
    %c96 = arith.constant 96 : index
    %86 = vector.load %arg9[%c0_38, %c96] : memref<2x128xf32, #tpu.memory_space<vmem>>, vector<2x32xf32>
    tpu.vector_store %arg9[%c0_38, %c96], %85 {strides = array<i32>} : memref<2x128xf32, #tpu.memory_space<vmem>>, vector<2x32xf32>,
    return
  }
  func.func @transform_0(%arg0: i32, %arg1: memref<8xi32, #tpu.memory_space<smem>>) -> (i32, i32, i32) {
    %c0_i32 = arith.constant 0 : i32
    %c0_i32_0 = arith.constant 0 : i32
    %c0_i32_1 = arith.constant 0 : i32
    %c0_i32_2 = arith.constant 0 : i32
    return %c0_i32, %c0_i32_0, %c0_i32_1 : i32, i32, i32
  }
  func.func @transform_1(%arg0: i32, %arg1: memref<8xi32, #tpu.memory_space<smem>>) -> (i32, i32, i32) {
    %c0_i32 = arith.constant 0 : i32
    %c0_i32_0 = arith.constant 0 : i32
    %c0_i32_1 = arith.constant 0 : i32
    return %arg0, %c0_i32, %c0_i32_0 : i32, i32, i32
  }
  func.func @transform_2(%arg0: i32, %arg1: memref<8xi32, #tpu.memory_space<smem>>) -> (i32, i32, i32) {
    %c0_i32 = arith.constant 0 : i32
    %c0_i32_0 = arith.constant 0 : i32
    %c0_i32_1 = arith.constant 0 : i32
    return %arg0, %c0_i32, %c0_i32_0 : i32, i32, i32
  }
  func.func @transform_3(%arg0: i32, %arg1: memref<8xi32, #tpu.memory_space<smem>>) -> (i32, i32, i32) {
    %c0_i32 = arith.constant 0 : i32
    %c0_i32_0 = arith.constant 0 : i32
    %c0_i32_1 = arith.constant 0 : i32
    return %arg0, %c0_i32, %c0_i32_0 : i32, i32, i32
  }
  func.func @transform_4(%arg0: i32, %arg1: memref<8xi32, #tpu.memory_space<smem>>) -> (i32, i32, i32) {
    %c0_i32 = arith.constant 0 : i32
    %c0_i32_0 = arith.constant 0 : i32
    %c0_i32_1 = arith.constant 0 : i32
    return %arg0, %c0_i32, %c0_i32_0 : i32, i32, i32
  }
  func.func @transform_5(%arg0: i32, %arg1: memref<8xi32, #tpu.memory_space<smem>>) -> (i32, i32, i32) {
    %c0_i32 = arith.constant 0 : i32
    %c0_i32_0 = arith.constant 0 : i32
    %c0_i32_1 = arith.constant 0 : i32
    return %arg0, %c0_i32, %c0_i32_0 : i32, i32, i32
  }
  func.func @transform_6(%arg0: i32, %arg1: memref<8xi32, #tpu.memory_space<smem>>) -> (i32, i32, i32) {
    %c0_i32 = arith.constant 0 : i32
    %c0_i32_0 = arith.constant 0 : i32
    %c0_i32_1 = arith.constant 0 : i32
    return %arg0, %c0_i32, %c0_i32_0 : i32, i32, i32
  }
  func.func @transform_7(%arg0: i32, %arg1: memref<8xi32, #tpu.memory_space<smem>>) -> (i32, i32) {
    %c0_i32 = arith.constant 0 : i32
    %c0_i32_0 = arith.constant 0 : i32
    return %c0_i32, %arg0 : i32, i32
  }
}

</mosaic_0001>

<llo_original>
// kernel: tpu_custom_call.1
$region0: #{tpu_custom_call.1}
  #allocation0 [shape = 'u32[]', space=smem, size = 0x4, offset = 0x4, fixed_abs, tag = 'smem constant byte address 0x4 - core index']
  #allocation1 [shape = 'u32[144,128]{1,0:T(1,128)}', space=vmem, size = 0x12000, scoped, tag = 'internal scratch']
  #allocation2 [shape = 's32[1]{0}', space=sflag, size = 0x4, scoped, tag = 'scoped memory for tpu_custom_call.1']
  #allocation3 [shape = 'u8[512]{0}', space=smem, size = 0x200, scoped, tag = 'prefetched SMEM operand 0']
  %s0 = inlined_call_operand.vmem [shape: s32[8], index: 0, kind: input, shape index: {}]
  %s1 = inlined_call_operand.vmem [shape: f32[4,2,32], index: 1, kind: input, shape index: {}]
  %s2 = inlined_call_operand.vmem [shape: f32[8,1,32], index: 2, kind: input, shape index: {}]
  %s3 = inlined_call_operand.vmem [shape: f32[8,1,32], index: 3, kind: input, shape index: {}]
  %s4 = inlined_call_operand.vmem [shape: bf16[8,32,768], index: 4, kind: input, shape index: {}]
  %s5 = inlined_call_operand.vmem [shape: f32[8,1,768], index: 5, kind: input, shape index: {}]
  %s6 = inlined_call_operand.vmem [shape: bf16[8,768,32], index: 6, kind: input, shape index: {}]
  %s7 = inlined_call_operand.vmem [shape: f32[8,1,32], index: 7, kind: input, shape index: {}]
  %s8 = inlined_call_operand.hbm [shape: f32[2,256], index: 8, kind: output, shape index: {}]
  %s9 = sld [smem:[#allocation0]]
  $region61: #{tpu_custom_call.1} parent=0
    _
  %s11 = ssub.s32 1, %s9
  %s12 = scalar_select 0, %s11, %s9
  %s13 = sshll.u32 %s0, 4
  %s14 = int_to_ptr.vmem [resolvable:$true] %s13
  %16 = dma.vmem_to_smem %s14, 16, [#allocation3], [#allocation2]
  %17 = dma.done [#allocation2], 16
  %18 = sfence
  $region1: #{tpu_custom_call.1} parent=0
    #allocation4 [shape = 'u8[2048]{0}', space=vmem, size = 0x800, scoped, tag = 'output window, operand 0']
    #allocation5 [shape = 's32[2]{0}', space=sflag, size = 0x8, scoped, tag = 'scoped memory for tpu_custom_call.1']
    %19 = vsyncpa [#allocation5], 0
    %s20 = scalar_lea.sflag [#allocation5], 1
    %21 = vsyncpa %s20, 0
    loop: start=0, step=1, limit=4
    $region2: #{tpu_custom_call.1} parent=1 // loop_pre_header
      _
    $region3: #{tpu_custom_call.1} parent=1 // loop_header
      %s23 = sphi 0, %s27
      %p24 = scmp.ge.s32.totalorder %s23, 4
      %s31 = sphi 0, %s31
      %s33 = sphi 0, %s31
      %s34 = sphi 0, %s33
      %s48 = sphi 0, %s34
      %s54 = sphi 0, %s56
      %s57 = sphi 0, %s54
      %s58 = sphi 0, %s57
      %s74 = sphi 0, %s58
      %s80 = sphi 0, %s82
      %s83 = sphi 0, %s80
      %s84 = sphi 0, %s83
      %s100 = sphi 0, %s84
      %s106 = sphi 0, %s108
      %s109 = sphi 0, %s106
      %s110 = sphi 0, %s109
      %s126 = sphi 0, %s110
      %s132 = sphi 0, %s134
      %s135 = sphi 0, %s132
      %s136 = sphi 0, %s135
      %s152 = sphi 0, %s136
      %s158 = sphi 0, %s160
      %s161 = sphi 0, %s158
      %s162 = sphi 0, %s161
      %s178 = sphi 0, %s162
      %s184 = sphi 0, %s186
      %s187 = sphi 0, %s184
      %s188 = sphi 0, %s187
      %s204 = sphi 0, %s188
      %s210 = sphi 0, %s212
      %s213 = sphi 0, %s210
      %s214 = sphi 0, %s213
      %s230 = sphi 0, %s214
    $region4: #{tpu_custom_call.1} parent=1 // loop_header_branch
      %26 = sbr.rel (%p24) target = $region8
    $region5: #{tpu_custom_call.1} parent=1 // loop_body
      %s28 = ssub.s32 %s23, 1
      %s29 = ssub.s32 %s23, 2
      %s30 = sadd.s32 %s23, 1
      %s32 = sadd.s32 %s31, 1
      %p35 = scmp.eq.s32.totalorder %s23, 1
      %p36 = scmp.ne.s32.totalorder %s31, %s33
      %p37 = scmp.eq.s32.totalorder %s23, 0
      %p38 = por %p36, %p37
      %p39 = scmp.ne.s32.totalorder %s31, %s33
      %p40 = scmp.eq.s32.totalorder %s28, 1
      %p41 = por %p39, %p40
      %p42 = scmp.ne.s32.totalorder %s33, %s34
      %p43 = scmp.eq.s32.totalorder %s28, 0
      %p44 = por %p42, %p43
      %p45 = scmp.ne.s32.totalorder %s33, %s34
      %p46 = scmp.eq.s32.totalorder %s29, 1
      %p47 = por %p45, %p46
      %p49 = scmp.ne.s32.totalorder %s34, %s48
      %p50 = scmp.eq.s32.totalorder %s29, 0
      %p51 = por %p49, %p50
      %s52 = ssub.s32 %s23, %s30
      %p53 = scmp.eq.s32.totalorder %s52, 0
      %s55 = sadd.s32 %s54, 1
      %s56 = scalar_select %p53, %s54, %s55
      %p59 = pneg %p53
      %p60 = scmp.eq.s32.totalorder %s23, 1
      %p61 = por %p59, %p60
      %p62 = scmp.ne.s32.totalorder %s54, %s57
      %p63 = scmp.eq.s32.totalorder %s23, 0
      %p64 = por %p62, %p63
      %p65 = scmp.ne.s32.totalorder %s54, %s57
      %p66 = scmp.eq.s32.totalorder %s28, 1
      %p67 = por %p65, %p66
      %p68 = scmp.ne.s32.totalorder %s57, %s58
      %p69 = scmp.eq.s32.totalorder %s28, 0
      %p70 = por %p68, %p69
      %p71 = scmp.ne.s32.totalorder %s57, %s58
      %p72 = scmp.eq.s32.totalorder %s29, 1
      %p73 = por %p71, %p72
      %p75 = scmp.ne.s32.totalorder %s58, %s74
      %p76 = scmp.eq.s32.totalorder %s29, 0
      %p77 = por %p75, %p76
      %s78 = ssub.s32 %s23, %s30
      %p79 = scmp.eq.s32.totalorder %s78, 0
      %s81 = sadd.s32 %s80, 1
      %s82 = scalar_select %p79, %s80, %s81
      %p85 = pneg %p79
      %p86 = scmp.eq.s32.totalorder %s23, 1
      %p87 = por %p85, %p86
      %p88 = scmp.ne.s32.totalorder %s80, %s83
      %p89 = scmp.eq.s32.totalorder %s23, 0
      %p90 = por %p88, %p89
      %p91 = scmp.ne.s32.totalorder %s80, %s83
      %p92 = scmp.eq.s32.totalorder %s28, 1
      %p93 = por %p91, %p92
      %p94 = scmp.ne.s32.totalorder %s83, %s84
      %p95 = scmp.eq.s32.totalorder %s28, 0
      %p96 = por %p94, %p95
      %p97 = scmp.ne.s32.totalorder %s83, %s84
      %p98 = scmp.eq.s32.totalorder %s29, 1
      %p99 = por %p97, %p98
      %p101 = scmp.ne.s32.totalorder %s84, %s100
      %p102 = scmp.eq.s32.totalorder %s29, 0
      %p103 = por %p101, %p102
      %s104 = ssub.s32 %s23, %s30
      %p105 = scmp.eq.s32.totalorder %s104, 0
      %s107 = sadd.s32 %s106, 1
      %s108 = scalar_select %p105, %s106, %s107
      %p111 = pneg %p105
      %p112 = scmp.eq.s32.totalorder %s23, 1
      %p113 = por %p111, %p112
      %p114 = scmp.ne.s32.totalorder %s106, %s109
      %p115 = scmp.eq.s32.totalorder %s23, 0
      %p116 = por %p114, %p115
      %p117 = scmp.ne.s32.totalorder %s106, %s109
      %p118 = scmp.eq.s32.totalorder %s28, 1
      %p119 = por %p117, %p118
      %p120 = scmp.ne.s32.totalorder %s109, %s110
      %p121 = scmp.eq.s32.totalorder %s28, 0
      %p122 = por %p120, %p121
      %p123 = scmp.ne.s32.totalorder %s109, %s110
      %p124 = scmp.eq.s32.totalorder %s29, 1
      %p125 = por %p123, %p124
      %p127 = scmp.ne.s32.totalorder %s110, %s126
      %p128 = scmp.eq.s32.totalorder %s29, 0
      %p129 = por %p127, %p128
      %s130 = ssub.s32 %s23, %s30
      %p131 = scmp.eq.s32.totalorder %s130, 0
      %s133 = sadd.s32 %s132, 1
      %s134 = scalar_select %p131, %s132, %s133
      %p137 = pneg %p131
      %p138 = scmp.eq.s32.totalorder %s23, 1
      %p139 = por %p137, %p138
      %p140 = scmp.ne.s32.totalorder %s132, %s135
      %p141 = scmp.eq.s32.totalorder %s23, 0
      %p142 = por %p140, %p141
      %p143 = scmp.ne.s32.totalorder %s132, %s135
      %p144 = scmp.eq.s32.totalorder %s28, 1
      %p145 = por %p143, %p144
      %p146 = scmp.ne.s32.totalorder %s135, %s136
      %p147 = scmp.eq.s32.totalorder %s28, 0
      %p148 = por %p146, %p147
      %p149 = scmp.ne.s32.totalorder %s135, %s136
      %p150 = scmp.eq.s32.totalorder %s29, 1
      %p151 = por %p149, %p150
      %p153 = scmp.ne.s32.totalorder %s136, %s152
      %p154 = scmp.eq.s32.totalorder %s29, 0
      %p155 = por %p153, %p154
      %s156 = ssub.s32 %s23, %s30
      %p157 = scmp.eq.s32.totalorder %s156, 0
      %s159 = sadd.s32 %s158, 1
      %s160 = scalar_select %p157, %s158, %s159
      %p163 = pneg %p157
      %p164 = scmp.eq.s32.totalorder %s23, 1
      %p165 = por %p163, %p164
      %p166 = scmp.ne.s32.totalorder %s158, %s161
      %p167 = scmp.eq.s32.totalorder %s23, 0
      %p168 = por %p166, %p167
      %p169 = scmp.ne.s32.totalorder %s158, %s161
      %p170 = scmp.eq.s32.totalorder %s28, 1
      %p171 = por %p169, %p170
      %p172 = scmp.ne.s32.totalorder %s161, %s162
      %p173 = scmp.eq.s32.totalorder %s28, 0
      %p174 = por %p172, %p173
      %p175 = scmp.ne.s32.totalorder %s161, %s162
      %p176 = scmp.eq.s32.totalorder %s29, 1
      %p177 = por %p175, %p176
      %p179 = scmp.ne.s32.totalorder %s162, %s178
      %p180 = scmp.eq.s32.totalorder %s29, 0
      %p181 = por %p179, %p180
      %s182 = ssub.s32 %s23, %s30
      %p183 = scmp.eq.s32.totalorder %s182, 0
      %s185 = sadd.s32 %s184, 1
      %s186 = scalar_select %p183, %s184, %s185
      %p189 = pneg %p183
      %p190 = scmp.eq.s32.totalorder %s23, 1
      %p191 = por %p189, %p190
      %p192 = scmp.ne.s32.totalorder %s184, %s187
      %p193 = scmp.eq.s32.totalorder %s23, 0
      %p194 = por %p192, %p193
      %p195 = scmp.ne.s32.totalorder %s184, %s187
      %p196 = scmp.eq.s32.totalorder %s28, 1
      %p197 = por %p195, %p196
      %p198 = scmp.ne.s32.totalorder %s187, %s188
      %p199 = scmp.eq.s32.totalorder %s28, 0
      %p200 = por %p198, %p199
      %p201 = scmp.ne.s32.totalorder %s187, %s188
      %p202 = scmp.eq.s32.totalorder %s29, 1
      %p203 = por %p201, %p202
      %p205 = scmp.ne.s32.totalorder %s188, %s204
      %p206 = scmp.eq.s32.totalorder %s29, 0
      %p207 = por %p205, %p206
      %s208 = ssub.s32 %s23, %s30
      %p209 = scmp.eq.s32.totalorder %s208, 0
      %s211 = sadd.s32 %s210, 1
      %s212 = scalar_select %p209, %s210, %s211
      %p215 = pneg %p209
      %p216 = scmp.eq.s32.totalorder %s23, 1
      %p217 = por %p215, %p216
      %p218 = scmp.ne.s32.totalorder %s210, %s213
      %p219 = scmp.eq.s32.totalorder %s23, 0
      %p220 = por %p218, %p219
      %p221 = scmp.ne.s32.totalorder %s210, %s213
      %p222 = scmp.eq.s32.totalorder %s28, 1
      %p223 = por %p221, %p222
      %p224 = scmp.ne.s32.totalorder %s213, %s214
      %p225 = scmp.eq.s32.totalorder %s28, 0
      %p226 = por %p224, %p225
      %p227 = scmp.ne.s32.totalorder %s213, %s214
      %p228 = scmp.eq.s32.totalorder %s29, 1
      %p229 = por %p227, %p228
      %p231 = scmp.ne.s32.totalorder %s214, %s230
      %p232 = scmp.eq.s32.totalorder %s29, 0
      %p233 = por %p231, %p232
      %p234 = scmp.le.s32.totalorder 1, %s23
      %p235 = scmp.lt.s32.totalorder %s23, 3
      %p236 = pnand %p234, %p235
      %p237 = pneg %p236
      // Predicated region
      $region9: #{tpu_custom_call.1} parent=5 // pred_check
        _
      $region10: #{tpu_custom_call.1} parent=5 // pred_check_branch
        %239 = sbr.rel (%p236) target = $region12
      $region11: #{tpu_custom_call.1} parent=5 // pred_region
        %s240 = ssub.s32 %s23, 1
        // Predicated region
        $region13: #{tpu_custom_call.1} parent=11 // pred_check
          %p241 = pneg %p44
        $region14: #{tpu_custom_call.1} parent=11 // pred_check_branch
          %243 = sbr.rel (%p241) target = $region16
        $region15: #{tpu_custom_call.1} parent=11 // pred_region
          _
        $region16: #{tpu_custom_call.1} parent=11 // pred_fallthru
          _
      $region12: #{tpu_custom_call.1} parent=5 // pred_fallthru
        _
      %p244 = scmp.lt.s32.totalorder %s23, 2
      // Predicated region
      $region17: #{tpu_custom_call.1} parent=5 // pred_check
        %p245 = pneg %p244
      $region18: #{tpu_custom_call.1} parent=5 // pred_check_branch
        %247 = sbr.rel (%p245) target = $region20
      $region19: #{tpu_custom_call.1} parent=5 // pred_region
        // Predicated region
        $region21: #{tpu_custom_call.1} parent=19 // pred_check
          %p248 = pneg %p64
        $region22: #{tpu_custom_call.1} parent=19 // pred_check_branch
          %250 = sbr.rel (%p248) target = $region24
        $region23: #{tpu_custom_call.1} parent=19 // pred_region
          %s251 = smul.u32 4, %s23
          %p252 = scmp.lt.s32.totalorder %s251, 7
          %s253 = scalar_select %p252, %s251, 7
          %s254 = scalar_lea.vmem %s2, %s253
          %s255 = smul.u32 4, %s23
        $region24: #{tpu_custom_call.1} parent=19 // pred_fallthru
          _
        // Predicated region
        $region25: #{tpu_custom_call.1} parent=19 // pred_check
          %p256 = pneg %p90
        $region26: #{tpu_custom_call.1} parent=19 // pred_check_branch
          %258 = sbr.rel (%p256) target = $region28
        $region27: #{tpu_custom_call.1} parent=19 // pred_region
          %s259 = smul.u32 4, %s23
          %p260 = scmp.lt.s32.totalorder %s259, 7
          %s261 = scalar_select %p260, %s259, 7
          %s262 = scalar_lea.vmem %s3, %s261
          %s263 = smul.u32 4, %s23
        $region28: #{tpu_custom_call.1} parent=19 // pred_fallthru
          _
        // Predicated region
        $region29: #{tpu_custom_call.1} parent=19 // pred_check
          %p264 = pneg %p116
        $region30: #{tpu_custom_call.1} parent=19 // pred_check_branch
          %266 = sbr.rel (%p264) target = $region32
        $region31: #{tpu_custom_call.1} parent=19 // pred_region
          %s267 = smul.u32 4, %s23
          %p268 = scmp.lt.s32.totalorder %s267, 7
          %s269 = scalar_select %p268, %s267, 7
          %s270 = smul.addr %s269, 24
          %s271 = smul.addr %s270, 4
          %s272 = scalar_lea.vmem %s4, %s271
          %s273 = smul.u32 4, %s23
        $region32: #{tpu_custom_call.1} parent=19 // pred_fallthru
          _
        // Predicated region
        $region33: #{tpu_custom_call.1} parent=19 // pred_check
          %p274 = pneg %p142
        $region34: #{tpu_custom_call.1} parent=19 // pred_check_branch
          %276 = sbr.rel (%p274) target = $region36
        $region35: #{tpu_custom_call.1} parent=19 // pred_region
          %s277 = smul.u32 4, %s23
          %p278 = scmp.lt.s32.totalorder %s277, 7
          %s279 = scalar_select %p278, %s277, 7
          %s280 = smul.addr %s279, 6
          %s281 = scalar_lea.vmem %s5, %s280
          %s282 = smul.u32 4, %s23
        $region36: #{tpu_custom_call.1} parent=19 // pred_fallthru
          _
        // Predicated region
        $region37: #{tpu_custom_call.1} parent=19 // pred_check
          %p283 = pneg %p168
        $region38: #{tpu_custom_call.1} parent=19 // pred_check_branch
          %285 = sbr.rel (%p283) target = $region40
        $region39: #{tpu_custom_call.1} parent=19 // pred_region
          %s286 = smul.u32 4, %s23
          %p287 = scmp.lt.s32.totalorder %s286, 7
          %s288 = scalar_select %p287, %s286, 7
          %s289 = smul.addr %s288, 96
          %s290 = smul.addr %s289, 4
          %s291 = scalar_lea.vmem %s6, %s290
          %s292 = smul.u32 4, %s23
        $region40: #{tpu_custom_call.1} parent=19 // pred_fallthru
          _
        // Predicated region
        $region41: #{tpu_custom_call.1} parent=19 // pred_check
          %p293 = pneg %p194
        $region42: #{tpu_custom_call.1} parent=19 // pred_check_branch
          %295 = sbr.rel (%p293) target = $region44
        $region43: #{tpu_custom_call.1} parent=19 // pred_region
          %s296 = smul.u32 4, %s23
          %p297 = scmp.lt.s32.totalorder %s296, 7
          %s298 = scalar_select %p297, %s296, 7
          %s299 = scalar_lea.vmem %s7, %s298
          %s300 = smul.u32 4, %s23
        $region44: #{tpu_custom_call.1} parent=19 // pred_fallthru
          _
      $region20: #{tpu_custom_call.1} parent=5 // pred_fallthru
        _
      %p301 = scmp.le.s32.totalorder 1, %s23
      %p302 = scmp.lt.s32.totalorder %s23, 3
      %p303 = pnand %p301, %p302
      %p304 = pneg %p303
      // Predicated region
      $region45: #{tpu_custom_call.1} parent=5 // pred_check
        _
      $region46: #{tpu_custom_call.1} parent=5 // pred_check_branch
        %306 = sbr.rel (%p303) target = $region48
      $region47: #{tpu_custom_call.1} parent=5 // pred_region
        %s307 = ssub.s32 %s23, 1
        %p308 = pneg %p44
        %p309 = pneg %p41
        %s310 = smul.u32 4, %s28
        %p311 = scmp.lt.s32.totalorder %s310, 7
        %s312 = scalar_select %p311, %s310, 7
        %s313 = scalar_lea.vmem %s2, %s312
        %p314 = pneg %p70
        %p315 = pneg %p67
        %s316 = smul.u32 4, %s28
        %p317 = scmp.lt.s32.totalorder %s316, 7
        %s318 = scalar_select %p317, %s316, 7
        %s319 = scalar_lea.vmem %s3, %s318
        %p320 = pneg %p96
        %p321 = pneg %p93
        %s322 = smul.u32 4, %s28
        %p323 = scmp.lt.s32.totalorder %s322, 7
        %s324 = scalar_select %p323, %s322, 7
        %s325 = smul.addr %s324, 24
        %s326 = smul.addr %s325, 4
        %s327 = scalar_lea.vmem %s4, %s326
        %p328 = pneg %p122
        %p329 = pneg %p119
        %s330 = smul.u32 4, %s28
        %p331 = scmp.lt.s32.totalorder %s330, 7
        %s332 = scalar_select %p331, %s330, 7
        %s333 = smul.addr %s332, 6
        %s334 = scalar_lea.vmem %s5, %s333
        %p335 = pneg %p148
        %p336 = pneg %p145
        %s337 = smul.u32 4, %s28
        %p338 = scmp.lt.s32.totalorder %s337, 7
        %s339 = scalar_select %p338, %s337, 7
        %s340 = smul.addr %s339, 96
        %s341 = smul.addr %s340, 4
        %s342 = scalar_lea.vmem %s6, %s341
        %p343 = pneg %p174
        %p344 = pneg %p171
        %s345 = smul.u32 4, %s28
        %p346 = scmp.lt.s32.totalorder %s345, 7
        %s347 = scalar_select %p346, %s345, 7
        %s348 = scalar_lea.vmem %s7, %s347
        %p349 = pneg %p200
        %p350 = pneg %p197
        %p351 = pneg %p226
        %p352 = pneg %p223
        %s353 = sand.u32 %s213, 1
        %s354 = scalar_lea.sflag [#allocation5], %s353
        %s355 = sand.u32 %s213, 1
        %s356 = smul.addr %s355, 2
        %s357 = scalar_lea.vmem [#allocation4], %s356
        %s358 = smul.u32 4, %s28
        %p359 = scmp.lt.s32.totalorder %s358, 7
        %s360 = scalar_select %p359, %s358, 7
        %s361 = scalar_lea.vmem %s2, %s360
        %s362 = smul.u32 4, %s28
        %s363 = smul.u32 4, %s28
        %p364 = scmp.lt.s32.totalorder %s363, 7
        %s365 = scalar_select %p364, %s363, 7
        %s366 = scalar_lea.vmem %s3, %s365
        %s367 = smul.u32 4, %s28
        %s368 = smul.u32 4, %s28
        %p369 = scmp.lt.s32.totalorder %s368, 7
        %s370 = scalar_select %p369, %s368, 7
        %s371 = smul.addr %s370, 24
        %s372 = smul.addr %s371, 4
        %s373 = scalar_lea.vmem %s4, %s372
        %s374 = smul.u32 4, %s28
        %s375 = smul.u32 4, %s28
        %p376 = scmp.lt.s32.totalorder %s375, 7
        %s377 = scalar_select %p376, %s375, 7
        %s378 = smul.addr %s377, 6
        %s379 = scalar_lea.vmem %s5, %s378
        %s380 = smul.u32 4, %s28
        %s381 = smul.u32 4, %s28
        %p382 = scmp.lt.s32.totalorder %s381, 7
        %s383 = scalar_select %p382, %s381, 7
        %s384 = smul.addr %s383, 96
        %s385 = smul.addr %s384, 4
        %s386 = scalar_lea.vmem %s6, %s385
        %s387 = smul.u32 4, %s28
        %s388 = smul.u32 4, %s28
        %p389 = scmp.lt.s32.totalorder %s388, 7
        %s390 = scalar_select %p389, %s388, 7
        %s391 = scalar_lea.vmem %s7, %s390
        %s392 = smul.u32 4, %s28
        %s394 = smul.u32 %s28, 4
        %s395 = sld [smem:[#allocation3 + %s394]]
        %s396 = smul.u32 %s395, 2
        %s397 = scalar_lea.vmem %s1, %s396
        %v398 = vld [vmem:[%s397] sm:$0x3]
        %s399 = sadd.s32 %s394, 1
        %s400 = sld [smem:[#allocation3 + %s399]]
        %s401 = smul.u32 %s400, 2
        %s402 = scalar_lea.vmem %s1, %s401
        %v403 = vld [vmem:[%s402] sm:$0x3]
        %s404 = sadd.s32 %s394, 2
        %s405 = sld [smem:[#allocation3 + %s404]]
        %s406 = smul.u32 %s405, 2
        %s407 = scalar_lea.vmem %s1, %s406
        %v408 = vld [vmem:[%s407] sm:$0x3]
        %s409 = sadd.s32 %s394, 3
        %s410 = sld [smem:[#allocation3 + %s409]]
        %s411 = smul.u32 %s410, 2
        %s412 = scalar_lea.vmem %s1, %s411
        %v413 = vld [vmem:[%s412] sm:$0x3]
        %vm414 = vcmask 254976
        %v415 = vsel %vm414, %v398, 0.0
        %416 = vadd.xlane.f32.xlu0 %v415
        %v417 = vpop.xlane.xlu0 %416
        %v418 = vsel %vm414, %v403, 0.0
        %419 = vadd.xlane.f32.xlu0 %v418
        %v420 = vpop.xlane.xlu0 %419
        %v421 = vsel %vm414, %v408, 0.0
        %422 = vadd.xlane.f32.xlu0 %v421
        %v423 = vpop.xlane.xlu0 %422
        %v424 = vsel %vm414, %v413, 0.0
        %425 = vadd.xlane.f32.xlu0 %v424
        %v426 = vpop.xlane.xlu0 %425
        %v427 = vrcp.pop 32.0
        %v428 = vmul.f32 %v417, %v427
        %v429 = vmul.f32 %v420, %v427
        %v430 = vmul.f32 %v423, %v427
        %v431 = vmul.f32 %v426, %v427
        %v432 = vsub.f32 %v398, %v428
        %v433 = vsub.f32 %v403, %v429
        %v434 = vsub.f32 %v408, %v430
        %v435 = vsub.f32 %v413, %v431
        %v436 = vmul.f32 %v432, %v432
        %v437 = vmul.f32 %v433, %v433
        %v438 = vmul.f32 %v434, %v434
        %v439 = vmul.f32 %v435, %v435
        %v440 = vsel %vm414, %v436, 0.0
        %441 = vadd.xlane.f32.xlu0 %v440
        %v442 = vpop.xlane.xlu0 %441
        %v443 = vsel %vm414, %v437, 0.0
        %444 = vadd.xlane.f32.xlu0 %v443
        %v445 = vpop.xlane.xlu0 %444
        %v446 = vsel %vm414, %v438, 0.0
        %447 = vadd.xlane.f32.xlu0 %v446
        %v448 = vpop.xlane.xlu0 %447
        %v449 = vsel %vm414, %v439, 0.0
        %450 = vadd.xlane.f32.xlu0 %v449
        %v451 = vpop.xlane.xlu0 %450
        %v452 = vmul.f32 %v442, %v427
        %v453 = vmul.f32 %v445, %v427
        %v454 = vmul.f32 %v448, %v427
        %v455 = vmul.f32 %v451, %v427
        %v456 = vadd.f32 %v452, 1e-05
        %v457 = vadd.f32 %v453, 1e-05
        %v458 = vadd.f32 %v454, 1e-05
        %v459 = vadd.f32 %v455, 1e-05
        %v460 = vrsqrt.pop %v456
        %v461 = vrsqrt.pop %v457
        %v462 = vrsqrt.pop %v458
        %v463 = vrsqrt.pop %v459
        %v464 = vmul.f32 %v432, %v460
        %v465 = vmul.f32 %v433, %v461
        %v466 = vmul.f32 %v434, %v462
        %v467 = vmul.f32 %v435, %v463
        %v468 = vld [vmem:[%s361] sm:$0x1]
        %v469 = vld [vmem:[%s361 + $0x1] sm:$0x1]
        %v470 = vld [vmem:[%s361 + $0x2] sm:$0x1]
        %v471 = vld [vmem:[%s361 + $0x3] sm:$0x1]
        %v476 = vlaneseq
        %v477 = vshrl.u32 %v476, 7
        %v478 = vsub.s32 0, %v477
        %v479 = vrot.slane %v468, %v478
        %v480 = vlaneseq
        %v481 = vshrl.u32 %v480, 7
        %v482 = vsub.s32 0, %v481
        %v483 = vrot.slane %v469, %v482
        %v484 = vlaneseq
        %v485 = vshrl.u32 %v484, 7
        %v486 = vsub.s32 0, %v485
        %v487 = vrot.slane %v470, %v486
        %v488 = vlaneseq
        %v489 = vshrl.u32 %v488, 7
        %v490 = vsub.s32 0, %v489
        %v491 = vrot.slane %v471, %v490
        %v496 = vmul.f32 %v464, %v479
        %v497 = vmul.f32 %v465, %v483
        %v498 = vmul.f32 %v466, %v487
        %v499 = vmul.f32 %v467, %v491
        %v500 = vld [vmem:[%s366] sm:$0x1]
        %v501 = vld [vmem:[%s366 + $0x1] sm:$0x1]
        %v502 = vld [vmem:[%s366 + $0x2] sm:$0x1]
        %v503 = vld [vmem:[%s366 + $0x3] sm:$0x1]
        %v508 = vlaneseq
        %v509 = vshrl.u32 %v508, 7
        %v510 = vsub.s32 0, %v509
        %v511 = vrot.slane %v500, %v510
        %v512 = vlaneseq
        %v513 = vshrl.u32 %v512, 7
        %v514 = vsub.s32 0, %v513
        %v515 = vrot.slane %v501, %v514
        %v516 = vlaneseq
        %v517 = vshrl.u32 %v516, 7
        %v518 = vsub.s32 0, %v517
        %v519 = vrot.slane %v502, %v518
        %v520 = vlaneseq
        %v521 = vshrl.u32 %v520, 7
        %v522 = vsub.s32 0, %v521
        %v523 = vrot.slane %v503, %v522
        %v528 = vadd.f32 %v496, %v511
        %v529 = vadd.f32 %v497, %v515
        %v530 = vadd.f32 %v498, %v519
        %v531 = vadd.f32 %v499, %v523
        %v532 = vpack.c.bf16 %v528, %v528
        %v533 = vpack.c.bf16 %v529, %v529
        %v534 = vpack.c.bf16 %v530, %v530
        %v535 = vpack.c.bf16 %v531, %v531
        %v536 = vld [vmem:[%s373] sm:$0xff]
        %v537 = vld [vmem:[%s373 + $0x8] sm:$0xff]
        %v538 = vld [vmem:[%s373 + $0x10] sm:$0xff]
        %v539 = vld [vmem:[%s373 + $0x18] sm:$0xff]
        %v540 = vld [vmem:[%s373 + $0x20] sm:$0xff]
        %v541 = vld [vmem:[%s373 + $0x28] sm:$0xff]
        %v542 = vld [vmem:[%s373 + $0x30] sm:$0xff]
        %v543 = vld [vmem:[%s373 + $0x38] sm:$0xff]
        %v544 = vld [vmem:[%s373 + $0x40] sm:$0xff]
        %v545 = vld [vmem:[%s373 + $0x48] sm:$0xff]
        %v546 = vld [vmem:[%s373 + $0x50] sm:$0xff]
        %v547 = vld [vmem:[%s373 + $0x58] sm:$0xff]
        %v548 = vld [vmem:[%s373 + $0x60] sm:$0xff]
        %v549 = vld [vmem:[%s373 + $0x68] sm:$0xff]
        %v550 = vld [vmem:[%s373 + $0x70] sm:$0xff]
        %v551 = vld [vmem:[%s373 + $0x78] sm:$0xff]
        %v552 = vld [vmem:[%s373 + $0x80] sm:$0xff]
        %v553 = vld [vmem:[%s373 + $0x88] sm:$0xff]
        %v554 = vld [vmem:[%s373 + $0x90] sm:$0xff]
        %v555 = vld [vmem:[%s373 + $0x98] sm:$0xff]
        %v556 = vld [vmem:[%s373 + $0xa0] sm:$0xff]
        %v557 = vld [vmem:[%s373 + $0xa8] sm:$0xff]
        %v558 = vld [vmem:[%s373 + $0xb0] sm:$0xff]
        %v559 = vld [vmem:[%s373 + $0xb8] sm:$0xff]
        %v560 = vld [vmem:[%s373 + $0xc0] sm:$0xff]
        %v561 = vld [vmem:[%s373 + $0xc8] sm:$0xff]
        %v562 = vld [vmem:[%s373 + $0xd0] sm:$0xff]
        %v563 = vld [vmem:[%s373 + $0xd8] sm:$0xff]
        %v564 = vld [vmem:[%s373 + $0xe0] sm:$0xff]
        %v565 = vld [vmem:[%s373 + $0xe8] sm:$0xff]
        %v566 = vld [vmem:[%s373 + $0xf0] sm:$0xff]
        %v567 = vld [vmem:[%s373 + $0xf8] sm:$0xff]
        %v568 = vld [vmem:[%s373 + $0x100] sm:$0xff]
        %v569 = vld [vmem:[%s373 + $0x108] sm:$0xff]
        %v570 = vld [vmem:[%s373 + $0x110] sm:$0xff]
        %v571 = vld [vmem:[%s373 + $0x118] sm:$0xff]
        %v572 = vld [vmem:[%s373 + $0x120] sm:$0xff]
        %v573 = vld [vmem:[%s373 + $0x128] sm:$0xff]
        %v574 = vld [vmem:[%s373 + $0x130] sm:$0xff]
        %v575 = vld [vmem:[%s373 + $0x138] sm:$0xff]
        %v576 = vld [vmem:[%s373 + $0x140] sm:$0xff]
        %v577 = vld [vmem:[%s373 + $0x148] sm:$0xff]
        %v578 = vld [vmem:[%s373 + $0x150] sm:$0xff]
        %v579 = vld [vmem:[%s373 + $0x158] sm:$0xff]
        %v580 = vld [vmem:[%s373 + $0x160] sm:$0xff]
        %v581 = vld [vmem:[%s373 + $0x168] sm:$0xff]
        %v582 = vld [vmem:[%s373 + $0x170] sm:$0xff]
        %v583 = vld [vmem:[%s373 + $0x178] sm:$0xff]
        %v584 = vld [vmem:[%s379] sm:$0x3f]
        %v585 = vld [vmem:[%s379 + $0x6] sm:$0x3f]
        %v586 = vld [vmem:[%s379 + $0xc] sm:$0x3f]
        %v587 = vld [vmem:[%s379 + $0x12] sm:$0x3f]
        %v592 = vlaneseq
        %v593 = vshrl.u32 %v592, 7
        %v594 = vsub.s32 0, %v593
        %v595 = vrot.slane %v584, %v594
        %v596 = vlaneseq
        %v597 = vshrl.u32 %v596, 7
        %v598 = vsub.s32 1, %v597
        %v599 = vrot.slane %v584, %v598
        %v600 = vlaneseq
        %v601 = vshrl.u32 %v600, 7
        %v602 = vsub.s32 2, %v601
        %v603 = vrot.slane %v584, %v602
        %v604 = vlaneseq
        %v605 = vshrl.u32 %v604, 7
        %v606 = vsub.s32 3, %v605
        %v607 = vrot.slane %v584, %v606
        %v608 = vlaneseq
        %v609 = vshrl.u32 %v608, 7
        %v610 = vsub.s32 4, %v609
        %v611 = vrot.slane %v584, %v610
        %v612 = vlaneseq
        %v613 = vshrl.u32 %v612, 7
        %v614 = vsub.s32 5, %v613
        %v615 = vrot.slane %v584, %v614
        %v616 = vlaneseq
        %v617 = vshrl.u32 %v616, 7
        %v618 = vsub.s32 0, %v617
        %v619 = vrot.slane %v585, %v618
        %v620 = vlaneseq
        %v621 = vshrl.u32 %v620, 7
        %v622 = vsub.s32 1, %v621
        %v623 = vrot.slane %v585, %v622
        %v624 = vlaneseq
        %v625 = vshrl.u32 %v624, 7
        %v626 = vsub.s32 2, %v625
        %v627 = vrot.slane %v585, %v626
        %v628 = vlaneseq
        %v629 = vshrl.u32 %v628, 7
        %v630 = vsub.s32 3, %v629
        %v631 = vrot.slane %v585, %v630
        %v632 = vlaneseq
        %v633 = vshrl.u32 %v632, 7
        %v634 = vsub.s32 4, %v633
        %v635 = vrot.slane %v585, %v634
        %v636 = vlaneseq
        %v637 = vshrl.u32 %v636, 7
        %v638 = vsub.s32 5, %v637
        %v639 = vrot.slane %v585, %v638
        %v640 = vlaneseq
        %v641 = vshrl.u32 %v640, 7
        %v642 = vsub.s32 0, %v641
        %v643 = vrot.slane %v586, %v642
        %v644 = vlaneseq
        %v645 = vshrl.u32 %v644, 7
        %v646 = vsub.s32 1, %v645
        %v647 = vrot.slane %v586, %v646
        %v648 = vlaneseq
        %v649 = vshrl.u32 %v648, 7
        %v650 = vsub.s32 2, %v649
        %v651 = vrot.slane %v586, %v650
        %v652 = vlaneseq
        %v653 = vshrl.u32 %v652, 7
        %v654 = vsub.s32 3, %v653
        %v655 = vrot.slane %v586, %v654
        %v656 = vlaneseq
        %v657 = vshrl.u32 %v656, 7
        %v658 = vsub.s32 4, %v657
        %v659 = vrot.slane %v586, %v658
        %v660 = vlaneseq
        %v661 = vshrl.u32 %v660, 7
        %v662 = vsub.s32 5, %v661
        %v663 = vrot.slane %v586, %v662
        %v664 = vlaneseq
        %v665 = vshrl.u32 %v664, 7
        %v666 = vsub.s32 0, %v665
        %v667 = vrot.slane %v587, %v666
        %v668 = vlaneseq
        %v669 = vshrl.u32 %v668, 7
        %v670 = vsub.s32 1, %v669
        %v671 = vrot.slane %v587, %v670
        %v672 = vlaneseq
        %v673 = vshrl.u32 %v672, 7
        %v674 = vsub.s32 2, %v673
        %v675 = vrot.slane %v587, %v674
        %v676 = vlaneseq
        %v677 = vshrl.u32 %v676, 7
        %v678 = vsub.s32 3, %v677
        %v679 = vrot.slane %v587, %v678
        %v680 = vlaneseq
        %v681 = vshrl.u32 %v680, 7
        %v682 = vsub.s32 4, %v681
        %v683 = vrot.slane %v587, %v682
        %v684 = vlaneseq
        %v685 = vshrl.u32 %v684, 7
        %v686 = vsub.s32 5, %v685
        %v687 = vrot.slane %v587, %v686
        %v724 = vunpack.c.l.b16 %v536
        %v725 = vunpack.c.h.b16 %v536
        %v726 = vunpack.c.l.b16 %v537
        %v727 = vunpack.c.h.b16 %v537
        %v728 = vunpack.c.l.b16 %v538
        %v729 = vunpack.c.h.b16 %v538
        %v730 = vunpack.c.l.b16 %v539
        %v731 = vunpack.c.h.b16 %v539
        %v732 = vunpack.c.l.b16 %v540
        %v733 = vunpack.c.h.b16 %v540
        %v734 = vunpack.c.l.b16 %v541
        %v735 = vunpack.c.h.b16 %v541
        %v736 = vunpack.c.l.b16 %v542
        %v737 = vunpack.c.h.b16 %v542
        %v738 = vunpack.c.l.b16 %v543
        %v739 = vunpack.c.h.b16 %v543
        %v740 = vunpack.c.l.b16 %v544
        %v741 = vunpack.c.h.b16 %v544
        %v742 = vunpack.c.l.b16 %v545
        %v743 = vunpack.c.h.b16 %v545
        %v744 = vunpack.c.l.b16 %v546
        %v745 = vunpack.c.h.b16 %v546
        %v746 = vunpack.c.l.b16 %v547
        %v747 = vunpack.c.h.b16 %v547
        %v748 = vpack.c.b16 %v730, %v724
        %v749 = vpack.c.b16 %v731, %v725
        %v750 = vpack.c.b16 %v732, %v726
        %v751 = vpack.c.b16 %v733, %v727
        %v752 = vpack.c.b16 %v734, %v728
        %v753 = vpack.c.b16 %v735, %v729
        %v754 = vpack.c.b16 %v742, %v736
        %v755 = vpack.c.b16 %v743, %v737
        %v756 = vpack.c.b16 %v744, %v738
        %v757 = vpack.c.b16 %v745, %v739
        %v758 = vpack.c.b16 %v746, %v740
        %v759 = vpack.c.b16 %v747, %v741
        %vm772 = vcmask 261120
        %v774 = vsel %vm772, %v532, 0
        %776 = vmatprep.subr.bf16.mxu0 %v749
        %777 = vmatpush1.bf16.msra.mxu0 %v748
        %778 = vmatprep.subr.bf16.mxu0 %v755
        %779 = vmatpush1.bf16.msra.mxu0 %v754
        %780 = vmatprep.subr.bf16.mxu0 0
        %781 = vmatpush1.bf16.msra.mxu0 0
        %782 = vmatprep.subr.bf16.mxu0 0
        %783 = vmatpush1.bf16.msra.mxu0 0
        %784 = vmatprep.subr.bf16.mxu0 0
        %785 = vmatpush1.bf16.msra.mxu0 0
        %786 = vmatprep.subr.bf16.mxu0 0
        %787 = vmatpush1.bf16.msra.mxu0 0
        %788 = vmatprep.subr.bf16.mxu0 0
        %789 = vmatpush1.bf16.msra.mxu0 0
        %790 = vmatprep.subr.bf16.mxu0 0
        %791 = vmatpush1.bf16.msra.mxu0 0
        %792 = vmatprep.subr.bf16.mxu0 0
        %793 = vmatpush1.bf16.msra.mxu0 0
        %794 = vmatprep.subr.bf16.mxu0 0
        %795 = vmatpush1.bf16.msra.mxu0 0
        %796 = vmatprep.subr.bf16.mxu0 0
        %797 = vmatpush1.bf16.msra.mxu0 0
        %798 = vmatprep.subr.bf16.mxu0 0
        %799 = vmatpush1.bf16.msra.mxu0 0
        %800 = vmatprep.subr.bf16.mxu0 0
        %801 = vmatpush1.bf16.msra.mxu0 0
        %802 = vmatprep.subr.bf16.mxu0 0
        %803 = vmatpush1.bf16.msra.mxu0 0
        %804 = vmatprep.subr.bf16.mxu0 0
        %805 = vmatpush1.bf16.msra.mxu0 0
        %806 = vmatprep.subr.bf16.mxu0 0
        %807 = vmatpush1.bf16.msra.mxu0 0
        %808 = vmatprep.mubr.bf16.mxu0 0
        %809 = vmatmul.mubr.bf16.gmra.mrb[0].mxu0 %v774
        %v810 = vpop.f32.mrb[0].mxu0
        %v811 = vadd.f32 %v595, %v810
        %v812 = vpop.f32.mrb[0].mxu0
        %v813 = vadd.f32 %v599, %v812
        %v814 = vpop.f32.mrb[0].mxu0
        %v815 = vpop.f32.mrb[0].mxu0
        %816 = vdwg.mxu0
        %817 = vmatprep.subr.bf16.mxu0 %v751
        %818 = vmatpush1.bf16.msra.mxu0 %v750
        %819 = vmatprep.subr.bf16.mxu0 %v757
        %820 = vmatpush1.bf16.msra.mxu0 %v756
        %821 = vmatprep.subr.bf16.mxu0 0
        %822 = vmatpush1.bf16.msra.mxu0 0
        %823 = vmatprep.subr.bf16.mxu0 0
        %824 = vmatpush1.bf16.msra.mxu0 0
        %825 = vmatprep.subr.bf16.mxu0 0
        %826 = vmatpush1.bf16.msra.mxu0 0
        %827 = vmatprep.subr.bf16.mxu0 0
        %828 = vmatpush1.bf16.msra.mxu0 0
        %829 = vmatprep.subr.bf16.mxu0 0
        %830 = vmatpush1.bf16.msra.mxu0 0
        %831 = vmatprep.subr.bf16.mxu0 0
        %832 = vmatpush1.bf16.msra.mxu0 0
        %833 = vmatprep.subr.bf16.mxu0 0
        %834 = vmatpush1.bf16.msra.mxu0 0
        %835 = vmatprep.subr.bf16.mxu0 0
        %836 = vmatpush1.bf16.msra.mxu0 0
        %837 = vmatprep.subr.bf16.mxu0 0
        %838 = vmatpush1.bf16.msra.mxu0 0
        %839 = vmatprep.subr.bf16.mxu0 0
        %840 = vmatpush1.bf16.msra.mxu0 0
        %841 = vmatprep.subr.bf16.mxu0 0
        %842 = vmatpush1.bf16.msra.mxu0 0
        %843 = vmatprep.subr.bf16.mxu0 0
        %844 = vmatpush1.bf16.msra.mxu0 0
        %845 = vmatprep.subr.bf16.mxu0 0
        %846 = vmatpush1.bf16.msra.mxu0 0
        %847 = vmatprep.subr.bf16.mxu0 0
        %848 = vmatpush1.bf16.msra.mxu0 0
        %849 = vmatprep.mubr.bf16.mxu0 0
        %850 = vmatmul.mubr.bf16.gmra.mrb[0].mxu0 %v774
        %v851 = vpop.f32.mrb[0].mxu0
        %v852 = vadd.f32 %v603, %v851
        %v853 = vpop.f32.mrb[0].mxu0
        %v854 = vadd.f32 %v607, %v853
        %v855 = vpop.f32.mrb[0].mxu0
        %v856 = vpop.f32.mrb[0].mxu0
        %857 = vdwg.mxu0
        %858 = vmatprep.subr.bf16.mxu0 %v753
        %859 = vmatpush1.bf16.msra.mxu0 %v752
        %860 = vmatprep.subr.bf16.mxu0 %v759
        %861 = vmatpush1.bf16.msra.mxu0 %v758
        %862 = vmatprep.subr.bf16.mxu0 0
        %863 = vmatpush1.bf16.msra.mxu0 0
        %864 = vmatprep.subr.bf16.mxu0 0
        %865 = vmatpush1.bf16.msra.mxu0 0
        %866 = vmatprep.subr.bf16.mxu0 0
        %867 = vmatpush1.bf16.msra.mxu0 0
        %868 = vmatprep.subr.bf16.mxu0 0
        %869 = vmatpush1.bf16.msra.mxu0 0
        %870 = vmatprep.subr.bf16.mxu0 0
        %871 = vmatpush1.bf16.msra.mxu0 0
        %872 = vmatprep.subr.bf16.mxu0 0
        %873 = vmatpush1.bf16.msra.mxu0 0
        %874 = vmatprep.subr.bf16.mxu0 0
        %875 = vmatpush1.bf16.msra.mxu0 0
        %876 = vmatprep.subr.bf16.mxu0 0
        %877 = vmatpush1.bf16.msra.mxu0 0
        %878 = vmatprep.subr.bf16.mxu0 0
        %879 = vmatpush1.bf16.msra.mxu0 0
        %880 = vmatprep.subr.bf16.mxu0 0
        %881 = vmatpush1.bf16.msra.mxu0 0
        %882 = vmatprep.subr.bf16.mxu0 0
        %883 = vmatpush1.bf16.msra.mxu0 0
        %884 = vmatprep.subr.bf16.mxu0 0
        %885 = vmatpush1.bf16.msra.mxu0 0
        %886 = vmatprep.subr.bf16.mxu0 0
        %887 = vmatpush1.bf16.msra.mxu0 0
        %888 = vmatprep.subr.bf16.mxu0 0
        %889 = vmatpush1.bf16.msra.mxu0 0
        %890 = vmatprep.mubr.bf16.mxu0 0
        %891 = vmatmul.mubr.bf16.gmra.mrb[0].mxu0 %v774
        %v892 = vpop.f32.mrb[0].mxu0
        %v893 = vadd.f32 %v611, %v892
        %v894 = vpop.f32.mrb[0].mxu0
        %v895 = vadd.f32 %v615, %v894
        %v896 = vpop.f32.mrb[0].mxu0
        %v897 = vpop.f32.mrb[0].mxu0
        %898 = vdwg.mxu0
        %v911 = vunpack.c.l.b16 %v548
        %v912 = vunpack.c.h.b16 %v548
        %v913 = vunpack.c.l.b16 %v549
        %v914 = vunpack.c.h.b16 %v549
        %v915 = vunpack.c.l.b16 %v550
        %v916 = vunpack.c.h.b16 %v550
        %v917 = vunpack.c.l.b16 %v551
        %v918 = vunpack.c.h.b16 %v551
        %v919 = vunpack.c.l.b16 %v552
        %v920 = vunpack.c.h.b16 %v552
        %v921 = vunpack.c.l.b16 %v553
        %v922 = vunpack.c.h.b16 %v553
        %v923 = vunpack.c.l.b16 %v554
        %v924 = vunpack.c.h.b16 %v554
        %v925 = vunpack.c.l.b16 %v555
        %v926 = vunpack.c.h.b16 %v555
        %v927 = vunpack.c.l.b16 %v556
        %v928 = vunpack.c.h.b16 %v556
        %v929 = vunpack.c.l.b16 %v557
        %v930 = vunpack.c.h.b16 %v557
        %v931 = vunpack.c.l.b16 %v558
        %v932 = vunpack.c.h.b16 %v558
        %v933 = vunpack.c.l.b16 %v559
        %v934 = vunpack.c.h.b16 %v559
        %v935 = vpack.c.b16 %v917, %v911
        %v936 = vpack.c.b16 %v918, %v912
        %v937 = vpack.c.b16 %v919, %v913
        %v938 = vpack.c.b16 %v920, %v914
        %v939 = vpack.c.b16 %v921, %v915
        %v940 = vpack.c.b16 %v922, %v916
        %v941 = vpack.c.b16 %v929, %v923
        %v942 = vpack.c.b16 %v930, %v924
        %v943 = vpack.c.b16 %v931, %v925
        %v944 = vpack.c.b16 %v932, %v926
        %v945 = vpack.c.b16 %v933, %v927
        %v946 = vpack.c.b16 %v934, %v928
        %v960 = vsel %vm772, %v533, 0
        %962 = vmatprep.subr.bf16.mxu0 %v936
        %963 = vmatpush1.bf16.msra.mxu0 %v935
        %964 = vmatprep.subr.bf16.mxu0 %v942
        %965 = vmatpush1.bf16.msra.mxu0 %v941
        %966 = vmatprep.subr.bf16.mxu0 0
        %967 = vmatpush1.bf16.msra.mxu0 0
        %968 = vmatprep.subr.bf16.mxu0 0
        %969 = vmatpush1.bf16.msra.mxu0 0
        %970 = vmatprep.subr.bf16.mxu0 0
        %971 = vmatpush1.bf16.msra.mxu0 0
        %972 = vmatprep.subr.bf16.mxu0 0
        %973 = vmatpush1.bf16.msra.mxu0 0
        %974 = vmatprep.subr.bf16.mxu0 0
        %975 = vmatpush1.bf16.msra.mxu0 0
        %976 = vmatprep.subr.bf16.mxu0 0
        %977 = vmatpush1.bf16.msra.mxu0 0
        %978 = vmatprep.subr.bf16.mxu0 0
        %979 = vmatpush1.bf16.msra.mxu0 0
        %980 = vmatprep.subr.bf16.mxu0 0
        %981 = vmatpush1.bf16.msra.mxu0 0
        %982 = vmatprep.subr.bf16.mxu0 0
        %983 = vmatpush1.bf16.msra.mxu0 0
        %984 = vmatprep.subr.bf16.mxu0 0
        %985 = vmatpush1.bf16.msra.mxu0 0
        %986 = vmatprep.subr.bf16.mxu0 0
        %987 = vmatpush1.bf16.msra.mxu0 0
        %988 = vmatprep.subr.bf16.mxu0 0
        %989 = vmatpush1.bf16.msra.mxu0 0
        %990 = vmatprep.subr.bf16.mxu0 0
        %991 = vmatpush1.bf16.msra.mxu0 0
        %992 = vmatprep.subr.bf16.mxu0 0
        %993 = vmatpush1.bf16.msra.mxu0 0
        %994 = vmatprep.mubr.bf16.mxu0 0
        %995 = vmatmul.mubr.bf16.gmra.mrb[0].mxu0 %v960
        %v996 = vpop.f32.mrb[0].mxu0
        %v997 = vadd.f32 %v619, %v996
        %v998 = vpop.f32.mrb[0].mxu0
        %v999 = vadd.f32 %v623, %v998
        %v1000 = vpop.f32.mrb[0].mxu0
        %v1001 = vpop.f32.mrb[0].mxu0
        %1002 = vdwg.mxu0
        %1003 = vmatprep.subr.bf16.mxu0 %v938
        %1004 = vmatpush1.bf16.msra.mxu0 %v937
        %1005 = vmatprep.subr.bf16.mxu0 %v944
        %1006 = vmatpush1.bf16.msra.mxu0 %v943
        %1007 = vmatprep.subr.bf16.mxu0 0
        %1008 = vmatpush1.bf16.msra.mxu0 0
        %1009 = vmatprep.subr.bf16.mxu0 0
        %1010 = vmatpush1.bf16.msra.mxu0 0
        %1011 = vmatprep.subr.bf16.mxu0 0
        %1012 = vmatpush1.bf16.msra.mxu0 0
        %1013 = vmatprep.subr.bf16.mxu0 0
        %1014 = vmatpush1.bf16.msra.mxu0 0
        %1015 = vmatprep.subr.bf16.mxu0 0
        %1016 = vmatpush1.bf16.msra.mxu0 0
        %1017 = vmatprep.subr.bf16.mxu0 0
        %1018 = vmatpush1.bf16.msra.mxu0 0
        %1019 = vmatprep.subr.bf16.mxu0 0
        %1020 = vmatpush1.bf16.msra.mxu0 0
        %1021 = vmatprep.subr.bf16.mxu0 0
        %1022 = vmatpush1.bf16.msra.mxu0 0
        %1023 = vmatprep.subr.bf16.mxu0 0
        %1024 = vmatpush1.bf16.msra.mxu0 0
        %1025 = vmatprep.subr.bf16.mxu0 0
        %1026 = vmatpush1.bf16.msra.mxu0 0
        %1027 = vmatprep.subr.bf16.mxu0 0
        %1028 = vmatpush1.bf16.msra.mxu0 0
        %1029 = vmatprep.subr.bf16.mxu0 0
        %1030 = vmatpush1.bf16.msra.mxu0 0
        %1031 = vmatprep.subr.bf16.mxu0 0
        %1032 = vmatpush1.bf16.msra.mxu0 0
        %1033 = vmatprep.subr.bf16.mxu0 0
        %1034 = vmatpush1.bf16.msra.mxu0 0
        %1035 = vmatprep.mubr.bf16.mxu0 0
        %1036 = vmatmul.mubr.bf16.gmra.mrb[0].mxu0 %v960
        %v1037 = vpop.f32.mrb[0].mxu0
        %v1038 = vadd.f32 %v627, %v1037
        %v1039 = vpop.f32.mrb[0].mxu0
        %v1040 = vadd.f32 %v631, %v1039
        %v1041 = vpop.f32.mrb[0].mxu0
        %v1042 = vpop.f32.mrb[0].mxu0
        %1043 = vdwg.mxu0
        %1044 = vmatprep.subr.bf16.mxu0 %v940
        %1045 = vmatpush1.bf16.msra.mxu0 %v939
        %1046 = vmatprep.subr.bf16.mxu0 %v946
        %1047 = vmatpush1.bf16.msra.mxu0 %v945
        %1048 = vmatprep.subr.bf16.mxu0 0
        %1049 = vmatpush1.bf16.msra.mxu0 0
        %1050 = vmatprep.subr.bf16.mxu0 0
        %1051 = vmatpush1.bf16.msra.mxu0 0
        %1052 = vmatprep.subr.bf16.mxu0 0
        %1053 = vmatpush1.bf16.msra.mxu0 0
        %1054 = vmatprep.subr.bf16.mxu0 0
        %1055 = vmatpush1.bf16.msra.mxu0 0
        %1056 = vmatprep.subr.bf16.mxu0 0
        %1057 = vmatpush1.bf16.msra.mxu0 0
        %1058 = vmatprep.subr.bf16.mxu0 0
        %1059 = vmatpush1.bf16.msra.mxu0 0
        %1060 = vmatprep.subr.bf16.mxu0 0
        %1061 = vmatpush1.bf16.msra.mxu0 0
        %1062 = vmatprep.subr.bf16.mxu0 0
        %1063 = vmatpush1.bf16.msra.mxu0 0
        %1064 = vmatprep.subr.bf16.mxu0 0
        %1065 = vmatpush1.bf16.msra.mxu0 0
        %1066 = vmatprep.subr.bf16.mxu0 0
        %1067 = vmatpush1.bf16.msra.mxu0 0
        %1068 = vmatprep.subr.bf16.mxu0 0
        %1069 = vmatpush1.bf16.msra.mxu0 0
        %1070 = vmatprep.subr.bf16.mxu0 0
        %1071 = vmatpush1.bf16.msra.mxu0 0
        %1072 = vmatprep.subr.bf16.mxu0 0
        %1073 = vmatpush1.bf16.msra.mxu0 0
        %1074 = vmatprep.subr.bf16.mxu0 0
        %1075 = vmatpush1.bf16.msra.mxu0 0
        %1076 = vmatprep.mubr.bf16.mxu0 0
        %1077 = vmatmul.mubr.bf16.gmra.mrb[0].mxu0 %v960
        %v1078 = vpop.f32.mrb[0].mxu0
        %v1079 = vadd.f32 %v635, %v1078
        %v1080 = vpop.f32.mrb[0].mxu0
        %v1081 = vadd.f32 %v639, %v1080
        %v1082 = vpop.f32.mrb[0].mxu0
        %v1083 = vpop.f32.mrb[0].mxu0
        %1084 = vdwg.mxu0
        %v1097 = vunpack.c.l.b16 %v560
        %v1098 = vunpack.c.h.b16 %v560
        %v1099 = vunpack.c.l.b16 %v561
        %v1100 = vunpack.c.h.b16 %v561
        %v1101 = vunpack.c.l.b16 %v562
        %v1102 = vunpack.c.h.b16 %v562
        %v1103 = vunpack.c.l.b16 %v563
        %v1104 = vunpack.c.h.b16 %v563
        %v1105 = vunpack.c.l.b16 %v564
        %v1106 = vunpack.c.h.b16 %v564
        %v1107 = vunpack.c.l.b16 %v565
        %v1108 = vunpack.c.h.b16 %v565
        %v1109 = vunpack.c.l.b16 %v566
        %v1110 = vunpack.c.h.b16 %v566
        %v1111 = vunpack.c.l.b16 %v567
        %v1112 = vunpack.c.h.b16 %v567
        %v1113 = vunpack.c.l.b16 %v568
        %v1114 = vunpack.c.h.b16 %v568
        %v1115 = vunpack.c.l.b16 %v569
        %v1116 = vunpack.c.h.b16 %v569
        %v1117 = vunpack.c.l.b16 %v570
        %v1118 = vunpack.c.h.b16 %v570
        %v1119 = vunpack.c.l.b16 %v571
        %v1120 = vunpack.c.h.b16 %v571
        %v1121 = vpack.c.b16 %v1103, %v1097
        %v1122 = vpack.c.b16 %v1104, %v1098
        %v1123 = vpack.c.b16 %v1105, %v1099
        %v1124 = vpack.c.b16 %v1106, %v1100
        %v1125 = vpack.c.b16 %v1107, %v1101
        %v1126 = vpack.c.b16 %v1108, %v1102
        %v1127 = vpack.c.b16 %v1115, %v1109
        %v1128 = vpack.c.b16 %v1116, %v1110
        %v1129 = vpack.c.b16 %v1117, %v1111
        %v1130 = vpack.c.b16 %v1118, %v1112
        %v1131 = vpack.c.b16 %v1119, %v1113
        %v1132 = vpack.c.b16 %v1120, %v1114
        %v1146 = vsel %vm772, %v534, 0
        %1148 = vmatprep.subr.bf16.mxu0 %v1122
        %1149 = vmatpush1.bf16.msra.mxu0 %v1121
        %1150 = vmatprep.subr.bf16.mxu0 %v1128
        %1151 = vmatpush1.bf16.msra.mxu0 %v1127
        %1152 = vmatprep.subr.bf16.mxu0 0
        %1153 = vmatpush1.bf16.msra.mxu0 0
        %1154 = vmatprep.subr.bf16.mxu0 0
        %1155 = vmatpush1.bf16.msra.mxu0 0
        %1156 = vmatprep.subr.bf16.mxu0 0
        %1157 = vmatpush1.bf16.msra.mxu0 0
        %1158 = vmatprep.subr.bf16.mxu0 0
        %1159 = vmatpush1.bf16.msra.mxu0 0
        %1160 = vmatprep.subr.bf16.mxu0 0
        %1161 = vmatpush1.bf16.msra.mxu0 0
        %1162 = vmatprep.subr.bf16.mxu0 0
        %1163 = vmatpush1.bf16.msra.mxu0 0
        %1164 = vmatprep.subr.bf16.mxu0 0
        %1165 = vmatpush1.bf16.msra.mxu0 0
        %1166 = vmatprep.subr.bf16.mxu0 0
        %1167 = vmatpush1.bf16.msra.mxu0 0
        %1168 = vmatprep.subr.bf16.mxu0 0
        %1169 = vmatpush1.bf16.msra.mxu0 0
        %1170 = vmatprep.subr.bf16.mxu0 0
        %1171 = vmatpush1.bf16.msra.mxu0 0
        %1172 = vmatprep.subr.bf16.mxu0 0
        %1173 = vmatpush1.bf16.msra.mxu0 0
        %1174 = vmatprep.subr.bf16.mxu0 0
        %1175 = vmatpush1.bf16.msra.mxu0 0
        %1176 = vmatprep.subr.bf16.mxu0 0
        %1177 = vmatpush1.bf16.msra.mxu0 0
        %1178 = vmatprep.subr.bf16.mxu0 0
        %1179 = vmatpush1.bf16.msra.mxu0 0
        %1180 = vmatprep.mubr.bf16.mxu0 0
        %1181 = vmatmul.mubr.bf16.gmra.mrb[0].mxu0 %v1146
        %v1182 = vpop.f32.mrb[0].mxu0
        %v1183 = vadd.f32 %v643, %v1182
        %v1184 = vpop.f32.mrb[0].mxu0
        %v1185 = vadd.f32 %v647, %v1184
        %v1186 = vpop.f32.mrb[0].mxu0
        %v1187 = vpop.f32.mrb[0].mxu0
        %1188 = vdwg.mxu0
        %1189 = vmatprep.subr.bf16.mxu0 %v1124
        %1190 = vmatpush1.bf16.msra.mxu0 %v1123
        %1191 = vmatprep.subr.bf16.mxu0 %v1130
        %1192 = vmatpush1.bf16.msra.mxu0 %v1129
        %1193 = vmatprep.subr.bf16.mxu0 0
        %1194 = vmatpush1.bf16.msra.mxu0 0
        %1195 = vmatprep.subr.bf16.mxu0 0
        %1196 = vmatpush1.bf16.msra.mxu0 0
        %1197 = vmatprep.subr.bf16.mxu0 0
        %1198 = vmatpush1.bf16.msra.mxu0 0
        %1199 = vmatprep.subr.bf16.mxu0 0
        %1200 = vmatpush1.bf16.msra.mxu0 0
        %1201 = vmatprep.subr.bf16.mxu0 0
        %1202 = vmatpush1.bf16.msra.mxu0 0
        %1203 = vmatprep.subr.bf16.mxu0 0
        %1204 = vmatpush1.bf16.msra.mxu0 0
        %1205 = vmatprep.subr.bf16.mxu0 0
        %1206 = vmatpush1.bf16.msra.mxu0 0
        %1207 = vmatprep.subr.bf16.mxu0 0
        %1208 = vmatpush1.bf16.msra.mxu0 0
        %1209 = vmatprep.subr.bf16.mxu0 0
        %1210 = vmatpush1.bf16.msra.mxu0 0
        %1211 = vmatprep.subr.bf16.mxu0 0
        %1212 = vmatpush1.bf16.msra.mxu0 0
        %1213 = vmatprep.subr.bf16.mxu0 0
        %1214 = vmatpush1.bf16.msra.mxu0 0
        %1215 = vmatprep.subr.bf16.mxu0 0
        %1216 = vmatpush1.bf16.msra.mxu0 0
        %1217 = vmatprep.subr.bf16.mxu0 0
        %1218 = vmatpush1.bf16.msra.mxu0 0
        %1219 = vmatprep.subr.bf16.mxu0 0
        %1220 = vmatpush1.bf16.msra.mxu0 0
        %1221 = vmatprep.mubr.bf16.mxu0 0
        %1222 = vmatmul.mubr.bf16.gmra.mrb[0].mxu0 %v1146
        %v1223 = vpop.f32.mrb[0].mxu0
        %v1224 = vadd.f32 %v651, %v1223
        %v1225 = vpop.f32.mrb[0].mxu0
        %v1226 = vadd.f32 %v655, %v1225
        %v1227 = vpop.f32.mrb[0].mxu0
        %v1228 = vpop.f32.mrb[0].mxu0
        %1229 = vdwg.mxu0
        %1230 = vmatprep.subr.bf16.mxu0 %v1126
        %1231 = vmatpush1.bf16.msra.mxu0 %v1125
        %1232 = vmatprep.subr.bf16.mxu0 %v1132
        %1233 = vmatpush1.bf16.msra.mxu0 %v1131
        %1234 = vmatprep.subr.bf16.mxu0 0
        %1235 = vmatpush1.bf16.msra.mxu0 0
        %1236 = vmatprep.subr.bf16.mxu0 0
        %1237 = vmatpush1.bf16.msra.mxu0 0
        %1238 = vmatprep.subr.bf16.mxu0 0
        %1239 = vmatpush1.bf16.msra.mxu0 0
        %1240 = vmatprep.subr.bf16.mxu0 0
        %1241 = vmatpush1.bf16.msra.mxu0 0
        %1242 = vmatprep.subr.bf16.mxu0 0
        %1243 = vmatpush1.bf16.msra.mxu0 0
        %1244 = vmatprep.subr.bf16.mxu0 0
        %1245 = vmatpush1.bf16.msra.mxu0 0
        %1246 = vmatprep.subr.bf16.mxu0 0
        %1247 = vmatpush1.bf16.msra.mxu0 0
        %1248 = vmatprep.subr.bf16.mxu0 0
        %1249 = vmatpush1.bf16.msra.mxu0 0
        %1250 = vmatprep.subr.bf16.mxu0 0
        %1251 = vmatpush1.bf16.msra.mxu0 0
        %1252 = vmatprep.subr.bf16.mxu0 0
        %1253 = vmatpush1.bf16.msra.mxu0 0
        %1254 = vmatprep.subr.bf16.mxu0 0
        %1255 = vmatpush1.bf16.msra.mxu0 0
        %1256 = vmatprep.subr.bf16.mxu0 0
        %1257 = vmatpush1.bf16.msra.mxu0 0
        %1258 = vmatprep.subr.bf16.mxu0 0
        %1259 = vmatpush1.bf16.msra.mxu0 0
        %1260 = vmatprep.subr.bf16.mxu0 0
        %1261 = vmatpush1.bf16.msra.mxu0 0
        %1262 = vmatprep.mubr.bf16.mxu0 0
        %1263 = vmatmul.mubr.bf16.gmra.mrb[0].mxu0 %v1146
        %v1264 = vpop.f32.mrb[0].mxu0
        %v1265 = vadd.f32 %v659, %v1264
        %v1266 = vpop.f32.mrb[0].mxu0
        %v1267 = vadd.f32 %v663, %v1266
        %v1268 = vpop.f32.mrb[0].mxu0
        %v1269 = vpop.f32.mrb[0].mxu0
        %1270 = vdwg.mxu0
        %v1283 = vunpack.c.l.b16 %v572
        %v1284 = vunpack.c.h.b16 %v572
        %v1285 = vunpack.c.l.b16 %v573
        %v1286 = vunpack.c.h.b16 %v573
        %v1287 = vunpack.c.l.b16 %v574
        %v1288 = vunpack.c.h.b16 %v574
        %v1289 = vunpack.c.l.b16 %v575
        %v1290 = vunpack.c.h.b16 %v575
        %v1291 = vunpack.c.l.b16 %v576
        %v1292 = vunpack.c.h.b16 %v576
        %v1293 = vunpack.c.l.b16 %v577
        %v1294 = vunpack.c.h.b16 %v577
        %v1295 = vunpack.c.l.b16 %v578
        %v1296 = vunpack.c.h.b16 %v578
        %v1297 = vunpack.c.l.b16 %v579
        %v1298 = vunpack.c.h.b16 %v579
        %v1299 = vunpack.c.l.b16 %v580
        %v1300 = vunpack.c.h.b16 %v580
        %v1301 = vunpack.c.l.b16 %v581
        %v1302 = vunpack.c.h.b16 %v581
        %v1303 = vunpack.c.l.b16 %v582
        %v1304 = vunpack.c.h.b16 %v582
        %v1305 = vunpack.c.l.b16 %v583
        %v1306 = vunpack.c.h.b16 %v583
        %v1307 = vpack.c.b16 %v1289, %v1283
        %v1308 = vpack.c.b16 %v1290, %v1284
        %v1309 = vpack.c.b16 %v1291, %v1285
        %v1310 = vpack.c.b16 %v1292, %v1286
        %v1311 = vpack.c.b16 %v1293, %v1287
        %v1312 = vpack.c.b16 %v1294, %v1288
        %v1313 = vpack.c.b16 %v1301, %v1295
        %v1314 = vpack.c.b16 %v1302, %v1296
        %v1315 = vpack.c.b16 %v1303, %v1297
        %v1316 = vpack.c.b16 %v1304, %v1298
        %v1317 = vpack.c.b16 %v1305, %v1299
        %v1318 = vpack.c.b16 %v1306, %v1300
        %v1332 = vsel %vm772, %v535, 0
        %1334 = vmatprep.subr.bf16.mxu0 %v1308
        %1335 = vmatpush1.bf16.msra.mxu0 %v1307
        %1336 = vmatprep.subr.bf16.mxu0 %v1314
        %1337 = vmatpush1.bf16.msra.mxu0 %v1313
        %1338 = vmatprep.subr.bf16.mxu0 0
        %1339 = vmatpush1.bf16.msra.mxu0 0
        %1340 = vmatprep.subr.bf16.mxu0 0
        %1341 = vmatpush1.bf16.msra.mxu0 0
        %1342 = vmatprep.subr.bf16.mxu0 0
        %1343 = vmatpush1.bf16.msra.mxu0 0
        %1344 = vmatprep.subr.bf16.mxu0 0
        %1345 = vmatpush1.bf16.msra.mxu0 0
        %1346 = vmatprep.subr.bf16.mxu0 0
        %1347 = vmatpush1.bf16.msra.mxu0 0
        %1348 = vmatprep.subr.bf16.mxu0 0
        %1349 = vmatpush1.bf16.msra.mxu0 0
        %1350 = vmatprep.subr.bf16.mxu0 0
        %1351 = vmatpush1.bf16.msra.mxu0 0
        %1352 = vmatprep.subr.bf16.mxu0 0
        %1353 = vmatpush1.bf16.msra.mxu0 0
        %1354 = vmatprep.subr.bf16.mxu0 0
        %1355 = vmatpush1.bf16.msra.mxu0 0
        %1356 = vmatprep.subr.bf16.mxu0 0
        %1357 = vmatpush1.bf16.msra.mxu0 0
        %1358 = vmatprep.subr.bf16.mxu0 0
        %1359 = vmatpush1.bf16.msra.mxu0 0
        %1360 = vmatprep.subr.bf16.mxu0 0
        %1361 = vmatpush1.bf16.msra.mxu0 0
        %1362 = vmatprep.subr.bf16.mxu0 0
        %1363 = vmatpush1.bf16.msra.mxu0 0
        %1364 = vmatprep.subr.bf16.mxu0 0
        %1365 = vmatpush1.bf16.msra.mxu0 0
        %1366 = vmatprep.mubr.bf16.mxu0 0
        %1367 = vmatmul.mubr.bf16.gmra.mrb[0].mxu0 %v1332
        %v1368 = vpop.f32.mrb[0].mxu0
        %v1369 = vadd.f32 %v667, %v1368
        %v1370 = vpop.f32.mrb[0].mxu0
        %v1371 = vadd.f32 %v671, %v1370
        %v1372 = vpop.f32.mrb[0].mxu0
        %v1373 = vpop.f32.mrb[0].mxu0
        %1374 = vdwg.mxu0
        %1375 = vmatprep.subr.bf16.mxu0 %v1310
        %1376 = vmatpush1.bf16.msra.mxu0 %v1309
        %1377 = vmatprep.subr.bf16.mxu0 %v1316
        %1378 = vmatpush1.bf16.msra.mxu0 %v1315
        %1379 = vmatprep.subr.bf16.mxu0 0
        %1380 = vmatpush1.bf16.msra.mxu0 0
        %1381 = vmatprep.subr.bf16.mxu0 0
        %1382 = vmatpush1.bf16.msra.mxu0 0
        %1383 = vmatprep.subr.bf16.mxu0 0
        %1384 = vmatpush1.bf16.msra.mxu0 0
        %1385 = vmatprep.subr.bf16.mxu0 0
        %1386 = vmatpush1.bf16.msra.mxu0 0
        %1387 = vmatprep.subr.bf16.mxu0 0
        %1388 = vmatpush1.bf16.msra.mxu0 0
        %1389 = vmatprep.subr.bf16.mxu0 0
        %1390 = vmatpush1.bf16.msra.mxu0 0
        %1391 = vmatprep.subr.bf16.mxu0 0
        %1392 = vmatpush1.bf16.msra.mxu0 0
        %1393 = vmatprep.subr.bf16.mxu0 0
        %1394 = vmatpush1.bf16.msra.mxu0 0
        %1395 = vmatprep.subr.bf16.mxu0 0
        %1396 = vmatpush1.bf16.msra.mxu0 0
        %1397 = vmatprep.subr.bf16.mxu0 0
        %1398 = vmatpush1.bf16.msra.mxu0 0
        %1399 = vmatprep.subr.bf16.mxu0 0
        %1400 = vmatpush1.bf16.msra.mxu0 0
        %1401 = vmatprep.subr.bf16.mxu0 0
        %1402 = vmatpush1.bf16.msra.mxu0 0
        %1403 = vmatprep.subr.bf16.mxu0 0
        %1404 = vmatpush1.bf16.msra.mxu0 0
        %1405 = vmatprep.subr.bf16.mxu0 0
        %1406 = vmatpush1.bf16.msra.mxu0 0
        %1407 = vmatprep.mubr.bf16.mxu0 0
        %1408 = vmatmul.mubr.bf16.gmra.mrb[0].mxu0 %v1332
        %v1409 = vpop.f32.mrb[0].mxu0
        %v1410 = vadd.f32 %v675, %v1409
        %v1411 = vpop.f32.mrb[0].mxu0
        %v1412 = vadd.f32 %v679, %v1411
        %v1413 = vpop.f32.mrb[0].mxu0
        %v1414 = vpop.f32.mrb[0].mxu0
        %1415 = vdwg.mxu0
        %1416 = vmatprep.subr.bf16.mxu0 %v1312
        %1417 = vmatpush1.bf16.msra.mxu0 %v1311
        %1418 = vmatprep.subr.bf16.mxu0 %v1318
        %1419 = vmatpush1.bf16.msra.mxu0 %v1317
        %1420 = vmatprep.subr.bf16.mxu0 0
        %1421 = vmatpush1.bf16.msra.mxu0 0
        %1422 = vmatprep.subr.bf16.mxu0 0
        %1423 = vmatpush1.bf16.msra.mxu0 0
        %1424 = vmatprep.subr.bf16.mxu0 0
        %1425 = vmatpush1.bf16.msra.mxu0 0
        %1426 = vmatprep.subr.bf16.mxu0 0
        %1427 = vmatpush1.bf16.msra.mxu0 0
        %1428 = vmatprep.subr.bf16.mxu0 0
        %1429 = vmatpush1.bf16.msra.mxu0 0
        %1430 = vmatprep.subr.bf16.mxu0 0
        %1431 = vmatpush1.bf16.msra.mxu0 0
        %1432 = vmatprep.subr.bf16.mxu0 0
        %1433 = vmatpush1.bf16.msra.mxu0 0
        %1434 = vmatprep.subr.bf16.mxu0 0
        %1435 = vmatpush1.bf16.msra.mxu0 0
        %1436 = vmatprep.subr.bf16.mxu0 0
        %1437 = vmatpush1.bf16.msra.mxu0 0
        %1438 = vmatprep.subr.bf16.mxu0 0
        %1439 = vmatpush1.bf16.msra.mxu0 0
        %1440 = vmatprep.subr.bf16.mxu0 0
        %1441 = vmatpush1.bf16.msra.mxu0 0
        %1442 = vmatprep.subr.bf16.mxu0 0
        %1443 = vmatpush1.bf16.msra.mxu0 0
        %1444 = vmatprep.subr.bf16.mxu0 0
        %1445 = vmatpush1.bf16.msra.mxu0 0
        %1446 = vmatprep.subr.bf16.mxu0 0
        %1447 = vmatpush1.bf16.msra.mxu0 0
        %1448 = vmatprep.mubr.bf16.mxu0 0
        %1449 = vmatmul.mubr.bf16.gmra.mrb[0].mxu0 %v1332
        %v1450 = vpop.f32.mrb[0].mxu0
        %v1451 = vadd.f32 %v683, %v1450
        %v1452 = vpop.f32.mrb[0].mxu0
        %v1453 = vadd.f32 %v687, %v1452
        %v1454 = vpop.f32.mrb[0].mxu0
        %v1455 = vpop.f32.mrb[0].mxu0
        %1456 = vdwg.mxu0
        %v1457 = vmul.f32 %v811, 0.5
        %v1458 = vmul.f32 %v813, 0.5
        %v1459 = vmul.f32 %v852, 0.5
        %v1460 = vmul.f32 %v854, 0.5
        %v1461 = vmul.f32 %v893, 0.5
        %v1462 = vmul.f32 %v895, 0.5
        %v1463 = vmul.f32 %v997, 0.5
        %v1464 = vmul.f32 %v999, 0.5
        %v1465 = vmul.f32 %v1038, 0.5
        %v1466 = vmul.f32 %v1040, 0.5
        %v1467 = vmul.f32 %v1079, 0.5
        %v1468 = vmul.f32 %v1081, 0.5
        %v1469 = vmul.f32 %v1183, 0.5
        %v1470 = vmul.f32 %v1185, 0.5
        %v1471 = vmul.f32 %v1224, 0.5
        %v1472 = vmul.f32 %v1226, 0.5
        %v1473 = vmul.f32 %v1265, 0.5
        %v1474 = vmul.f32 %v1267, 0.5
        %v1475 = vmul.f32 %v1369, 0.5
        %v1476 = vmul.f32 %v1371, 0.5
        %v1477 = vmul.f32 %v1410, 0.5
        %v1478 = vmul.f32 %v1412, 0.5
        %v1479 = vmul.f32 %v1451, 0.5
        %v1480 = vmul.f32 %v1453, 0.5
        %v1481 = vmul.f32 %v811, 0.70710677
        %v1482 = vmul.f32 %v813, 0.70710677
        %v1483 = vmul.f32 %v852, 0.70710677
        %v1484 = vmul.f32 %v854, 0.70710677
        %v1485 = vmul.f32 %v893, 0.70710677
        %v1486 = vmul.f32 %v895, 0.70710677
        %v1487 = vmul.f32 %v997, 0.70710677
        %v1488 = vmul.f32 %v999, 0.70710677
        %v1489 = vmul.f32 %v1038, 0.70710677
        %v1490 = vmul.f32 %v1040, 0.70710677
        %v1491 = vmul.f32 %v1079, 0.70710677
        %v1492 = vmul.f32 %v1081, 0.70710677
        %v1493 = vmul.f32 %v1183, 0.70710677
        %v1494 = vmul.f32 %v1185, 0.70710677
        %v1495 = vmul.f32 %v1224, 0.70710677
        %v1496 = vmul.f32 %v1226, 0.70710677
        %v1497 = vmul.f32 %v1265, 0.70710677
        %v1498 = vmul.f32 %v1267, 0.70710677
        %v1499 = vmul.f32 %v1369, 0.70710677
        %v1500 = vmul.f32 %v1371, 0.70710677
        %v1501 = vmul.f32 %v1410, 0.70710677
        %v1502 = vmul.f32 %v1412, 0.70710677
        %v1503 = vmul.f32 %v1451, 0.70710677
        %v1504 = vmul.f32 %v1453, 0.70710677
        %v1505 = verf.f32.pop %v1481
        %v1506 = verf.f32.pop %v1482
        %v1507 = verf.f32.pop %v1483
        %v1508 = verf.f32.pop %v1484
        %v1509 = verf.f32.pop %v1485
        %v1510 = verf.f32.pop %v1486
        %v1511 = verf.f32.pop %v1487
        %v1512 = verf.f32.pop %v1488
        %v1513 = verf.f32.pop %v1489
        %v1514 = verf.f32.pop %v1490
        %v1515 = verf.f32.pop %v1491
        %v1516 = verf.f32.pop %v1492
        %v1517 = verf.f32.pop %v1493
        %v1518 = verf.f32.pop %v1494
        %v1519 = verf.f32.pop %v1495
        %v1520 = verf.f32.pop %v1496
        %v1521 = verf.f32.pop %v1497
        %v1522 = verf.f32.pop %v1498
        %v1523 = verf.f32.pop %v1499
        %v1524 = verf.f32.pop %v1500
        %v1525 = verf.f32.pop %v1501
        %v1526 = verf.f32.pop %v1502
        %v1527 = verf.f32.pop %v1503
        %v1528 = verf.f32.pop %v1504
        %v1529 = vadd.f32 %v1505, 1.0
        %v1530 = vadd.f32 %v1506, 1.0
        %v1531 = vadd.f32 %v1507, 1.0
        %v1532 = vadd.f32 %v1508, 1.0
        %v1533 = vadd.f32 %v1509, 1.0
        %v1534 = vadd.f32 %v1510, 1.0
        %v1535 = vadd.f32 %v1511, 1.0
        %v1536 = vadd.f32 %v1512, 1.0
        %v1537 = vadd.f32 %v1513, 1.0
        %v1538 = vadd.f32 %v1514, 1.0
        %v1539 = vadd.f32 %v1515, 1.0
        %v1540 = vadd.f32 %v1516, 1.0
        %v1541 = vadd.f32 %v1517, 1.0
        %v1542 = vadd.f32 %v1518, 1.0
        %v1543 = vadd.f32 %v1519, 1.0
        %v1544 = vadd.f32 %v1520, 1.0
        %v1545 = vadd.f32 %v1521, 1.0
        %v1546 = vadd.f32 %v1522, 1.0
        %v1547 = vadd.f32 %v1523, 1.0
        %v1548 = vadd.f32 %v1524, 1.0
        %v1549 = vadd.f32 %v1525, 1.0
        %v1550 = vadd.f32 %v1526, 1.0
        %v1551 = vadd.f32 %v1527, 1.0
        %v1552 = vadd.f32 %v1528, 1.0
        %v1553 = vmul.f32 %v1457, %v1529
        %v1554 = vmul.f32 %v1458, %v1530
        %v1555 = vmul.f32 %v1459, %v1531
        %v1556 = vmul.f32 %v1460, %v1532
        %v1557 = vmul.f32 %v1461, %v1533
        %v1558 = vmul.f32 %v1462, %v1534
        %v1559 = vmul.f32 %v1463, %v1535
        %v1560 = vmul.f32 %v1464, %v1536
        %v1561 = vmul.f32 %v1465, %v1537
        %v1562 = vmul.f32 %v1466, %v1538
        %v1563 = vmul.f32 %v1467, %v1539
        %v1564 = vmul.f32 %v1468, %v1540
        %v1565 = vmul.f32 %v1469, %v1541
        %v1566 = vmul.f32 %v1470, %v1542
        %v1567 = vmul.f32 %v1471, %v1543
        %v1568 = vmul.f32 %v1472, %v1544
        %v1569 = vmul.f32 %v1473, %v1545
        %v1570 = vmul.f32 %v1474, %v1546
        %v1571 = vmul.f32 %v1475, %v1547
        %v1572 = vmul.f32 %v1476, %v1548
        %v1573 = vmul.f32 %v1477, %v1549
        %v1574 = vmul.f32 %v1478, %v1550
        %v1575 = vmul.f32 %v1479, %v1551
        %v1576 = vmul.f32 %v1480, %v1552
        %v1577 = vpack.c.bf16 %v1553, %v1553
        %v1578 = vpack.c.bf16 %v1554, %v1554
        %v1579 = vpack.c.bf16 %v1555, %v1555
        %v1580 = vpack.c.bf16 %v1556, %v1556
        %v1581 = vpack.c.bf16 %v1557, %v1557
        %v1582 = vpack.c.bf16 %v1558, %v1558
        %v1583 = vpack.c.bf16 %v1559, %v1559
        %v1584 = vpack.c.bf16 %v1560, %v1560
        %v1585 = vpack.c.bf16 %v1561, %v1561
        %v1586 = vpack.c.bf16 %v1562, %v1562
        %v1587 = vpack.c.bf16 %v1563, %v1563
        %v1588 = vpack.c.bf16 %v1564, %v1564
        %v1589 = vpack.c.bf16 %v1565, %v1565
        %v1590 = vpack.c.bf16 %v1566, %v1566
        %v1591 = vpack.c.bf16 %v1567, %v1567
        %v1592 = vpack.c.bf16 %v1568, %v1568
        %v1593 = vpack.c.bf16 %v1569, %v1569
        %v1594 = vpack.c.bf16 %v1570, %v1570
        %v1595 = vpack.c.bf16 %v1571, %v1571
        %v1596 = vpack.c.bf16 %v1572, %v1572
        %v1597 = vpack.c.bf16 %v1573, %v1573
        %v1598 = vpack.c.bf16 %v1574, %v1574
        %v1599 = vpack.c.bf16 %v1575, %v1575
        %v1600 = vpack.c.bf16 %v1576, %v1576
        %v1601 = vld [vmem:[%s386] sm:$0xf]
        %v1602 = vld [vmem:[%s386 + $0x4] sm:$0xf]
        %v1603 = vld [vmem:[%s386 + $0x8] sm:$0xf]
        %v1604 = vld [vmem:[%s386 + $0xc] sm:$0xf]
        %v1605 = vld [vmem:[%s386 + $0x10] sm:$0xf]
        %v1606 = vld [vmem:[%s386 + $0x14] sm:$0xf]
        %v1607 = vld [vmem:[%s386 + $0x18] sm:$0xf]
        %v1608 = vld [vmem:[%s386 + $0x1c] sm:$0xf]
        %v1609 = vld [vmem:[%s386 + $0x20] sm:$0xf]
        %v1610 = vld [vmem:[%s386 + $0x24] sm:$0xf]
        %v1611 = vld [vmem:[%s386 + $0x28] sm:$0xf]
        %v1612 = vld [vmem:[%s386 + $0x2c] sm:$0xf]
        %v1613 = vld [vmem:[%s386 + $0x30] sm:$0xf]
        %v1614 = vld [vmem:[%s386 + $0x34] sm:$0xf]
        %v1615 = vld [vmem:[%s386 + $0x38] sm:$0xf]
        %v1616 = vld [vmem:[%s386 + $0x3c] sm:$0xf]
        %v1617 = vld [vmem:[%s386 + $0x40] sm:$0xf]
        %v1618 = vld [vmem:[%s386 + $0x44] sm:$0xf]
        %v1619 = vld [vmem:[%s386 + $0x48] sm:$0xf]
        %v1620 = vld [vmem:[%s386 + $0x4c] sm:$0xf]
        %v1621 = vld [vmem:[%s386 + $0x50] sm:$0xf]
        %v1622 = vld [vmem:[%s386 + $0x54] sm:$0xf]
        %v1623 = vld [vmem:[%s386 + $0x58] sm:$0xf]
        %v1624 = vld [vmem:[%s386 + $0x5c] sm:$0xf]
        %v1625 = vld [vmem:[%s386 + $0x60] sm:$0xf]
        %v1626 = vld [vmem:[%s386 + $0x64] sm:$0xf]
        %v1627 = vld [vmem:[%s386 + $0x68] sm:$0xf]
        %v1628 = vld [vmem:[%s386 + $0x6c] sm:$0xf]
        %v1629 = vld [vmem:[%s386 + $0x70] sm:$0xf]
        %v1630 = vld [vmem:[%s386 + $0x74] sm:$0xf]
        %v1631 = vld [vmem:[%s386 + $0x78] sm:$0xf]
        %v1632 = vld [vmem:[%s386 + $0x7c] sm:$0xf]
        %v1633 = vld [vmem:[%s386 + $0x80] sm:$0xf]
        %v1634 = vld [vmem:[%s386 + $0x84] sm:$0xf]
        %v1635 = vld [vmem:[%s386 + $0x88] sm:$0xf]
        %v1636 = vld [vmem:[%s386 + $0x8c] sm:$0xf]
        %v1637 = vld [vmem:[%s386 + $0x90] sm:$0xf]
        %v1638 = vld [vmem:[%s386 + $0x94] sm:$0xf]
        %v1639 = vld [vmem:[%s386 + $0x98] sm:$0xf]
        %v1640 = vld [vmem:[%s386 + $0x9c] sm:$0xf]
        %v1641 = vld [vmem:[%s386 + $0xa0] sm:$0xf]
        %v1642 = vld [vmem:[%s386 + $0xa4] sm:$0xf]
        %v1643 = vld [vmem:[%s386 + $0xa8] sm:$0xf]
        %v1644 = vld [vmem:[%s386 + $0xac] sm:$0xf]
        %v1645 = vld [vmem:[%s386 + $0xb0] sm:$0xf]
        %v1646 = vld [vmem:[%s386 + $0xb4] sm:$0xf]
        %v1647 = vld [vmem:[%s386 + $0xb8] sm:$0xf]
        %v1648 = vld [vmem:[%s386 + $0xbc] sm:$0xf]
        %v1649 = vld [vmem:[%s386 + $0xc0] sm:$0xf]
        %v1650 = vld [vmem:[%s386 + $0xc4] sm:$0xf]
        %v1651 = vld [vmem:[%s386 + $0xc8] sm:$0xf]
        %v1652 = vld [vmem:[%s386 + $0xcc] sm:$0xf]
        %v1653 = vld [vmem:[%s386 + $0xd0] sm:$0xf]
        %v1654 = vld [vmem:[%s386 + $0xd4] sm:$0xf]
        %v1655 = vld [vmem:[%s386 + $0xd8] sm:$0xf]
        %v1656 = vld [vmem:[%s386 + $0xdc] sm:$0xf]
        %v1657 = vld [vmem:[%s386 + $0xe0] sm:$0xf]
        %v1658 = vld [vmem:[%s386 + $0xe4] sm:$0xf]
        %v1659 = vld [vmem:[%s386 + $0xe8] sm:$0xf]
        %v1660 = vld [vmem:[%s386 + $0xec] sm:$0xf]
        %v1661 = vld [vmem:[%s386 + $0xf0] sm:$0xf]
        %v1662 = vld [vmem:[%s386 + $0xf4] sm:$0xf]
        %v1663 = vld [vmem:[%s386 + $0xf8] sm:$0xf]
        %v1664 = vld [vmem:[%s386 + $0xfc] sm:$0xf]
        %v1665 = vld [vmem:[%s386 + $0x100] sm:$0xf]
        %v1666 = vld [vmem:[%s386 + $0x104] sm:$0xf]
        %v1667 = vld [vmem:[%s386 + $0x108] sm:$0xf]
        %v1668 = vld [vmem:[%s386 + $0x10c] sm:$0xf]
        %v1669 = vld [vmem:[%s386 + $0x110] sm:$0xf]
        %v1670 = vld [vmem:[%s386 + $0x114] sm:$0xf]
        %v1671 = vld [vmem:[%s386 + $0x118] sm:$0xf]
        %v1672 = vld [vmem:[%s386 + $0x11c] sm:$0xf]
        %v1673 = vld [vmem:[%s386 + $0x120] sm:$0xf]
        %v1674 = vld [vmem:[%s386 + $0x124] sm:$0xf]
        %v1675 = vld [vmem:[%s386 + $0x128] sm:$0xf]
        %v1676 = vld [vmem:[%s386 + $0x12c] sm:$0xf]
        %v1677 = vld [vmem:[%s386 + $0x130] sm:$0xf]
        %v1678 = vld [vmem:[%s386 + $0x134] sm:$0xf]
        %v1679 = vld [vmem:[%s386 + $0x138] sm:$0xf]
        %v1680 = vld [vmem:[%s386 + $0x13c] sm:$0xf]
        %v1681 = vld [vmem:[%s386 + $0x140] sm:$0xf]
        %v1682 = vld [vmem:[%s386 + $0x144] sm:$0xf]
        %v1683 = vld [vmem:[%s386 + $0x148] sm:$0xf]
        %v1684 = vld [vmem:[%s386 + $0x14c] sm:$0xf]
        %v1685 = vld [vmem:[%s386 + $0x150] sm:$0xf]
        %v1686 = vld [vmem:[%s386 + $0x154] sm:$0xf]
        %v1687 = vld [vmem:[%s386 + $0x158] sm:$0xf]
        %v1688 = vld [vmem:[%s386 + $0x15c] sm:$0xf]
        %v1689 = vld [vmem:[%s386 + $0x160] sm:$0xf]
        %v1690 = vld [vmem:[%s386 + $0x164] sm:$0xf]
        %v1691 = vld [vmem:[%s386 + $0x168] sm:$0xf]
        %v1692 = vld [vmem:[%s386 + $0x16c] sm:$0xf]
        %v1693 = vld [vmem:[%s386 + $0x170] sm:$0xf]
        %v1694 = vld [vmem:[%s386 + $0x174] sm:$0xf]
        %v1695 = vld [vmem:[%s386 + $0x178] sm:$0xf]
        %v1696 = vld [vmem:[%s386 + $0x17c] sm:$0xf]
        %v1697 = vld [vmem:[%s386 + $0x180] sm:$0xf]
        %v1698 = vld [vmem:[%s386 + $0x184] sm:$0xf]
        %v1699 = vld [vmem:[%s386 + $0x188] sm:$0xf]
        %v1700 = vld [vmem:[%s386 + $0x18c] sm:$0xf]
        %v1701 = vld [vmem:[%s386 + $0x190] sm:$0xf]
        %v1702 = vld [vmem:[%s386 + $0x194] sm:$0xf]
        %v1703 = vld [vmem:[%s386 + $0x198] sm:$0xf]
        %v1704 = vld [vmem:[%s386 + $0x19c] sm:$0xf]
        %v1705 = vld [vmem:[%s386 + $0x1a0] sm:$0xf]
        %v1706 = vld [vmem:[%s386 + $0x1a4] sm:$0xf]
        %v1707 = vld [vmem:[%s386 + $0x1a8] sm:$0xf]
        %v1708 = vld [vmem:[%s386 + $0x1ac] sm:$0xf]
        %v1709 = vld [vmem:[%s386 + $0x1b0] sm:$0xf]
        %v1710 = vld [vmem:[%s386 + $0x1b4] sm:$0xf]
        %v1711 = vld [vmem:[%s386 + $0x1b8] sm:$0xf]
        %v1712 = vld [vmem:[%s386 + $0x1bc] sm:$0xf]
        %v1713 = vld [vmem:[%s386 + $0x1c0] sm:$0xf]
        %v1714 = vld [vmem:[%s386 + $0x1c4] sm:$0xf]
        %v1715 = vld [vmem:[%s386 + $0x1c8] sm:$0xf]
        %v1716 = vld [vmem:[%s386 + $0x1cc] sm:$0xf]
        %v1717 = vld [vmem:[%s386 + $0x1d0] sm:$0xf]
        %v1718 = vld [vmem:[%s386 + $0x1d4] sm:$0xf]
        %v1719 = vld [vmem:[%s386 + $0x1d8] sm:$0xf]
        %v1720 = vld [vmem:[%s386 + $0x1dc] sm:$0xf]
        %v1721 = vld [vmem:[%s386 + $0x1e0] sm:$0xf]
        %v1722 = vld [vmem:[%s386 + $0x1e4] sm:$0xf]
        %v1723 = vld [vmem:[%s386 + $0x1e8] sm:$0xf]
        %v1724 = vld [vmem:[%s386 + $0x1ec] sm:$0xf]
        %v1725 = vld [vmem:[%s386 + $0x1f0] sm:$0xf]
        %v1726 = vld [vmem:[%s386 + $0x1f4] sm:$0xf]
        %v1727 = vld [vmem:[%s386 + $0x1f8] sm:$0xf]
        %v1728 = vld [vmem:[%s386 + $0x1fc] sm:$0xf]
        %v1729 = vld [vmem:[%s386 + $0x200] sm:$0xf]
        %v1730 = vld [vmem:[%s386 + $0x204] sm:$0xf]
        %v1731 = vld [vmem:[%s386 + $0x208] sm:$0xf]
        %v1732 = vld [vmem:[%s386 + $0x20c] sm:$0xf]
        %v1733 = vld [vmem:[%s386 + $0x210] sm:$0xf]
        %v1734 = vld [vmem:[%s386 + $0x214] sm:$0xf]
        %v1735 = vld [vmem:[%s386 + $0x218] sm:$0xf]
        %v1736 = vld [vmem:[%s386 + $0x21c] sm:$0xf]
        %v1737 = vld [vmem:[%s386 + $0x220] sm:$0xf]
        %v1738 = vld [vmem:[%s386 + $0x224] sm:$0xf]
        %v1739 = vld [vmem:[%s386 + $0x228] sm:$0xf]
        %v1740 = vld [vmem:[%s386 + $0x22c] sm:$0xf]
        %v1741 = vld [vmem:[%s386 + $0x230] sm:$0xf]
        %v1742 = vld [vmem:[%s386 + $0x234] sm:$0xf]
        %v1743 = vld [vmem:[%s386 + $0x238] sm:$0xf]
        %v1744 = vld [vmem:[%s386 + $0x23c] sm:$0xf]
        %v1745 = vld [vmem:[%s386 + $0x240] sm:$0xf]
        %v1746 = vld [vmem:[%s386 + $0x244] sm:$0xf]
        %v1747 = vld [vmem:[%s386 + $0x248] sm:$0xf]
        %v1748 = vld [vmem:[%s386 + $0x24c] sm:$0xf]
        %v1749 = vld [vmem:[%s386 + $0x250] sm:$0xf]
        %v1750 = vld [vmem:[%s386 + $0x254] sm:$0xf]
        %v1751 = vld [vmem:[%s386 + $0x258] sm:$0xf]
        %v1752 = vld [vmem:[%s386 + $0x25c] sm:$0xf]
        %v1753 = vld [vmem:[%s386 + $0x260] sm:$0xf]
        %v1754 = vld [vmem:[%s386 + $0x264] sm:$0xf]
        %v1755 = vld [vmem:[%s386 + $0x268] sm:$0xf]
        %v1756 = vld [vmem:[%s386 + $0x26c] sm:$0xf]
        %v1757 = vld [vmem:[%s386 + $0x270] sm:$0xf]
        %v1758 = vld [vmem:[%s386 + $0x274] sm:$0xf]
        %v1759 = vld [vmem:[%s386 + $0x278] sm:$0xf]
        %v1760 = vld [vmem:[%s386 + $0x27c] sm:$0xf]
        %v1761 = vld [vmem:[%s386 + $0x280] sm:$0xf]
        %v1762 = vld [vmem:[%s386 + $0x284] sm:$0xf]
        %v1763 = vld [vmem:[%s386 + $0x288] sm:$0xf]
        %v1764 = vld [vmem:[%s386 + $0x28c] sm:$0xf]
        %v1765 = vld [vmem:[%s386 + $0x290] sm:$0xf]
        %v1766 = vld [vmem:[%s386 + $0x294] sm:$0xf]
        %v1767 = vld [vmem:[%s386 + $0x298] sm:$0xf]
        %v1768 = vld [vmem:[%s386 + $0x29c] sm:$0xf]
        %v1769 = vld [vmem:[%s386 + $0x2a0] sm:$0xf]
        %v1770 = vld [vmem:[%s386 + $0x2a4] sm:$0xf]
        %v1771 = vld [vmem:[%s386 + $0x2a8] sm:$0xf]
        %v1772 = vld [vmem:[%s386 + $0x2ac] sm:$0xf]
        %v1773 = vld [vmem:[%s386 + $0x2b0] sm:$0xf]
        %v1774 = vld [vmem:[%s386 + $0x2b4] sm:$0xf]
        %v1775 = vld [vmem:[%s386 + $0x2b8] sm:$0xf]
        %v1776 = vld [vmem:[%s386 + $0x2bc] sm:$0xf]
        %v1777 = vld [vmem:[%s386 + $0x2c0] sm:$0xf]
        %v1778 = vld [vmem:[%s386 + $0x2c4] sm:$0xf]
        %v1779 = vld [vmem:[%s386 + $0x2c8] sm:$0xf]
        %v1780 = vld [vmem:[%s386 + $0x2cc] sm:$0xf]
        %v1781 = vld [vmem:[%s386 + $0x2d0] sm:$0xf]
        %v1782 = vld [vmem:[%s386 + $0x2d4] sm:$0xf]
        %v1783 = vld [vmem:[%s386 + $0x2d8] sm:$0xf]
        %v1784 = vld [vmem:[%s386 + $0x2dc] sm:$0xf]
        %v1785 = vld [vmem:[%s386 + $0x2e0] sm:$0xf]
        %v1786 = vld [vmem:[%s386 + $0x2e4] sm:$0xf]
        %v1787 = vld [vmem:[%s386 + $0x2e8] sm:$0xf]
        %v1788 = vld [vmem:[%s386 + $0x2ec] sm:$0xf]
        %v1789 = vld [vmem:[%s386 + $0x2f0] sm:$0xf]
        %v1790 = vld [vmem:[%s386 + $0x2f4] sm:$0xf]
        %v1791 = vld [vmem:[%s386 + $0x2f8] sm:$0xf]
        %v1792 = vld [vmem:[%s386 + $0x2fc] sm:$0xf]
        %v1793 = vld [vmem:[%s386 + $0x300] sm:$0xf]
        %v1794 = vld [vmem:[%s386 + $0x304] sm:$0xf]
        %v1795 = vld [vmem:[%s386 + $0x308] sm:$0xf]
        %v1796 = vld [vmem:[%s386 + $0x30c] sm:$0xf]
        %v1797 = vld [vmem:[%s386 + $0x310] sm:$0xf]
        %v1798 = vld [vmem:[%s386 + $0x314] sm:$0xf]
        %v1799 = vld [vmem:[%s386 + $0x318] sm:$0xf]
        %v1800 = vld [vmem:[%s386 + $0x31c] sm:$0xf]
        %v1801 = vld [vmem:[%s386 + $0x320] sm:$0xf]
        %v1802 = vld [vmem:[%s386 + $0x324] sm:$0xf]
        %v1803 = vld [vmem:[%s386 + $0x328] sm:$0xf]
        %v1804 = vld [vmem:[%s386 + $0x32c] sm:$0xf]
        %v1805 = vld [vmem:[%s386 + $0x330] sm:$0xf]
        %v1806 = vld [vmem:[%s386 + $0x334] sm:$0xf]
        %v1807 = vld [vmem:[%s386 + $0x338] sm:$0xf]
        %v1808 = vld [vmem:[%s386 + $0x33c] sm:$0xf]
        %v1809 = vld [vmem:[%s386 + $0x340] sm:$0xf]
        %v1810 = vld [vmem:[%s386 + $0x344] sm:$0xf]
        %v1811 = vld [vmem:[%s386 + $0x348] sm:$0xf]
        %v1812 = vld [vmem:[%s386 + $0x34c] sm:$0xf]
        %v1813 = vld [vmem:[%s386 + $0x350] sm:$0xf]
        %v1814 = vld [vmem:[%s386 + $0x354] sm:$0xf]
        %v1815 = vld [vmem:[%s386 + $0x358] sm:$0xf]
        %v1816 = vld [vmem:[%s386 + $0x35c] sm:$0xf]
        %v1817 = vld [vmem:[%s386 + $0x360] sm:$0xf]
        %v1818 = vld [vmem:[%s386 + $0x364] sm:$0xf]
        %v1819 = vld [vmem:[%s386 + $0x368] sm:$0xf]
        %v1820 = vld [vmem:[%s386 + $0x36c] sm:$0xf]
        %v1821 = vld [vmem:[%s386 + $0x370] sm:$0xf]
        %v1822 = vld [vmem:[%s386 + $0x374] sm:$0xf]
        %v1823 = vld [vmem:[%s386 + $0x378] sm:$0xf]
        %v1824 = vld [vmem:[%s386 + $0x37c] sm:$0xf]
        %v1825 = vld [vmem:[%s386 + $0x380] sm:$0xf]
        %v1826 = vld [vmem:[%s386 + $0x384] sm:$0xf]
        %v1827 = vld [vmem:[%s386 + $0x388] sm:$0xf]
        %v1828 = vld [vmem:[%s386 + $0x38c] sm:$0xf]
        %v1829 = vld [vmem:[%s386 + $0x390] sm:$0xf]
        %v1830 = vld [vmem:[%s386 + $0x394] sm:$0xf]
        %v1831 = vld [vmem:[%s386 + $0x398] sm:$0xf]
        %v1832 = vld [vmem:[%s386 + $0x39c] sm:$0xf]
        %v1833 = vld [vmem:[%s386 + $0x3a0] sm:$0xf]
        %v1834 = vld [vmem:[%s386 + $0x3a4] sm:$0xf]
        %v1835 = vld [vmem:[%s386 + $0x3a8] sm:$0xf]
        %v1836 = vld [vmem:[%s386 + $0x3ac] sm:$0xf]
        %v1837 = vld [vmem:[%s386 + $0x3b0] sm:$0xf]
        %v1838 = vld [vmem:[%s386 + $0x3b4] sm:$0xf]
        %v1839 = vld [vmem:[%s386 + $0x3b8] sm:$0xf]
        %v1840 = vld [vmem:[%s386 + $0x3bc] sm:$0xf]
        %v1841 = vld [vmem:[%s386 + $0x3c0] sm:$0xf]
        %v1842 = vld [vmem:[%s386 + $0x3c4] sm:$0xf]
        %v1843 = vld [vmem:[%s386 + $0x3c8] sm:$0xf]
        %v1844 = vld [vmem:[%s386 + $0x3cc] sm:$0xf]
        %v1845 = vld [vmem:[%s386 + $0x3d0] sm:$0xf]
        %v1846 = vld [vmem:[%s386 + $0x3d4] sm:$0xf]
        %v1847 = vld [vmem:[%s386 + $0x3d8] sm:$0xf]
        %v1848 = vld [vmem:[%s386 + $0x3dc] sm:$0xf]
        %v1849 = vld [vmem:[%s386 + $0x3e0] sm:$0xf]
        %v1850 = vld [vmem:[%s386 + $0x3e4] sm:$0xf]
        %v1851 = vld [vmem:[%s386 + $0x3e8] sm:$0xf]
        %v1852 = vld [vmem:[%s386 + $0x3ec] sm:$0xf]
        %v1853 = vld [vmem:[%s386 + $0x3f0] sm:$0xf]
        %v1854 = vld [vmem:[%s386 + $0x3f4] sm:$0xf]
        %v1855 = vld [vmem:[%s386 + $0x3f8] sm:$0xf]
        %v1856 = vld [vmem:[%s386 + $0x3fc] sm:$0xf]
        %v1857 = vld [vmem:[%s386 + $0x400] sm:$0xf]
        %v1858 = vld [vmem:[%s386 + $0x404] sm:$0xf]
        %v1859 = vld [vmem:[%s386 + $0x408] sm:$0xf]
        %v1860 = vld [vmem:[%s386 + $0x40c] sm:$0xf]
        %v1861 = vld [vmem:[%s386 + $0x410] sm:$0xf]
        %v1862 = vld [vmem:[%s386 + $0x414] sm:$0xf]
        %v1863 = vld [vmem:[%s386 + $0x418] sm:$0xf]
        %v1864 = vld [vmem:[%s386 + $0x41c] sm:$0xf]
        %v1865 = vld [vmem:[%s386 + $0x420] sm:$0xf]
        %v1866 = vld [vmem:[%s386 + $0x424] sm:$0xf]
        %v1867 = vld [vmem:[%s386 + $0x428] sm:$0xf]
        %v1868 = vld [vmem:[%s386 + $0x42c] sm:$0xf]
        %v1869 = vld [vmem:[%s386 + $0x430] sm:$0xf]
        %v1870 = vld [vmem:[%s386 + $0x434] sm:$0xf]
        %v1871 = vld [vmem:[%s386 + $0x438] sm:$0xf]
        %v1872 = vld [vmem:[%s386 + $0x43c] sm:$0xf]
        %v1873 = vld [vmem:[%s386 + $0x440] sm:$0xf]
        %v1874 = vld [vmem:[%s386 + $0x444] sm:$0xf]
        %v1875 = vld [vmem:[%s386 + $0x448] sm:$0xf]
        %v1876 = vld [vmem:[%s386 + $0x44c] sm:$0xf]
        %v1877 = vld [vmem:[%s386 + $0x450] sm:$0xf]
        %v1878 = vld [vmem:[%s386 + $0x454] sm:$0xf]
        %v1879 = vld [vmem:[%s386 + $0x458] sm:$0xf]
        %v1880 = vld [vmem:[%s386 + $0x45c] sm:$0xf]
        %v1881 = vld [vmem:[%s386 + $0x460] sm:$0xf]
        %v1882 = vld [vmem:[%s386 + $0x464] sm:$0xf]
        %v1883 = vld [vmem:[%s386 + $0x468] sm:$0xf]
        %v1884 = vld [vmem:[%s386 + $0x46c] sm:$0xf]
        %v1885 = vld [vmem:[%s386 + $0x470] sm:$0xf]
        %v1886 = vld [vmem:[%s386 + $0x474] sm:$0xf]
        %v1887 = vld [vmem:[%s386 + $0x478] sm:$0xf]
        %v1888 = vld [vmem:[%s386 + $0x47c] sm:$0xf]
        %v1889 = vld [vmem:[%s386 + $0x480] sm:$0xf]
        %v1890 = vld [vmem:[%s386 + $0x484] sm:$0xf]
        %v1891 = vld [vmem:[%s386 + $0x488] sm:$0xf]
        %v1892 = vld [vmem:[%s386 + $0x48c] sm:$0xf]
        %v1893 = vld [vmem:[%s386 + $0x490] sm:$0xf]
        %v1894 = vld [vmem:[%s386 + $0x494] sm:$0xf]
        %v1895 = vld [vmem:[%s386 + $0x498] sm:$0xf]
        %v1896 = vld [vmem:[%s386 + $0x49c] sm:$0xf]
        %v1897 = vld [vmem:[%s386 + $0x4a0] sm:$0xf]
        %v1898 = vld [vmem:[%s386 + $0x4a4] sm:$0xf]
        %v1899 = vld [vmem:[%s386 + $0x4a8] sm:$0xf]
        %v1900 = vld [vmem:[%s386 + $0x4ac] sm:$0xf]
        %v1901 = vld [vmem:[%s386 + $0x4b0] sm:$0xf]
        %v1902 = vld [vmem:[%s386 + $0x4b4] sm:$0xf]
        %v1903 = vld [vmem:[%s386 + $0x4b8] sm:$0xf]
        %v1904 = vld [vmem:[%s386 + $0x4bc] sm:$0xf]
        %v1905 = vld [vmem:[%s386 + $0x4c0] sm:$0xf]
        %v1906 = vld [vmem:[%s386 + $0x4c4] sm:$0xf]
        %v1907 = vld [vmem:[%s386 + $0x4c8] sm:$0xf]
        %v1908 = vld [vmem:[%s386 + $0x4cc] sm:$0xf]
        %v1909 = vld [vmem:[%s386 + $0x4d0] sm:$0xf]
        %v1910 = vld [vmem:[%s386 + $0x4d4] sm:$0xf]
        %v1911 = vld [vmem:[%s386 + $0x4d8] sm:$0xf]
        %v1912 = vld [vmem:[%s386 + $0x4dc] sm:$0xf]
        %v1913 = vld [vmem:[%s386 + $0x4e0] sm:$0xf]
        %v1914 = vld [vmem:[%s386 + $0x4e4] sm:$0xf]
        %v1915 = vld [vmem:[%s386 + $0x4e8] sm:$0xf]
        %v1916 = vld [vmem:[%s386 + $0x4ec] sm:$0xf]
        %v1917 = vld [vmem:[%s386 + $0x4f0] sm:$0xf]
        %v1918 = vld [vmem:[%s386 + $0x4f4] sm:$0xf]
        %v1919 = vld [vmem:[%s386 + $0x4f8] sm:$0xf]
        %v1920 = vld [vmem:[%s386 + $0x4fc] sm:$0xf]
        %v1921 = vld [vmem:[%s386 + $0x500] sm:$0xf]
        %v1922 = vld [vmem:[%s386 + $0x504] sm:$0xf]
        %v1923 = vld [vmem:[%s386 + $0x508] sm:$0xf]
        %v1924 = vld [vmem:[%s386 + $0x50c] sm:$0xf]
        %v1925 = vld [vmem:[%s386 + $0x510] sm:$0xf]
        %v1926 = vld [vmem:[%s386 + $0x514] sm:$0xf]
        %v1927 = vld [vmem:[%s386 + $0x518] sm:$0xf]
        %v1928 = vld [vmem:[%s386 + $0x51c] sm:$0xf]
        %v1929 = vld [vmem:[%s386 + $0x520] sm:$0xf]
        %v1930 = vld [vmem:[%s386 + $0x524] sm:$0xf]
        %v1931 = vld [vmem:[%s386 + $0x528] sm:$0xf]
        %v1932 = vld [vmem:[%s386 + $0x52c] sm:$0xf]
        %v1933 = vld [vmem:[%s386 + $0x530] sm:$0xf]
        %v1934 = vld [vmem:[%s386 + $0x534] sm:$0xf]
        %v1935 = vld [vmem:[%s386 + $0x538] sm:$0xf]
        %v1936 = vld [vmem:[%s386 + $0x53c] sm:$0xf]
        %v1937 = vld [vmem:[%s386 + $0x540] sm:$0xf]
        %v1938 = vld [vmem:[%s386 + $0x544] sm:$0xf]
        %v1939 = vld [vmem:[%s386 + $0x548] sm:$0xf]
        %v1940 = vld [vmem:[%s386 + $0x54c] sm:$0xf]
        %v1941 = vld [vmem:[%s386 + $0x550] sm:$0xf]
        %v1942 = vld [vmem:[%s386 + $0x554] sm:$0xf]
        %v1943 = vld [vmem:[%s386 + $0x558] sm:$0xf]
        %v1944 = vld [vmem:[%s386 + $0x55c] sm:$0xf]
        %v1945 = vld [vmem:[%s386 + $0x560] sm:$0xf]
        %v1946 = vld [vmem:[%s386 + $0x564] sm:$0xf]
        %v1947 = vld [vmem:[%s386 + $0x568] sm:$0xf]
        %v1948 = vld [vmem:[%s386 + $0x56c] sm:$0xf]
        %v1949 = vld [vmem:[%s386 + $0x570] sm:$0xf]
        %v1950 = vld [vmem:[%s386 + $0x574] sm:$0xf]
        %v1951 = vld [vmem:[%s386 + $0x578] sm:$0xf]
        %v1952 = vld [vmem:[%s386 + $0x57c] sm:$0xf]
        %v1953 = vld [vmem:[%s386 + $0x580] sm:$0xf]
        %v1954 = vld [vmem:[%s386 + $0x584] sm:$0xf]
        %v1955 = vld [vmem:[%s386 + $0x588] sm:$0xf]
        %v1956 = vld [vmem:[%s386 + $0x58c] sm:$0xf]
        %v1957 = vld [vmem:[%s386 + $0x590] sm:$0xf]
        %v1958 = vld [vmem:[%s386 + $0x594] sm:$0xf]
        %v1959 = vld [vmem:[%s386 + $0x598] sm:$0xf]
        %v1960 = vld [vmem:[%s386 + $0x59c] sm:$0xf]
        %v1961 = vld [vmem:[%s386 + $0x5a0] sm:$0xf]
        %v1962 = vld [vmem:[%s386 + $0x5a4] sm:$0xf]
        %v1963 = vld [vmem:[%s386 + $0x5a8] sm:$0xf]
        %v1964 = vld [vmem:[%s386 + $0x5ac] sm:$0xf]
        %v1965 = vld [vmem:[%s386 + $0x5b0] sm:$0xf]
        %v1966 = vld [vmem:[%s386 + $0x5b4] sm:$0xf]
        %v1967 = vld [vmem:[%s386 + $0x5b8] sm:$0xf]
        %v1968 = vld [vmem:[%s386 + $0x5bc] sm:$0xf]
        %v1969 = vld [vmem:[%s386 + $0x5c0] sm:$0xf]
        %v1970 = vld [vmem:[%s386 + $0x5c4] sm:$0xf]
        %v1971 = vld [vmem:[%s386 + $0x5c8] sm:$0xf]
        %v1972 = vld [vmem:[%s386 + $0x5cc] sm:$0xf]
        %v1973 = vld [vmem:[%s386 + $0x5d0] sm:$0xf]
        %v1974 = vld [vmem:[%s386 + $0x5d4] sm:$0xf]
        %v1975 = vld [vmem:[%s386 + $0x5d8] sm:$0xf]
        %v1976 = vld [vmem:[%s386 + $0x5dc] sm:$0xf]
        %v1977 = vld [vmem:[%s386 + $0x5e0] sm:$0xf]
        %v1978 = vld [vmem:[%s386 + $0x5e4] sm:$0xf]
        %v1979 = vld [vmem:[%s386 + $0x5e8] sm:$0xf]
        %v1980 = vld [vmem:[%s386 + $0x5ec] sm:$0xf]
        %v1981 = vld [vmem:[%s386 + $0x5f0] sm:$0xf]
        %v1982 = vld [vmem:[%s386 + $0x5f4] sm:$0xf]
        %v1983 = vld [vmem:[%s386 + $0x5f8] sm:$0xf]
        %v1984 = vld [vmem:[%s386 + $0x5fc] sm:$0xf]
        %v1985 = vld [vmem:[%s391] sm:$0x1]
        %v1986 = vld [vmem:[%s391 + $0x1] sm:$0x1]
        %v1987 = vld [vmem:[%s391 + $0x2] sm:$0x1]
        %v1988 = vld [vmem:[%s391 + $0x3] sm:$0x1]
        %v1993 = vlaneseq
        %v1994 = vshrl.u32 %v1993, 7
        %v1995 = vsub.s32 0, %v1994
        %v1996 = vrot.slane %v1985, %v1995
        %v1997 = vlaneseq
        %v1998 = vshrl.u32 %v1997, 7
        %v1999 = vsub.s32 0, %v1998
        %v2000 = vrot.slane %v1986, %v1999
        %v2001 = vlaneseq
        %v2002 = vshrl.u32 %v2001, 7
        %v2003 = vsub.s32 0, %v2002
        %v2004 = vrot.slane %v1987, %v2003
        %v2005 = vlaneseq
        %v2006 = vshrl.u32 %v2005, 7
        %v2007 = vsub.s32 0, %v2006
        %v2008 = vrot.slane %v1988, %v2007
        %v2109 = vunpack.c.l.b16 %v1601
        %v2110 = vunpack.c.l.b16 %v1602
        %v2111 = vunpack.c.l.b16 %v1603
        %v2112 = vunpack.c.l.b16 %v1604
        %v2113 = vunpack.c.l.b16 %v1605
        %v2114 = vunpack.c.l.b16 %v1606
        %v2115 = vunpack.c.l.b16 %v1607
        %v2116 = vunpack.c.l.b16 %v1608
        %v2117 = vunpack.c.l.b16 %v1609
        %v2118 = vunpack.c.l.b16 %v1610
        %v2119 = vunpack.c.l.b16 %v1611
        %v2120 = vunpack.c.l.b16 %v1612
        %v2121 = vunpack.c.l.b16 %v1613
        %v2122 = vunpack.c.l.b16 %v1614
        %v2123 = vunpack.c.l.b16 %v1615
        %v2124 = vunpack.c.l.b16 %v1616
        %v2125 = vunpack.c.l.b16 %v1617
        %v2126 = vunpack.c.l.b16 %v1618
        %v2127 = vunpack.c.l.b16 %v1619
        %v2128 = vunpack.c.l.b16 %v1620
        %v2129 = vunpack.c.l.b16 %v1621
        %v2130 = vunpack.c.l.b16 %v1622
        %v2131 = vunpack.c.l.b16 %v1623
        %v2132 = vunpack.c.l.b16 %v1624
        %v2133 = vunpack.c.l.b16 %v1625
        %v2134 = vunpack.c.l.b16 %v1626
        %v2135 = vunpack.c.l.b16 %v1627
        %v2136 = vunpack.c.l.b16 %v1628
        %v2137 = vunpack.c.l.b16 %v1629
        %v2138 = vunpack.c.l.b16 %v1630
        %v2139 = vunpack.c.l.b16 %v1631
        %v2140 = vunpack.c.l.b16 %v1632
        %v2141 = vunpack.c.l.b16 %v1633
        %v2142 = vunpack.c.l.b16 %v1634
        %v2143 = vunpack.c.l.b16 %v1635
        %v2144 = vunpack.c.l.b16 %v1636
        %v2145 = vunpack.c.l.b16 %v1637
        %v2146 = vunpack.c.l.b16 %v1638
        %v2147 = vunpack.c.l.b16 %v1639
        %v2148 = vunpack.c.l.b16 %v1640
        %v2149 = vunpack.c.l.b16 %v1641
        %v2150 = vunpack.c.l.b16 %v1642
        %v2151 = vunpack.c.l.b16 %v1643
        %v2152 = vunpack.c.l.b16 %v1644
        %v2153 = vunpack.c.l.b16 %v1645
        %v2154 = vunpack.c.l.b16 %v1646
        %v2155 = vunpack.c.l.b16 %v1647
        %v2156 = vunpack.c.l.b16 %v1648
        %v2157 = vunpack.c.l.b16 %v1649
        %v2158 = vunpack.c.l.b16 %v1650
        %v2159 = vunpack.c.l.b16 %v1651
        %v2160 = vunpack.c.l.b16 %v1652
        %v2161 = vunpack.c.l.b16 %v1653
        %v2162 = vunpack.c.l.b16 %v1654
        %v2163 = vunpack.c.l.b16 %v1655
        %v2164 = vunpack.c.l.b16 %v1656
        %v2165 = vunpack.c.l.b16 %v1657
        %v2166 = vunpack.c.l.b16 %v1658
        %v2167 = vunpack.c.l.b16 %v1659
        %v2168 = vunpack.c.l.b16 %v1660
        %v2169 = vunpack.c.l.b16 %v1661
        %v2170 = vunpack.c.l.b16 %v1662
        %v2171 = vunpack.c.l.b16 %v1663
        %v2172 = vunpack.c.l.b16 %v1664
        %v2173 = vunpack.c.l.b16 %v1665
        %v2174 = vunpack.c.l.b16 %v1666
        %v2175 = vunpack.c.l.b16 %v1667
        %v2176 = vunpack.c.l.b16 %v1668
        %v2177 = vunpack.c.l.b16 %v1669
        %v2178 = vunpack.c.l.b16 %v1670
        %v2179 = vunpack.c.l.b16 %v1671
        %v2180 = vunpack.c.l.b16 %v1672
        %v2181 = vunpack.c.l.b16 %v1673
        %v2182 = vunpack.c.l.b16 %v1674
        %v2183 = vunpack.c.l.b16 %v1675
        %v2184 = vunpack.c.l.b16 %v1676
        %v2185 = vunpack.c.l.b16 %v1677
        %v2186 = vunpack.c.l.b16 %v1678
        %v2187 = vunpack.c.l.b16 %v1679
        %v2188 = vunpack.c.l.b16 %v1680
        %v2189 = vunpack.c.l.b16 %v1681
        %v2190 = vunpack.c.l.b16 %v1682
        %v2191 = vunpack.c.l.b16 %v1683
        %v2192 = vunpack.c.l.b16 %v1684
        %v2193 = vunpack.c.l.b16 %v1685
        %v2194 = vunpack.c.l.b16 %v1686
        %v2195 = vunpack.c.l.b16 %v1687
        %v2196 = vunpack.c.l.b16 %v1688
        %v2197 = vunpack.c.l.b16 %v1689
        %v2198 = vunpack.c.l.b16 %v1690
        %v2199 = vunpack.c.l.b16 %v1691
        %v2200 = vunpack.c.l.b16 %v1692
        %v2201 = vunpack.c.l.b16 %v1693
        %v2202 = vunpack.c.l.b16 %v1694
        %v2203 = vunpack.c.l.b16 %v1695
        %v2204 = vunpack.c.l.b16 %v1696
        %v2205 = vpack.c.b16 %v2110, %v2109
        %v2206 = vpack.c.b16 %v2112, %v2111
        %v2207 = vpack.c.b16 %v2114, %v2113
        %v2208 = vpack.c.b16 %v2116, %v2115
        %v2209 = vpack.c.b16 %v2118, %v2117
        %v2210 = vpack.c.b16 %v2120, %v2119
        %v2211 = vpack.c.b16 %v2122, %v2121
        %v2212 = vpack.c.b16 %v2124, %v2123
        %v2213 = vpack.c.b16 %v2126, %v2125
        %v2214 = vpack.c.b16 %v2128, %v2127
        %v2215 = vpack.c.b16 %v2130, %v2129
        %v2216 = vpack.c.b16 %v2132, %v2131
        %v2217 = vpack.c.b16 %v2134, %v2133
        %v2218 = vpack.c.b16 %v2136, %v2135
        %v2219 = vpack.c.b16 %v2138, %v2137
        %v2220 = vpack.c.b16 %v2140, %v2139
        %v2221 = vpack.c.b16 %v2142, %v2141
        %v2222 = vpack.c.b16 %v2144, %v2143
        %v2223 = vpack.c.b16 %v2146, %v2145
        %v2224 = vpack.c.b16 %v2148, %v2147
        %v2225 = vpack.c.b16 %v2150, %v2149
        %v2226 = vpack.c.b16 %v2152, %v2151
        %v2227 = vpack.c.b16 %v2154, %v2153
        %v2228 = vpack.c.b16 %v2156, %v2155
        %v2229 = vpack.c.b16 %v2158, %v2157
        %v2230 = vpack.c.b16 %v2160, %v2159
        %v2231 = vpack.c.b16 %v2162, %v2161
        %v2232 = vpack.c.b16 %v2164, %v2163
        %v2233 = vpack.c.b16 %v2166, %v2165
        %v2234 = vpack.c.b16 %v2168, %v2167
        %v2235 = vpack.c.b16 %v2170, %v2169
        %v2236 = vpack.c.b16 %v2172, %v2171
        %v2237 = vpack.c.b16 %v2174, %v2173
        %v2238 = vpack.c.b16 %v2176, %v2175
        %v2239 = vpack.c.b16 %v2178, %v2177
        %v2240 = vpack.c.b16 %v2180, %v2179
        %v2241 = vpack.c.b16 %v2182, %v2181
        %v2242 = vpack.c.b16 %v2184, %v2183
        %v2243 = vpack.c.b16 %v2186, %v2185
        %v2244 = vpack.c.b16 %v2188, %v2187
        %v2245 = vpack.c.b16 %v2190, %v2189
        %v2246 = vpack.c.b16 %v2192, %v2191
        %v2247 = vpack.c.b16 %v2194, %v2193
        %v2248 = vpack.c.b16 %v2196, %v2195
        %v2249 = vpack.c.b16 %v2198, %v2197
        %v2250 = vpack.c.b16 %v2200, %v2199
        %v2251 = vpack.c.b16 %v2202, %v2201
        %v2252 = vpack.c.b16 %v2204, %v2203
        %2301 = vmatprep.subr.bf16.mxu0 0
        %2302 = vmatpush1.bf16.msra.mxu0 %v2205
        %2303 = vmatprep.subr.bf16.mxu0 0
        %2304 = vmatpush1.bf16.msra.mxu0 %v2206
        %2305 = vmatprep.subr.bf16.mxu0 0
        %2306 = vmatpush1.bf16.msra.mxu0 %v2207
        %2307 = vmatprep.subr.bf16.mxu0 0
        %2308 = vmatpush1.bf16.msra.mxu0 %v2208
        %2309 = vmatprep.subr.bf16.mxu0 0
        %2310 = vmatpush1.bf16.msra.mxu0 %v2209
        %2311 = vmatprep.subr.bf16.mxu0 0
        %2312 = vmatpush1.bf16.msra.mxu0 %v2210
        %2313 = vmatprep.subr.bf16.mxu0 0
        %2314 = vmatpush1.bf16.msra.mxu0 %v2211
        %2315 = vmatprep.subr.bf16.mxu0 0
        %2316 = vmatpush1.bf16.msra.mxu0 %v2212
        %2317 = vmatprep.subr.bf16.mxu0 0
        %2318 = vmatpush1.bf16.msra.mxu0 %v2213
        %2319 = vmatprep.subr.bf16.mxu0 0
        %2320 = vmatpush1.bf16.msra.mxu0 %v2214
        %2321 = vmatprep.subr.bf16.mxu0 0
        %2322 = vmatpush1.bf16.msra.mxu0 %v2215
        %2323 = vmatprep.subr.bf16.mxu0 0
        %2324 = vmatpush1.bf16.msra.mxu0 %v2216
        %2325 = vmatprep.subr.bf16.mxu0 0
        %2326 = vmatpush1.bf16.msra.mxu0 %v2217
        %2327 = vmatprep.subr.bf16.mxu0 0
        %2328 = vmatpush1.bf16.msra.mxu0 %v2218
        %2329 = vmatprep.subr.bf16.mxu0 0
        %2330 = vmatpush1.bf16.msra.mxu0 %v2219
        %2331 = vmatprep.subr.bf16.mxu0 0
        %2332 = vmatpush1.bf16.msra.mxu0 %v2220
        %2333 = vmatprep.mubr.bf16.mxu0 %v1578
        %2334 = vmatmul.mubr.bf16.gmra.mrb[0].mxu0 %v1577
        %v2335 = vpop.f32.mrb[0].mxu0
        %v2336 = vadd.f32 %v1996, %v2335
        %v2337 = vpop.f32.mrb[0].mxu0
        %v2338 = vpop.f32.mrb[0].mxu0
        %v2339 = vpop.f32.mrb[0].mxu0
        %2340 = vdwg.mxu0
        %2341 = vmatprep.subr.bf16.mxu0 0
        %2342 = vmatpush1.bf16.msra.mxu0 %v2221
        %2343 = vmatprep.subr.bf16.mxu0 0
        %2344 = vmatpush1.bf16.msra.mxu0 %v2222
        %2345 = vmatprep.subr.bf16.mxu0 0
        %2346 = vmatpush1.bf16.msra.mxu0 %v2223
        %2347 = vmatprep.subr.bf16.mxu0 0
        %2348 = vmatpush1.bf16.msra.mxu0 %v2224
        %2349 = vmatprep.subr.bf16.mxu0 0
        %2350 = vmatpush1.bf16.msra.mxu0 %v2225
        %2351 = vmatprep.subr.bf16.mxu0 0
        %2352 = vmatpush1.bf16.msra.mxu0 %v2226
        %2353 = vmatprep.subr.bf16.mxu0 0
        %2354 = vmatpush1.bf16.msra.mxu0 %v2227
        %2355 = vmatprep.subr.bf16.mxu0 0
        %2356 = vmatpush1.bf16.msra.mxu0 %v2228
        %2357 = vmatprep.subr.bf16.mxu0 0
        %2358 = vmatpush1.bf16.msra.mxu0 %v2229
        %2359 = vmatprep.subr.bf16.mxu0 0
        %2360 = vmatpush1.bf16.msra.mxu0 %v2230
        %2361 = vmatprep.subr.bf16.mxu0 0
        %2362 = vmatpush1.bf16.msra.mxu0 %v2231
        %2363 = vmatprep.subr.bf16.mxu0 0
        %2364 = vmatpush1.bf16.msra.mxu0 %v2232
        %2365 = vmatprep.subr.bf16.mxu0 0
        %2366 = vmatpush1.bf16.msra.mxu0 %v2233
        %2367 = vmatprep.subr.bf16.mxu0 0
        %2368 = vmatpush1.bf16.msra.mxu0 %v2234
        %2369 = vmatprep.subr.bf16.mxu0 0
        %2370 = vmatpush1.bf16.msra.mxu0 %v2235
        %2371 = vmatprep.subr.bf16.mxu0 0
        %2372 = vmatpush1.bf16.msra.mxu0 %v2236
        %2373 = vmatprep.mubr.bf16.mxu0 %v1580
        %2374 = vmatmul.mubr.bf16.gmra.mrb[0].mxu0 %v1579
        %v2375 = vpop.f32.mrb[0].mxu0
        %v2376 = vadd.f32 %v2336, %v2375
        %v2377 = vpop.f32.mrb[0].mxu0
        %v2378 = vpop.f32.mrb[0].mxu0
        %v2379 = vpop.f32.mrb[0].mxu0
        %2380 = vdwg.mxu0
        %2381 = vmatprep.subr.bf16.mxu0 0
        %2382 = vmatpush1.bf16.msra.mxu0 %v2237
        %2383 = vmatprep.subr.bf16.mxu0 0
        %2384 = vmatpush1.bf16.msra.mxu0 %v2238
        %2385 = vmatprep.subr.bf16.mxu0 0
        %2386 = vmatpush1.bf16.msra.mxu0 %v2239
        %2387 = vmatprep.subr.bf16.mxu0 0
        %2388 = vmatpush1.bf16.msra.mxu0 %v2240
        %2389 = vmatprep.subr.bf16.mxu0 0
        %2390 = vmatpush1.bf16.msra.mxu0 %v2241
        %2391 = vmatprep.subr.bf16.mxu0 0
        %2392 = vmatpush1.bf16.msra.mxu0 %v2242
        %2393 = vmatprep.subr.bf16.mxu0 0
        %2394 = vmatpush1.bf16.msra.mxu0 %v2243
        %2395 = vmatprep.subr.bf16.mxu0 0
        %2396 = vmatpush1.bf16.msra.mxu0 %v2244
        %2397 = vmatprep.subr.bf16.mxu0 0
        %2398 = vmatpush1.bf16.msra.mxu0 %v2245
        %2399 = vmatprep.subr.bf16.mxu0 0
        %2400 = vmatpush1.bf16.msra.mxu0 %v2246
        %2401 = vmatprep.subr.bf16.mxu0 0
        %2402 = vmatpush1.bf16.msra.mxu0 %v2247
        %2403 = vmatprep.subr.bf16.mxu0 0
        %2404 = vmatpush1.bf16.msra.mxu0 %v2248
        %2405 = vmatprep.subr.bf16.mxu0 0
        %2406 = vmatpush1.bf16.msra.mxu0 %v2249
        %2407 = vmatprep.subr.bf16.mxu0 0
        %2408 = vmatpush1.bf16.msra.mxu0 %v2250
        %2409 = vmatprep.subr.bf16.mxu0 0
        %2410 = vmatpush1.bf16.msra.mxu0 %v2251
        %2411 = vmatprep.subr.bf16.mxu0 0
        %2412 = vmatpush1.bf16.msra.mxu0 %v2252
        %2413 = vmatprep.mubr.bf16.mxu0 %v1582
        %2414 = vmatmul.mubr.bf16.gmra.mrb[0].mxu0 %v1581
        %v2415 = vpop.f32.mrb[0].mxu0
        %v2416 = vadd.f32 %v2376, %v2415
        %v2417 = vpop.f32.mrb[0].mxu0
        %v2418 = vpop.f32.mrb[0].mxu0
        %v2419 = vpop.f32.mrb[0].mxu0
        %2420 = vdwg.mxu0
        %v2517 = vunpack.c.l.b16 %v1697
        %v2518 = vunpack.c.l.b16 %v1698
        %v2519 = vunpack.c.l.b16 %v1699
        %v2520 = vunpack.c.l.b16 %v1700
        %v2521 = vunpack.c.l.b16 %v1701
        %v2522 = vunpack.c.l.b16 %v1702
        %v2523 = vunpack.c.l.b16 %v1703
        %v2524 = vunpack.c.l.b16 %v1704
        %v2525 = vunpack.c.l.b16 %v1705
        %v2526 = vunpack.c.l.b16 %v1706
        %v2527 = vunpack.c.l.b16 %v1707
        %v2528 = vunpack.c.l.b16 %v1708
        %v2529 = vunpack.c.l.b16 %v1709
        %v2530 = vunpack.c.l.b16 %v1710
        %v2531 = vunpack.c.l.b16 %v1711
        %v2532 = vunpack.c.l.b16 %v1712
        %v2533 = vunpack.c.l.b16 %v1713
        %v2534 = vunpack.c.l.b16 %v1714
        %v2535 = vunpack.c.l.b16 %v1715
        %v2536 = vunpack.c.l.b16 %v1716
        %v2537 = vunpack.c.l.b16 %v1717
        %v2538 = vunpack.c.l.b16 %v1718
        %v2539 = vunpack.c.l.b16 %v1719
        %v2540 = vunpack.c.l.b16 %v1720
        %v2541 = vunpack.c.l.b16 %v1721
        %v2542 = vunpack.c.l.b16 %v1722
        %v2543 = vunpack.c.l.b16 %v1723
        %v2544 = vunpack.c.l.b16 %v1724
        %v2545 = vunpack.c.l.b16 %v1725
        %v2546 = vunpack.c.l.b16 %v1726
        %v2547 = vunpack.c.l.b16 %v1727
        %v2548 = vunpack.c.l.b16 %v1728
        %v2549 = vunpack.c.l.b16 %v1729
        %v2550 = vunpack.c.l.b16 %v1730
        %v2551 = vunpack.c.l.b16 %v1731
        %v2552 = vunpack.c.l.b16 %v1732
        %v2553 = vunpack.c.l.b16 %v1733
        %v2554 = vunpack.c.l.b16 %v1734
        %v2555 = vunpack.c.l.b16 %v1735
        %v2556 = vunpack.c.l.b16 %v1736
        %v2557 = vunpack.c.l.b16 %v1737
        %v2558 = vunpack.c.l.b16 %v1738
        %v2559 = vunpack.c.l.b16 %v1739
        %v2560 = vunpack.c.l.b16 %v1740
        %v2561 = vunpack.c.l.b16 %v1741
        %v2562 = vunpack.c.l.b16 %v1742
        %v2563 = vunpack.c.l.b16 %v1743
        %v2564 = vunpack.c.l.b16 %v1744
        %v2565 = vunpack.c.l.b16 %v1745
        %v2566 = vunpack.c.l.b16 %v1746
        %v2567 = vunpack.c.l.b16 %v1747
        %v2568 = vunpack.c.l.b16 %v1748
        %v2569 = vunpack.c.l.b16 %v1749
        %v2570 = vunpack.c.l.b16 %v1750
        %v2571 = vunpack.c.l.b16 %v1751
        %v2572 = vunpack.c.l.b16 %v1752
        %v2573 = vunpack.c.l.b16 %v1753
        %v2574 = vunpack.c.l.b16 %v1754
        %v2575 = vunpack.c.l.b16 %v1755
        %v2576 = vunpack.c.l.b16 %v1756
        %v2577 = vunpack.c.l.b16 %v1757
        %v2578 = vunpack.c.l.b16 %v1758
        %v2579 = vunpack.c.l.b16 %v1759
        %v2580 = vunpack.c.l.b16 %v1760
        %v2581 = vunpack.c.l.b16 %v1761
        %v2582 = vunpack.c.l.b16 %v1762
        %v2583 = vunpack.c.l.b16 %v1763
        %v2584 = vunpack.c.l.b16 %v1764
        %v2585 = vunpack.c.l.b16 %v1765
        %v2586 = vunpack.c.l.b16 %v1766
        %v2587 = vunpack.c.l.b16 %v1767
        %v2588 = vunpack.c.l.b16 %v1768
        %v2589 = vunpack.c.l.b16 %v1769
        %v2590 = vunpack.c.l.b16 %v1770
        %v2591 = vunpack.c.l.b16 %v1771
        %v2592 = vunpack.c.l.b16 %v1772
        %v2593 = vunpack.c.l.b16 %v1773
        %v2594 = vunpack.c.l.b16 %v1774
        %v2595 = vunpack.c.l.b16 %v1775
        %v2596 = vunpack.c.l.b16 %v1776
        %v2597 = vunpack.c.l.b16 %v1777
        %v2598 = vunpack.c.l.b16 %v1778
        %v2599 = vunpack.c.l.b16 %v1779
        %v2600 = vunpack.c.l.b16 %v1780
        %v2601 = vunpack.c.l.b16 %v1781
        %v2602 = vunpack.c.l.b16 %v1782
        %v2603 = vunpack.c.l.b16 %v1783
        %v2604 = vunpack.c.l.b16 %v1784
        %v2605 = vunpack.c.l.b16 %v1785
        %v2606 = vunpack.c.l.b16 %v1786
        %v2607 = vunpack.c.l.b16 %v1787
        %v2608 = vunpack.c.l.b16 %v1788
        %v2609 = vunpack.c.l.b16 %v1789
        %v2610 = vunpack.c.l.b16 %v1790
        %v2611 = vunpack.c.l.b16 %v1791
        %v2612 = vunpack.c.l.b16 %v1792
        %v2613 = vpack.c.b16 %v2518, %v2517
        %v2614 = vpack.c.b16 %v2520, %v2519
        %v2615 = vpack.c.b16 %v2522, %v2521
        %v2616 = vpack.c.b16 %v2524, %v2523
        %v2617 = vpack.c.b16 %v2526, %v2525
        %v2618 = vpack.c.b16 %v2528, %v2527
        %v2619 = vpack.c.b16 %v2530, %v2529
        %v2620 = vpack.c.b16 %v2532, %v2531
        %v2621 = vpack.c.b16 %v2534, %v2533
        %v2622 = vpack.c.b16 %v2536, %v2535
        %v2623 = vpack.c.b16 %v2538, %v2537
        %v2624 = vpack.c.b16 %v2540, %v2539
        %v2625 = vpack.c.b16 %v2542, %v2541
        %v2626 = vpack.c.b16 %v2544, %v2543
        %v2627 = vpack.c.b16 %v2546, %v2545
        %v2628 = vpack.c.b16 %v2548, %v2547
        %v2629 = vpack.c.b16 %v2550, %v2549
        %v2630 = vpack.c.b16 %v2552, %v2551
        %v2631 = vpack.c.b16 %v2554, %v2553
        %v2632 = vpack.c.b16 %v2556, %v2555
        %v2633 = vpack.c.b16 %v2558, %v2557
        %v2634 = vpack.c.b16 %v2560, %v2559
        %v2635 = vpack.c.b16 %v2562, %v2561
        %v2636 = vpack.c.b16 %v2564, %v2563
        %v2637 = vpack.c.b16 %v2566, %v2565
        %v2638 = vpack.c.b16 %v2568, %v2567
        %v2639 = vpack.c.b16 %v2570, %v2569
        %v2640 = vpack.c.b16 %v2572, %v2571
        %v2641 = vpack.c.b16 %v2574, %v2573
        %v2642 = vpack.c.b16 %v2576, %v2575
        %v2643 = vpack.c.b16 %v2578, %v2577
        %v2644 = vpack.c.b16 %v2580, %v2579
        %v2645 = vpack.c.b16 %v2582, %v2581
        %v2646 = vpack.c.b16 %v2584, %v2583
        %v2647 = vpack.c.b16 %v2586, %v2585
        %v2648 = vpack.c.b16 %v2588, %v2587
        %v2649 = vpack.c.b16 %v2590, %v2589
        %v2650 = vpack.c.b16 %v2592, %v2591
        %v2651 = vpack.c.b16 %v2594, %v2593
        %v2652 = vpack.c.b16 %v2596, %v2595
        %v2653 = vpack.c.b16 %v2598, %v2597
        %v2654 = vpack.c.b16 %v2600, %v2599
        %v2655 = vpack.c.b16 %v2602, %v2601
        %v2656 = vpack.c.b16 %v2604, %v2603
        %v2657 = vpack.c.b16 %v2606, %v2605
        %v2658 = vpack.c.b16 %v2608, %v2607
        %v2659 = vpack.c.b16 %v2610, %v2609
        %v2660 = vpack.c.b16 %v2612, %v2611
        %2709 = vmatprep.subr.bf16.mxu0 0
        %2710 = vmatpush1.bf16.msra.mxu0 %v2613
        %2711 = vmatprep.subr.bf16.mxu0 0
        %2712 = vmatpush1.bf16.msra.mxu0 %v2614
        %2713 = vmatprep.subr.bf16.mxu0 0
        %2714 = vmatpush1.bf16.msra.mxu0 %v2615
        %2715 = vmatprep.subr.bf16.mxu0 0
        %2716 = vmatpush1.bf16.msra.mxu0 %v2616
        %2717 = vmatprep.subr.bf16.mxu0 0
        %2718 = vmatpush1.bf16.msra.mxu0 %v2617
        %2719 = vmatprep.subr.bf16.mxu0 0
        %2720 = vmatpush1.bf16.msra.mxu0 %v2618
        %2721 = vmatprep.subr.bf16.mxu0 0
        %2722 = vmatpush1.bf16.msra.mxu0 %v2619
        %2723 = vmatprep.subr.bf16.mxu0 0
        %2724 = vmatpush1.bf16.msra.mxu0 %v2620
        %2725 = vmatprep.subr.bf16.mxu0 0
        %2726 = vmatpush1.bf16.msra.mxu0 %v2621
        %2727 = vmatprep.subr.bf16.mxu0 0
        %2728 = vmatpush1.bf16.msra.mxu0 %v2622
        %2729 = vmatprep.subr.bf16.mxu0 0
        %2730 = vmatpush1.bf16.msra.mxu0 %v2623
        %2731 = vmatprep.subr.bf16.mxu0 0
        %2732 = vmatpush1.bf16.msra.mxu0 %v2624
        %2733 = vmatprep.subr.bf16.mxu0 0
        %2734 = vmatpush1.bf16.msra.mxu0 %v2625
        %2735 = vmatprep.subr.bf16.mxu0 0
        %2736 = vmatpush1.bf16.msra.mxu0 %v2626
        %2737 = vmatprep.subr.bf16.mxu0 0
        %2738 = vmatpush1.bf16.msra.mxu0 %v2627
        %2739 = vmatprep.subr.bf16.mxu0 0
        %2740 = vmatpush1.bf16.msra.mxu0 %v2628
        %2741 = vmatprep.mubr.bf16.mxu0 %v1584
        %2742 = vmatmul.mubr.bf16.gmra.mrb[0].mxu0 %v1583
        %v2743 = vpop.f32.mrb[0].mxu0
        %v2744 = vadd.f32 %v2000, %v2743
        %v2745 = vpop.f32.mrb[0].mxu0
        %v2746 = vpop.f32.mrb[0].mxu0
        %v2747 = vpop.f32.mrb[0].mxu0
        %2748 = vdwg.mxu0
        %2749 = vmatprep.subr.bf16.mxu0 0
        %2750 = vmatpush1.bf16.msra.mxu0 %v2629
        %2751 = vmatprep.subr.bf16.mxu0 0
        %2752 = vmatpush1.bf16.msra.mxu0 %v2630
        %2753 = vmatprep.subr.bf16.mxu0 0
        %2754 = vmatpush1.bf16.msra.mxu0 %v2631
        %2755 = vmatprep.subr.bf16.mxu0 0
        %2756 = vmatpush1.bf16.msra.mxu0 %v2632
        %2757 = vmatprep.subr.bf16.mxu0 0
        %2758 = vmatpush1.bf16.msra.mxu0 %v2633
        %2759 = vmatprep.subr.bf16.mxu0 0
        %2760 = vmatpush1.bf16.msra.mxu0 %v2634
        %2761 = vmatprep.subr.bf16.mxu0 0
        %2762 = vmatpush1.bf16.msra.mxu0 %v2635
        %2763 = vmatprep.subr.bf16.mxu0 0
        %2764 = vmatpush1.bf16.msra.mxu0 %v2636
        %2765 = vmatprep.subr.bf16.mxu0 0
        %2766 = vmatpush1.bf16.msra.mxu0 %v2637
        %2767 = vmatprep.subr.bf16.mxu0 0
        %2768 = vmatpush1.bf16.msra.mxu0 %v2638
        %2769 = vmatprep.subr.bf16.mxu0 0
        %2770 = vmatpush1.bf16.msra.mxu0 %v2639
        %2771 = vmatprep.subr.bf16.mxu0 0
        %2772 = vmatpush1.bf16.msra.mxu0 %v2640
        %2773 = vmatprep.subr.bf16.mxu0 0
        %2774 = vmatpush1.bf16.msra.mxu0 %v2641
        %2775 = vmatprep.subr.bf16.mxu0 0
        %2776 = vmatpush1.bf16.msra.mxu0 %v2642
        %2777 = vmatprep.subr.bf16.mxu0 0
        %2778 = vmatpush1.bf16.msra.mxu0 %v2643
        %2779 = vmatprep.subr.bf16.mxu0 0
        %2780 = vmatpush1.bf16.msra.mxu0 %v2644
        %2781 = vmatprep.mubr.bf16.mxu0 %v1586
        %2782 = vmatmul.mubr.bf16.gmra.mrb[0].mxu0 %v1585
        %v2783 = vpop.f32.mrb[0].mxu0
        %v2784 = vadd.f32 %v2744, %v2783
        %v2785 = vpop.f32.mrb[0].mxu0
        %v2786 = vpop.f32.mrb[0].mxu0
        %v2787 = vpop.f32.mrb[0].mxu0
        %2788 = vdwg.mxu0
        %2789 = vmatprep.subr.bf16.mxu0 0
        %2790 = vmatpush1.bf16.msra.mxu0 %v2645
        %2791 = vmatprep.subr.bf16.mxu0 0
        %2792 = vmatpush1.bf16.msra.mxu0 %v2646
        %2793 = vmatprep.subr.bf16.mxu0 0
        %2794 = vmatpush1.bf16.msra.mxu0 %v2647
        %2795 = vmatprep.subr.bf16.mxu0 0
        %2796 = vmatpush1.bf16.msra.mxu0 %v2648
        %2797 = vmatprep.subr.bf16.mxu0 0
        %2798 = vmatpush1.bf16.msra.mxu0 %v2649
        %2799 = vmatprep.subr.bf16.mxu0 0
        %2800 = vmatpush1.bf16.msra.mxu0 %v2650
        %2801 = vmatprep.subr.bf16.mxu0 0
        %2802 = vmatpush1.bf16.msra.mxu0 %v2651
        %2803 = vmatprep.subr.bf16.mxu0 0
        %2804 = vmatpush1.bf16.msra.mxu0 %v2652
        %2805 = vmatprep.subr.bf16.mxu0 0
        %2806 = vmatpush1.bf16.msra.mxu0 %v2653
        %2807 = vmatprep.subr.bf16.mxu0 0
        %2808 = vmatpush1.bf16.msra.mxu0 %v2654
        %2809 = vmatprep.subr.bf16.mxu0 0
        %2810 = vmatpush1.bf16.msra.mxu0 %v2655
        %2811 = vmatprep.subr.bf16.mxu0 0
        %2812 = vmatpush1.bf16.msra.mxu0 %v2656
        %2813 = vmatprep.subr.bf16.mxu0 0
        %2814 = vmatpush1.bf16.msra.mxu0 %v2657
        %2815 = vmatprep.subr.bf16.mxu0 0
        %2816 = vmatpush1.bf16.msra.mxu0 %v2658
        %2817 = vmatprep.subr.bf16.mxu0 0
        %2818 = vmatpush1.bf16.msra.mxu0 %v2659
        %2819 = vmatprep.subr.bf16.mxu0 0
        %2820 = vmatpush1.bf16.msra.mxu0 %v2660
        %2821 = vmatprep.mubr.bf16.mxu0 %v1588
        %2822 = vmatmul.mubr.bf16.gmra.mrb[0].mxu0 %v1587
        %v2823 = vpop.f32.mrb[0].mxu0
        %v2824 = vadd.f32 %v2784, %v2823
        %v2825 = vpop.f32.mrb[0].mxu0
        %v2826 = vpop.f32.mrb[0].mxu0
        %v2827 = vpop.f32.mrb[0].mxu0
        %2828 = vdwg.mxu0
        %v2925 = vunpack.c.l.b16 %v1793
        %v2926 = vunpack.c.l.b16 %v1794
        %v2927 = vunpack.c.l.b16 %v1795
        %v2928 = vunpack.c.l.b16 %v1796
        %v2929 = vunpack.c.l.b16 %v1797
        %v2930 = vunpack.c.l.b16 %v1798
        %v2931 = vunpack.c.l.b16 %v1799
        %v2932 = vunpack.c.l.b16 %v1800
        %v2933 = vunpack.c.l.b16 %v1801
        %v2934 = vunpack.c.l.b16 %v1802
        %v2935 = vunpack.c.l.b16 %v1803
        %v2936 = vunpack.c.l.b16 %v1804
        %v2937 = vunpack.c.l.b16 %v1805
        %v2938 = vunpack.c.l.b16 %v1806
        %v2939 = vunpack.c.l.b16 %v1807
        %v2940 = vunpack.c.l.b16 %v1808
        %v2941 = vunpack.c.l.b16 %v1809
        %v2942 = vunpack.c.l.b16 %v1810
        %v2943 = vunpack.c.l.b16 %v1811
        %v2944 = vunpack.c.l.b16 %v1812
        %v2945 = vunpack.c.l.b16 %v1813
        %v2946 = vunpack.c.l.b16 %v1814
        %v2947 = vunpack.c.l.b16 %v1815
        %v2948 = vunpack.c.l.b16 %v1816
        %v2949 = vunpack.c.l.b16 %v1817
        %v2950 = vunpack.c.l.b16 %v1818
        %v2951 = vunpack.c.l.b16 %v1819
        %v2952 = vunpack.c.l.b16 %v1820
        %v2953 = vunpack.c.l.b16 %v1821
        %v2954 = vunpack.c.l.b16 %v1822
        %v2955 = vunpack.c.l.b16 %v1823
        %v2956 = vunpack.c.l.b16 %v1824
        %v2957 = vunpack.c.l.b16 %v1825
        %v2958 = vunpack.c.l.b16 %v1826
        %v2959 = vunpack.c.l.b16 %v1827
        %v2960 = vunpack.c.l.b16 %v1828
        %v2961 = vunpack.c.l.b16 %v1829
        %v2962 = vunpack.c.l.b16 %v1830
        %v2963 = vunpack.c.l.b16 %v1831
        %v2964 = vunpack.c.l.b16 %v1832
        %v2965 = vunpack.c.l.b16 %v1833
        %v2966 = vunpack.c.l.b16 %v1834
        %v2967 = vunpack.c.l.b16 %v1835
        %v2968 = vunpack.c.l.b16 %v1836
        %v2969 = vunpack.c.l.b16 %v1837
        %v2970 = vunpack.c.l.b16 %v1838
        %v2971 = vunpack.c.l.b16 %v1839
        %v2972 = vunpack.c.l.b16 %v1840
        %v2973 = vunpack.c.l.b16 %v1841
        %v2974 = vunpack.c.l.b16 %v1842
        %v2975 = vunpack.c.l.b16 %v1843
        %v2976 = vunpack.c.l.b16 %v1844
        %v2977 = vunpack.c.l.b16 %v1845
        %v2978 = vunpack.c.l.b16 %v1846
        %v2979 = vunpack.c.l.b16 %v1847
        %v2980 = vunpack.c.l.b16 %v1848
        %v2981 = vunpack.c.l.b16 %v1849
        %v2982 = vunpack.c.l.b16 %v1850
        %v2983 = vunpack.c.l.b16 %v1851
        %v2984 = vunpack.c.l.b16 %v1852
        %v2985 = vunpack.c.l.b16 %v1853
        %v2986 = vunpack.c.l.b16 %v1854
        %v2987 = vunpack.c.l.b16 %v1855
        %v2988 = vunpack.c.l.b16 %v1856
        %v2989 = vunpack.c.l.b16 %v1857
        %v2990 = vunpack.c.l.b16 %v1858
        %v2991 = vunpack.c.l.b16 %v1859
        %v2992 = vunpack.c.l.b16 %v1860
        %v2993 = vunpack.c.l.b16 %v1861
        %v2994 = vunpack.c.l.b16 %v1862
        %v2995 = vunpack.c.l.b16 %v1863
        %v2996 = vunpack.c.l.b16 %v1864
        %v2997 = vunpack.c.l.b16 %v1865
        %v2998 = vunpack.c.l.b16 %v1866
        %v2999 = vunpack.c.l.b16 %v1867
        %v3000 = vunpack.c.l.b16 %v1868
        %v3001 = vunpack.c.l.b16 %v1869
        %v3002 = vunpack.c.l.b16 %v1870
        %v3003 = vunpack.c.l.b16 %v1871
        %v3004 = vunpack.c.l.b16 %v1872
        %v3005 = vunpack.c.l.b16 %v1873
        %v3006 = vunpack.c.l.b16 %v1874
        %v3007 = vunpack.c.l.b16 %v1875
        %v3008 = vunpack.c.l.b16 %v1876
        %v3009 = vunpack.c.l.b16 %v1877
        %v3010 = vunpack.c.l.b16 %v1878
        %v3011 = vunpack.c.l.b16 %v1879
        %v3012 = vunpack.c.l.b16 %v1880
        %v3013 = vunpack.c.l.b16 %v1881
        %v3014 = vunpack.c.l.b16 %v1882
        %v3015 = vunpack.c.l.b16 %v1883
        %v3016 = vunpack.c.l.b16 %v1884
        %v3017 = vunpack.c.l.b16 %v1885
        %v3018 = vunpack.c.l.b16 %v1886
        %v3019 = vunpack.c.l.b16 %v1887
        %v3020 = vunpack.c.l.b16 %v1888
        %v3021 = vpack.c.b16 %v2926, %v2925
        %v3022 = vpack.c.b16 %v2928, %v2927
        %v3023 = vpack.c.b16 %v2930, %v2929
        %v3024 = vpack.c.b16 %v2932, %v2931
        %v3025 = vpack.c.b16 %v2934, %v2933
        %v3026 = vpack.c.b16 %v2936, %v2935
        %v3027 = vpack.c.b16 %v2938, %v2937
        %v3028 = vpack.c.b16 %v2940, %v2939
        %v3029 = vpack.c.b16 %v2942, %v2941
        %v3030 = vpack.c.b16 %v2944, %v2943
        %v3031 = vpack.c.b16 %v2946, %v2945
        %v3032 = vpack.c.b16 %v2948, %v2947
        %v3033 = vpack.c.b16 %v2950, %v2949
        %v3034 = vpack.c.b16 %v2952, %v2951
        %v3035 = vpack.c.b16 %v2954, %v2953
        %v3036 = vpack.c.b16 %v2956, %v2955
        %v3037 = vpack.c.b16 %v2958, %v2957
        %v3038 = vpack.c.b16 %v2960, %v2959
        %v3039 = vpack.c.b16 %v2962, %v2961
        %v3040 = vpack.c.b16 %v2964, %v2963
        %v3041 = vpack.c.b16 %v2966, %v2965
        %v3042 = vpack.c.b16 %v2968, %v2967
        %v3043 = vpack.c.b16 %v2970, %v2969
        %v3044 = vpack.c.b16 %v2972, %v2971
        %v3045 = vpack.c.b16 %v2974, %v2973
        %v3046 = vpack.c.b16 %v2976, %v2975
        %v3047 = vpack.c.b16 %v2978, %v2977
        %v3048 = vpack.c.b16 %v2980, %v2979
        %v3049 = vpack.c.b16 %v2982, %v2981
        %v3050 = vpack.c.b16 %v2984, %v2983
        %v3051 = vpack.c.b16 %v2986, %v2985
        %v3052 = vpack.c.b16 %v2988, %v2987
        %v3053 = vpack.c.b16 %v2990, %v2989
        %v3054 = vpack.c.b16 %v2992, %v2991
        %v3055 = vpack.c.b16 %v2994, %v2993
        %v3056 = vpack.c.b16 %v2996, %v2995
        %v3057 = vpack.c.b16 %v2998, %v2997
        %v3058 = vpack.c.b16 %v3000, %v2999
        %v3059 = vpack.c.b16 %v3002, %v3001
        %v3060 = vpack.c.b16 %v3004, %v3003
        %v3061 = vpack.c.b16 %v3006, %v3005
        %v3062 = vpack.c.b16 %v3008, %v3007
        %v3063 = vpack.c.b16 %v3010, %v3009
        %v3064 = vpack.c.b16 %v3012, %v3011
        %v3065 = vpack.c.b16 %v3014, %v3013
        %v3066 = vpack.c.b16 %v3016, %v3015
        %v3067 = vpack.c.b16 %v3018, %v3017
        %v3068 = vpack.c.b16 %v3020, %v3019
        %3117 = vmatprep.subr.bf16.mxu0 0
        %3118 = vmatpush1.bf16.msra.mxu0 %v3021
        %3119 = vmatprep.subr.bf16.mxu0 0
        %3120 = vmatpush1.bf16.msra.mxu0 %v3022
        %3121 = vmatprep.subr.bf16.mxu0 0
        %3122 = vmatpush1.bf16.msra.mxu0 %v3023
        %3123 = vmatprep.subr.bf16.mxu0 0
        %3124 = vmatpush1.bf16.msra.mxu0 %v3024
        %3125 = vmatprep.subr.bf16.mxu0 0
        %3126 = vmatpush1.bf16.msra.mxu0 %v3025
        %3127 = vmatprep.subr.bf16.mxu0 0
        %3128 = vmatpush1.bf16.msra.mxu0 %v3026
        %3129 = vmatprep.subr.bf16.mxu0 0
        %3130 = vmatpush1.bf16.msra.mxu0 %v3027
        %3131 = vmatprep.subr.bf16.mxu0 0
        %3132 = vmatpush1.bf16.msra.mxu0 %v3028
        %3133 = vmatprep.subr.bf16.mxu0 0
        %3134 = vmatpush1.bf16.msra.mxu0 %v3029
        %3135 = vmatprep.subr.bf16.mxu0 0
        %3136 = vmatpush1.bf16.msra.mxu0 %v3030
        %3137 = vmatprep.subr.bf16.mxu0 0
        %3138 = vmatpush1.bf16.msra.mxu0 %v3031
        %3139 = vmatprep.subr.bf16.mxu0 0
        %3140 = vmatpush1.bf16.msra.mxu0 %v3032
        %3141 = vmatprep.subr.bf16.mxu0 0
        %3142 = vmatpush1.bf16.msra.mxu0 %v3033
        %3143 = vmatprep.subr.bf16.mxu0 0
        %3144 = vmatpush1.bf16.msra.mxu0 %v3034
        %3145 = vmatprep.subr.bf16.mxu0 0
        %3146 = vmatpush1.bf16.msra.mxu0 %v3035
        %3147 = vmatprep.subr.bf16.mxu0 0
        %3148 = vmatpush1.bf16.msra.mxu0 %v3036
        %3149 = vmatprep.mubr.bf16.mxu0 %v1590
        %3150 = vmatmul.mubr.bf16.gmra.mrb[0].mxu0 %v1589
        %v3151 = vpop.f32.mrb[0].mxu0
        %v3152 = vadd.f32 %v2004, %v3151
        %v3153 = vpop.f32.mrb[0].mxu0
        %v3154 = vpop.f32.mrb[0].mxu0
        %v3155 = vpop.f32.mrb[0].mxu0
        %3156 = vdwg.mxu0
        %3157 = vmatprep.subr.bf16.mxu0 0
        %3158 = vmatpush1.bf16.msra.mxu0 %v3037
        %3159 = vmatprep.subr.bf16.mxu0 0
        %3160 = vmatpush1.bf16.msra.mxu0 %v3038
        %3161 = vmatprep.subr.bf16.mxu0 0
        %3162 = vmatpush1.bf16.msra.mxu0 %v3039
        %3163 = vmatprep.subr.bf16.mxu0 0
        %3164 = vmatpush1.bf16.msra.mxu0 %v3040
        %3165 = vmatprep.subr.bf16.mxu0 0
        %3166 = vmatpush1.bf16.msra.mxu0 %v3041
        %3167 = vmatprep.subr.bf16.mxu0 0
        %3168 = vmatpush1.bf16.msra.mxu0 %v3042
        %3169 = vmatprep.subr.bf16.mxu0 0
        %3170 = vmatpush1.bf16.msra.mxu0 %v3043
        %3171 = vmatprep.subr.bf16.mxu0 0
        %3172 = vmatpush1.bf16.msra.mxu0 %v3044
        %3173 = vmatprep.subr.bf16.mxu0 0
        %3174 = vmatpush1.bf16.msra.mxu0 %v3045
        %3175 = vmatprep.subr.bf16.mxu0 0
        %3176 = vmatpush1.bf16.msra.mxu0 %v3046
        %3177 = vmatprep.subr.bf16.mxu0 0
        %3178 = vmatpush1.bf16.msra.mxu0 %v3047
        %3179 = vmatprep.subr.bf16.mxu0 0
        %3180 = vmatpush1.bf16.msra.mxu0 %v3048
        %3181 = vmatprep.subr.bf16.mxu0 0
        %3182 = vmatpush1.bf16.msra.mxu0 %v3049
        %3183 = vmatprep.subr.bf16.mxu0 0
        %3184 = vmatpush1.bf16.msra.mxu0 %v3050
        %3185 = vmatprep.subr.bf16.mxu0 0
        %3186 = vmatpush1.bf16.msra.mxu0 %v3051
        %3187 = vmatprep.subr.bf16.mxu0 0
        %3188 = vmatpush1.bf16.msra.mxu0 %v3052
        %3189 = vmatprep.mubr.bf16.mxu0 %v1592
        %3190 = vmatmul.mubr.bf16.gmra.mrb[0].mxu0 %v1591
        %v3191 = vpop.f32.mrb[0].mxu0
        %v3192 = vadd.f32 %v3152, %v3191
        %v3193 = vpop.f32.mrb[0].mxu0
        %v3194 = vpop.f32.mrb[0].mxu0
        %v3195 = vpop.f32.mrb[0].mxu0
        %3196 = vdwg.mxu0
        %3197 = vmatprep.subr.bf16.mxu0 0
        %3198 = vmatpush1.bf16.msra.mxu0 %v3053
        %3199 = vmatprep.subr.bf16.mxu0 0
        %3200 = vmatpush1.bf16.msra.mxu0 %v3054
        %3201 = vmatprep.subr.bf16.mxu0 0
        %3202 = vmatpush1.bf16.msra.mxu0 %v3055
        %3203 = vmatprep.subr.bf16.mxu0 0
        %3204 = vmatpush1.bf16.msra.mxu0 %v3056
        %3205 = vmatprep.subr.bf16.mxu0 0
        %3206 = vmatpush1.bf16.msra.mxu0 %v3057
        %3207 = vmatprep.subr.bf16.mxu0 0
        %3208 = vmatpush1.bf16.msra.mxu0 %v3058
        %3209 = vmatprep.subr.bf16.mxu0 0
        %3210 = vmatpush1.bf16.msra.mxu0 %v3059
        %3211 = vmatprep.subr.bf16.mxu0 0
        %3212 = vmatpush1.bf16.msra.mxu0 %v3060
        %3213 = vmatprep.subr.bf16.mxu0 0
        %3214 = vmatpush1.bf16.msra.mxu0 %v3061
        %3215 = vmatprep.subr.bf16.mxu0 0
        %3216 = vmatpush1.bf16.msra.mxu0 %v3062
        %3217 = vmatprep.subr.bf16.mxu0 0
        %3218 = vmatpush1.bf16.msra.mxu0 %v3063
        %3219 = vmatprep.subr.bf16.mxu0 0
        %3220 = vmatpush1.bf16.msra.mxu0 %v3064
        %3221 = vmatprep.subr.bf16.mxu0 0
        %3222 = vmatpush1.bf16.msra.mxu0 %v3065
        %3223 = vmatprep.subr.bf16.mxu0 0
        %3224 = vmatpush1.bf16.msra.mxu0 %v3066
        %3225 = vmatprep.subr.bf16.mxu0 0
        %3226 = vmatpush1.bf16.msra.mxu0 %v3067
        %3227 = vmatprep.subr.bf16.mxu0 0
        %3228 = vmatpush1.bf16.msra.mxu0 %v3068
        %3229 = vmatprep.mubr.bf16.mxu0 %v1594
        %3230 = vmatmul.mubr.bf16.gmra.mrb[0].mxu0 %v1593
        %v3231 = vpop.f32.mrb[0].mxu0
        %v3232 = vadd.f32 %v3192, %v3231
        %v3233 = vpop.f32.mrb[0].mxu0
        %v3234 = vpop.f32.mrb[0].mxu0
        %v3235 = vpop.f32.mrb[0].mxu0
        %3236 = vdwg.mxu0
        %v3333 = vunpack.c.l.b16 %v1889
        %v3334 = vunpack.c.l.b16 %v1890
        %v3335 = vunpack.c.l.b16 %v1891
        %v3336 = vunpack.c.l.b16 %v1892
        %v3337 = vunpack.c.l.b16 %v1893
        %v3338 = vunpack.c.l.b16 %v1894
        %v3339 = vunpack.c.l.b16 %v1895
        %v3340 = vunpack.c.l.b16 %v1896
        %v3341 = vunpack.c.l.b16 %v1897
        %v3342 = vunpack.c.l.b16 %v1898
        %v3343 = vunpack.c.l.b16 %v1899
        %v3344 = vunpack.c.l.b16 %v1900
        %v3345 = vunpack.c.l.b16 %v1901
        %v3346 = vunpack.c.l.b16 %v1902
        %v3347 = vunpack.c.l.b16 %v1903
        %v3348 = vunpack.c.l.b16 %v1904
        %v3349 = vunpack.c.l.b16 %v1905
        %v3350 = vunpack.c.l.b16 %v1906
        %v3351 = vunpack.c.l.b16 %v1907
        %v3352 = vunpack.c.l.b16 %v1908
        %v3353 = vunpack.c.l.b16 %v1909
        %v3354 = vunpack.c.l.b16 %v1910
        %v3355 = vunpack.c.l.b16 %v1911
        %v3356 = vunpack.c.l.b16 %v1912
        %v3357 = vunpack.c.l.b16 %v1913
        %v3358 = vunpack.c.l.b16 %v1914
        %v3359 = vunpack.c.l.b16 %v1915
        %v3360 = vunpack.c.l.b16 %v1916
        %v3361 = vunpack.c.l.b16 %v1917
        %v3362 = vunpack.c.l.b16 %v1918
        %v3363 = vunpack.c.l.b16 %v1919
        %v3364 = vunpack.c.l.b16 %v1920
        %v3365 = vunpack.c.l.b16 %v1921
        %v3366 = vunpack.c.l.b16 %v1922
        %v3367 = vunpack.c.l.b16 %v1923
        %v3368 = vunpack.c.l.b16 %v1924
        %v3369 = vunpack.c.l.b16 %v1925
        %v3370 = vunpack.c.l.b16 %v1926
        %v3371 = vunpack.c.l.b16 %v1927
        %v3372 = vunpack.c.l.b16 %v1928
        %v3373 = vunpack.c.l.b16 %v1929
        %v3374 = vunpack.c.l.b16 %v1930
        %v3375 = vunpack.c.l.b16 %v1931
        %v3376 = vunpack.c.l.b16 %v1932
        %v3377 = vunpack.c.l.b16 %v1933
        %v3378 = vunpack.c.l.b16 %v1934
        %v3379 = vunpack.c.l.b16 %v1935
        %v3380 = vunpack.c.l.b16 %v1936
        %v3381 = vunpack.c.l.b16 %v1937
        %v3382 = vunpack.c.l.b16 %v1938
        %v3383 = vunpack.c.l.b16 %v1939
        %v3384 = vunpack.c.l.b16 %v1940
        %v3385 = vunpack.c.l.b16 %v1941
        %v3386 = vunpack.c.l.b16 %v1942
        %v3387 = vunpack.c.l.b16 %v1943
        %v3388 = vunpack.c.l.b16 %v1944
        %v3389 = vunpack.c.l.b16 %v1945
        %v3390 = vunpack.c.l.b16 %v1946
        %v3391 = vunpack.c.l.b16 %v1947
        %v3392 = vunpack.c.l.b16 %v1948
        %v3393 = vunpack.c.l.b16 %v1949
        %v3394 = vunpack.c.l.b16 %v1950
        %v3395 = vunpack.c.l.b16 %v1951
        %v3396 = vunpack.c.l.b16 %v1952
        %v3397 = vunpack.c.l.b16 %v1953
        %v3398 = vunpack.c.l.b16 %v1954
        %v3399 = vunpack.c.l.b16 %v1955
        %v3400 = vunpack.c.l.b16 %v1956
        %v3401 = vunpack.c.l.b16 %v1957
        %v3402 = vunpack.c.l.b16 %v1958
        %v3403 = vunpack.c.l.b16 %v1959
        %v3404 = vunpack.c.l.b16 %v1960
        %v3405 = vunpack.c.l.b16 %v1961
        %v3406 = vunpack.c.l.b16 %v1962
        %v3407 = vunpack.c.l.b16 %v1963
        %v3408 = vunpack.c.l.b16 %v1964
        %v3409 = vunpack.c.l.b16 %v1965
        %v3410 = vunpack.c.l.b16 %v1966
        %v3411 = vunpack.c.l.b16 %v1967
        %v3412 = vunpack.c.l.b16 %v1968
        %v3413 = vunpack.c.l.b16 %v1969
        %v3414 = vunpack.c.l.b16 %v1970
        %v3415 = vunpack.c.l.b16 %v1971
        %v3416 = vunpack.c.l.b16 %v1972
        %v3417 = vunpack.c.l.b16 %v1973
        %v3418 = vunpack.c.l.b16 %v1974
        %v3419 = vunpack.c.l.b16 %v1975
        %v3420 = vunpack.c.l.b16 %v1976
        %v3421 = vunpack.c.l.b16 %v1977
        %v3422 = vunpack.c.l.b16 %v1978
        %v3423 = vunpack.c.l.b16 %v1979
        %v3424 = vunpack.c.l.b16 %v1980
        %v3425 = vunpack.c.l.b16 %v1981
        %v3426 = vunpack.c.l.b16 %v1982
        %v3427 = vunpack.c.l.b16 %v1983
        %v3428 = vunpack.c.l.b16 %v1984
        %v3429 = vpack.c.b16 %v3334, %v3333
        %v3430 = vpack.c.b16 %v3336, %v3335
        %v3431 = vpack.c.b16 %v3338, %v3337
        %v3432 = vpack.c.b16 %v3340, %v3339
        %v3433 = vpack.c.b16 %v3342, %v3341
        %v3434 = vpack.c.b16 %v3344, %v3343
        %v3435 = vpack.c.b16 %v3346, %v3345
        %v3436 = vpack.c.b16 %v3348, %v3347
        %v3437 = vpack.c.b16 %v3350, %v3349
        %v3438 = vpack.c.b16 %v3352, %v3351
        %v3439 = vpack.c.b16 %v3354, %v3353
        %v3440 = vpack.c.b16 %v3356, %v3355
        %v3441 = vpack.c.b16 %v3358, %v3357
        %v3442 = vpack.c.b16 %v3360, %v3359
        %v3443 = vpack.c.b16 %v3362, %v3361
        %v3444 = vpack.c.b16 %v3364, %v3363
        %v3445 = vpack.c.b16 %v3366, %v3365
        %v3446 = vpack.c.b16 %v3368, %v3367
        %v3447 = vpack.c.b16 %v3370, %v3369
        %v3448 = vpack.c.b16 %v3372, %v3371
        %v3449 = vpack.c.b16 %v3374, %v3373
        %v3450 = vpack.c.b16 %v3376, %v3375
        %v3451 = vpack.c.b16 %v3378, %v3377
        %v3452 = vpack.c.b16 %v3380, %v3379
        %v3453 = vpack.c.b16 %v3382, %v3381
        %v3454 = vpack.c.b16 %v3384, %v3383
        %v3455 = vpack.c.b16 %v3386, %v3385
        %v3456 = vpack.c.b16 %v3388, %v3387
        %v3457 = vpack.c.b16 %v3390, %v3389
        %v3458 = vpack.c.b16 %v3392, %v3391
        %v3459 = vpack.c.b16 %v3394, %v3393
        %v3460 = vpack.c.b16 %v3396, %v3395
        %v3461 = vpack.c.b16 %v3398, %v3397
        %v3462 = vpack.c.b16 %v3400, %v3399
        %v3463 = vpack.c.b16 %v3402, %v3401
        %v3464 = vpack.c.b16 %v3404, %v3403
        %v3465 = vpack.c.b16 %v3406, %v3405
        %v3466 = vpack.c.b16 %v3408, %v3407
        %v3467 = vpack.c.b16 %v3410, %v3409
        %v3468 = vpack.c.b16 %v3412, %v3411
        %v3469 = vpack.c.b16 %v3414, %v3413
        %v3470 = vpack.c.b16 %v3416, %v3415
        %v3471 = vpack.c.b16 %v3418, %v3417
        %v3472 = vpack.c.b16 %v3420, %v3419
        %v3473 = vpack.c.b16 %v3422, %v3421
        %v3474 = vpack.c.b16 %v3424, %v3423
        %v3475 = vpack.c.b16 %v3426, %v3425
        %v3476 = vpack.c.b16 %v3428, %v3427
        %3525 = vmatprep.subr.bf16.mxu0 0
        %3526 = vmatpush1.bf16.msra.mxu0 %v3429
        %3527 = vmatprep.subr.bf16.mxu0 0
        %3528 = vmatpush1.bf16.msra.mxu0 %v3430
        %3529 = vmatprep.subr.bf16.mxu0 0
        %3530 = vmatpush1.bf16.msra.mxu0 %v3431
        %3531 = vmatprep.subr.bf16.mxu0 0
        %3532 = vmatpush1.bf16.msra.mxu0 %v3432
        %3533 = vmatprep.subr.bf16.mxu0 0
        %3534 = vmatpush1.bf16.msra.mxu0 %v3433
        %3535 = vmatprep.subr.bf16.mxu0 0
        %3536 = vmatpush1.bf16.msra.mxu0 %v3434
        %3537 = vmatprep.subr.bf16.mxu0 0
        %3538 = vmatpush1.bf16.msra.mxu0 %v3435
        %3539 = vmatprep.subr.bf16.mxu0 0
        %3540 = vmatpush1.bf16.msra.mxu0 %v3436
        %3541 = vmatprep.subr.bf16.mxu0 0
        %3542 = vmatpush1.bf16.msra.mxu0 %v3437
        %3543 = vmatprep.subr.bf16.mxu0 0
        %3544 = vmatpush1.bf16.msra.mxu0 %v3438
        %3545 = vmatprep.subr.bf16.mxu0 0
        %3546 = vmatpush1.bf16.msra.mxu0 %v3439
        %3547 = vmatprep.subr.bf16.mxu0 0
        %3548 = vmatpush1.bf16.msra.mxu0 %v3440
        %3549 = vmatprep.subr.bf16.mxu0 0
        %3550 = vmatpush1.bf16.msra.mxu0 %v3441
        %3551 = vmatprep.subr.bf16.mxu0 0
        %3552 = vmatpush1.bf16.msra.mxu0 %v3442
        %3553 = vmatprep.subr.bf16.mxu0 0
        %3554 = vmatpush1.bf16.msra.mxu0 %v3443
        %3555 = vmatprep.subr.bf16.mxu0 0
        %3556 = vmatpush1.bf16.msra.mxu0 %v3444
        %3557 = vmatprep.mubr.bf16.mxu0 %v1596
        %3558 = vmatmul.mubr.bf16.gmra.mrb[0].mxu0 %v1595
        %v3559 = vpop.f32.mrb[0].mxu0
        %v3560 = vadd.f32 %v2008, %v3559
        %v3561 = vpop.f32.mrb[0].mxu0
        %v3562 = vpop.f32.mrb[0].mxu0
        %v3563 = vpop.f32.mrb[0].mxu0
        %3564 = vdwg.mxu0
        %3565 = vmatprep.subr.bf16.mxu0 0
        %3566 = vmatpush1.bf16.msra.mxu0 %v3445
        %3567 = vmatprep.subr.bf16.mxu0 0
        %3568 = vmatpush1.bf16.msra.mxu0 %v3446
        %3569 = vmatprep.subr.bf16.mxu0 0
        %3570 = vmatpush1.bf16.msra.mxu0 %v3447
        %3571 = vmatprep.subr.bf16.mxu0 0
        %3572 = vmatpush1.bf16.msra.mxu0 %v3448
        %3573 = vmatprep.subr.bf16.mxu0 0
        %3574 = vmatpush1.bf16.msra.mxu0 %v3449
        %3575 = vmatprep.subr.bf16.mxu0 0
        %3576 = vmatpush1.bf16.msra.mxu0 %v3450
        %3577 = vmatprep.subr.bf16.mxu0 0
        %3578 = vmatpush1.bf16.msra.mxu0 %v3451
        %3579 = vmatprep.subr.bf16.mxu0 0
        %3580 = vmatpush1.bf16.msra.mxu0 %v3452
        %3581 = vmatprep.subr.bf16.mxu0 0
        %3582 = vmatpush1.bf16.msra.mxu0 %v3453
        %3583 = vmatprep.subr.bf16.mxu0 0
        %3584 = vmatpush1.bf16.msra.mxu0 %v3454
        %3585 = vmatprep.subr.bf16.mxu0 0
        %3586 = vmatpush1.bf16.msra.mxu0 %v3455
        %3587 = vmatprep.subr.bf16.mxu0 0
        %3588 = vmatpush1.bf16.msra.mxu0 %v3456
        %3589 = vmatprep.subr.bf16.mxu0 0
        %3590 = vmatpush1.bf16.msra.mxu0 %v3457
        %3591 = vmatprep.subr.bf16.mxu0 0
        %3592 = vmatpush1.bf16.msra.mxu0 %v3458
        %3593 = vmatprep.subr.bf16.mxu0 0
        %3594 = vmatpush1.bf16.msra.mxu0 %v3459
        %3595 = vmatprep.subr.bf16.mxu0 0
        %3596 = vmatpush1.bf16.msra.mxu0 %v3460
        %3597 = vmatprep.mubr.bf16.mxu0 %v1598
        %3598 = vmatmul.mubr.bf16.gmra.mrb[0].mxu0 %v1597
        %v3599 = vpop.f32.mrb[0].mxu0
        %v3600 = vadd.f32 %v3560, %v3599
        %v3601 = vpop.f32.mrb[0].mxu0
        %v3602 = vpop.f32.mrb[0].mxu0
        %v3603 = vpop.f32.mrb[0].mxu0
        %3604 = vdwg.mxu0
        %3605 = vmatprep.subr.bf16.mxu0 0
        %3606 = vmatpush1.bf16.msra.mxu0 %v3461
        %3607 = vmatprep.subr.bf16.mxu0 0
        %3608 = vmatpush1.bf16.msra.mxu0 %v3462
        %3609 = vmatprep.subr.bf16.mxu0 0
        %3610 = vmatpush1.bf16.msra.mxu0 %v3463
        %3611 = vmatprep.subr.bf16.mxu0 0
        %3612 = vmatpush1.bf16.msra.mxu0 %v3464
        %3613 = vmatprep.subr.bf16.mxu0 0
        %3614 = vmatpush1.bf16.msra.mxu0 %v3465
        %3615 = vmatprep.subr.bf16.mxu0 0
        %3616 = vmatpush1.bf16.msra.mxu0 %v3466
        %3617 = vmatprep.subr.bf16.mxu0 0
        %3618 = vmatpush1.bf16.msra.mxu0 %v3467
        %3619 = vmatprep.subr.bf16.mxu0 0
        %3620 = vmatpush1.bf16.msra.mxu0 %v3468
        %3621 = vmatprep.subr.bf16.mxu0 0
        %3622 = vmatpush1.bf16.msra.mxu0 %v3469
        %3623 = vmatprep.subr.bf16.mxu0 0
        %3624 = vmatpush1.bf16.msra.mxu0 %v3470
        %3625 = vmatprep.subr.bf16.mxu0 0
        %3626 = vmatpush1.bf16.msra.mxu0 %v3471
        %3627 = vmatprep.subr.bf16.mxu0 0
        %3628 = vmatpush1.bf16.msra.mxu0 %v3472
        %3629 = vmatprep.subr.bf16.mxu0 0
        %3630 = vmatpush1.bf16.msra.mxu0 %v3473
        %3631 = vmatprep.subr.bf16.mxu0 0
        %3632 = vmatpush1.bf16.msra.mxu0 %v3474
        %3633 = vmatprep.subr.bf16.mxu0 0
        %3634 = vmatpush1.bf16.msra.mxu0 %v3475
        %3635 = vmatprep.subr.bf16.mxu0 0
        %3636 = vmatpush1.bf16.msra.mxu0 %v3476
        %3637 = vmatprep.mubr.bf16.mxu0 %v1600
        %3638 = vmatmul.mubr.bf16.gmra.mrb[0].mxu0 %v1599
        %v3639 = vpop.f32.mrb[0].mxu0
        %v3640 = vadd.f32 %v3600, %v3639
        %v3641 = vpop.f32.mrb[0].mxu0
        %v3642 = vpop.f32.mrb[0].mxu0
        %v3643 = vpop.f32.mrb[0].mxu0
        %3644 = vdwg.mxu0
        %v3645 = vadd.f32 %v2416, %v398
        %v3646 = vadd.f32 %v2824, %v403
        %v3647 = vadd.f32 %v3232, %v408
        %v3648 = vadd.f32 %v3640, %v413
        %3649 = vst.msk [vmem:[%s357] sm:$0x3] %vm414, %v3645
        %3651 = vrot.lane.b32.xlu0 %v3646, 32
        %v3652 = vpop.permute.xlu0 %3651
        %vm3654 = vcmask 517376
        %3655 = vst.msk [vmem:[%s357] sm:$0x3] %vm3654, %v3652
        %3657 = vrot.lane.b32.xlu0 %v3647, 64
        %v3658 = vpop.permute.xlu0 %3657
        %vm3660 = vcmask 779776
        %3661 = vst.msk [vmem:[%s357] sm:$0x3] %vm3660, %v3658
        %3663 = vrot.lane.b32.xlu0 %v3648, 96
        %v3664 = vpop.permute.xlu0 %3663
        %vm3666 = vcmask 1042176
        %3667 = vst.msk [vmem:[%s357] sm:$0x3] %vm3666, %v3664
        %s3668 = sand.u32 %s213, 1
        %s3669 = scalar_lea.sflag [#allocation5], %s3668
        %s3670 = sand.u32 %s213, 1
        %s3671 = smul.addr %s3670, 2
        %s3672 = scalar_lea.vmem [#allocation4], %s3671
        // Predicated region
        $region49: #{tpu_custom_call.1} parent=47 // pred_check
          %p3673 = pneg %p223
        $region50: #{tpu_custom_call.1} parent=47 // pred_check_branch
          %3675 = sbr.rel (%p3673) target = $region52
        $region51: #{tpu_custom_call.1} parent=47 // pred_region
          %s3677 = ssub.s32 32, 32
          %3678 = vsyncadd %s3669, %s3677
          %s3679 = smul.addr %s28, 32
          %s3680 = scalar_lea.hbm %s8, %s3679
          %s3682 = sshll.u32 %s3672, 4
          %s3683 = int_to_ptr.vmem [resolvable:$true] %s3682
          %3685 = dma.vmem_to_hbm [thread:$0]  %s3683, 32, %s3680, %s3669
        $region52: #{tpu_custom_call.1} parent=47 // pred_fallthru
          _
      $region48: #{tpu_custom_call.1} parent=5 // pred_fallthru
        _
      %p3686 = scmp.le.s32.totalorder 2, %s23
      // Predicated region
      $region53: #{tpu_custom_call.1} parent=5 // pred_check
        %p3687 = pneg %p3686
      $region54: #{tpu_custom_call.1} parent=5 // pred_check_branch
        %3689 = sbr.rel (%p3687) target = $region56
      $region55: #{tpu_custom_call.1} parent=5 // pred_region
        %s3690 = ssub.s32 %s23, 2
        // Predicated region
        $region57: #{tpu_custom_call.1} parent=55 // pred_check
          %p3691 = pneg %p229
        $region58: #{tpu_custom_call.1} parent=55 // pred_check_branch
          %3693 = sbr.rel (%p3691) target = $region60
        $region59: #{tpu_custom_call.1} parent=55 // pred_region
          %s3694 = sand.u32 %s214, 1
          %s3695 = scalar_lea.sflag [#allocation5], %s3694
          %s3696 = sand.u32 %s214, 1
          %s3697 = smul.addr %s3696, 2
          %s3698 = scalar_lea.vmem [#allocation4], %s3697
          %3699 = dma.done %s3695, 32
        $region60: #{tpu_custom_call.1} parent=55 // pred_fallthru
          _
      $region56: #{tpu_custom_call.1} parent=5 // pred_fallthru
        _
    $region6: #{tpu_custom_call.1} parent=1 // loop_footer
      %s27 = sadd.s32 1, %s23
    $region7: #{tpu_custom_call.1} parent=1 // loop_footer_branch
      %22 = sbr.rel target = $region3
    $region8: #{tpu_custom_call.1} parent=1 // loop_exit
      _
    %3700 = vsyncpa [#allocation5], 1
    %s3701 = scalar_lea.sflag [#allocation5], 1
    %3702 = vsyncpa %s3701, 1

</llo_original>
